<compile_context>
chip_gen: v7x
topology: tpu7x:2x2x1
jax: 0.10.0
libtpu: 0.0.40
codegen_flags: <defaults>
</compile_context>

<pallas_src>
import math

import numpy as np
import jax
import jax.numpy as jnp
from jax.experimental import pallas as pl
from jax.experimental.pallas import tpu as pltpu


def _weight_segments(D, F):
    """Column layout of the packed per-layer weight / bias buffers."""
    segs = [("wqkv", 3 * D), ("wo_self", D), ("wq_ctx", D), ("wkv_ctx", 2 * D),
            ("wo_ctx", D), ("wq_doc", D), ("wkv_doc", 2 * D), ("wo_doc", D),
            ("w1", F)]
    off, o = {}, 0
    for name, w in segs:
        off[name] = (o, o + w)
        o += w
    return segs, off, o          # o == 12*D + F


# --------------------------- fused decoder forward ---------------------------

def transformer_decoder_forward(params, cfg, tgt, memory_bank, doc_memory_bank,
                                sent_vec, sent_pad_mask, src):
    del sent_vec  # only used by the config.pointer=True path (not modeled)
    padding_idx = 0
    D = cfg["hidden_size"]
    E = cfg["emb_size"]
    H = cfg["heads"]
    F = cfg["d_ff"]
    L = cfg["num_layers"]
    dh = D // H
    scale = 1.0 / math.sqrt(dh)

    B, T = tgt.shape
    sent_batch, sent_len = sent_pad_mask.shape
    src_words = src.reshape(sent_batch, sent_len + 1, -1)
    doc_words = src_words[:, 1:].reshape(sent_batch, -1)
    src_words = src_words[:, 0].reshape(sent_batch, -1)
    S = src_words.shape[1]
    Sd = doc_words.shape[1]
    N = B * T

    _, OFF, W_IN = _weight_segments(D, F)
    BOFF = dict(OFF)
    BOFF["b2"] = (W_IN, W_IN + D)
    BIAS_W = W_IN + D

    # ---- host-side glue: embedding lookup + cached positional encoding ------
    # TODO(synk): dropout layers are treated as identity (eval-mode semantics).
    emb = jnp.take(params["embedding"], tgt, axis=0)                  # (B, T, E)
    x0 = (emb * math.sqrt(E) + params["pe"][:, :T, :]).reshape(N, D)
    x0 = x0.astype(jnp.float32)

    # Additive attention masks (0 keep / -1e9 drop), built once in the wrapper.
    NEG = jnp.float32(-1e9)
    causal = jnp.triu(jnp.ones((T, T), jnp.int32), k=1) > 0
    tgt_pad = tgt == padding_idx
    src_pad = src_words == padding_idx
    doc_pad = doc_words == padding_idx
    mask_self = jnp.where(causal[None, :, :] | tgt_pad[:, None, :],
                          NEG, 0.0).astype(jnp.float32)               # (B, T, T)
    mask_src = jnp.broadcast_to(jnp.where(src_pad[:, None, :], NEG, 0.0),
                                (B, T, S)).astype(jnp.float32)        # (B, T, S)
    mask_doc = jnp.broadcast_to(jnp.where(doc_pad[:, None, :], NEG, 0.0),
                                (B, T, Sd)).astype(jnp.float32)       # (B, T, Sd)

    # Memory banks streamed in bf16 (cast at matmul operands, f32 accumulation).
    mem = memory_bank.reshape(B * S, D).astype(jnp.bfloat16)
    doc = doc_memory_bank.reshape(B * Sd, D).astype(jnp.bfloat16)

    # ------------------------------- kernel ----------------------------------
    def kernel(x_ref, mem_ref, doc_ref, mself_ref, msrc_ref, mdoc_ref,
               w_in_ref, w2_ref, bias_ref, ln_ref, lnf_ref, o_ref):
        l = pl.program_id(0)

        @pl.when(l == 0)
        def _():
            # residual stream lives in the (constant-index) output block
            o_ref[...] = x_ref[...]

        def layer_norm(v, g, b):
            mu = jnp.mean(v, axis=-1, keepdims=True)
            var = jnp.mean(jnp.square(v - mu), axis=-1, keepdims=True)
            return (v - mu) * jax.lax.rsqrt(var + 1e-6) * g + b

        def wseg(name):
            a, b = OFF[name]
            return w_in_ref[:, a:b]                     # (D, width) bf16

        def bseg(name):
            a, b = BOFF[name]
            return bias_ref[:, a:b]                     # (1, width) f32

        def proj(x, name):
            return jnp.dot(x.astype(jnp.bfloat16), wseg(name),
                           preferred_element_type=jnp.float32) + bseg(name)

        def attention(q, k, v, kv_len, wo_name, mask_add):
            # q: (N, D) f32 ; k, v: (B*kv_len, D) f32 ; mask_add: (B, T, kv_len)
            q3 = (q * scale).astype(jnp.bfloat16).reshape(B, T, D)
            k3 = k.astype(jnp.bfloat16).reshape(B, kv_len, D)
            v3 = v.astype(jnp.bfloat16).reshape(B, kv_len, D)
            wo = wseg(wo_name)
            acc = None
            # Batched over B via single-batch-dim einsums; head concat fused
            # into the output projection accumulation (no jnp.concatenate).
            for h in range(H):
                cs = slice(h * dh, (h + 1) * dh)
                s = jnp.einsum("bqd,bkd->bqk", q3[:, :, cs], k3[:, :, cs],
                               preferred_element_type=jnp.float32)
                s = s + mask_add
                s = s - jnp.max(s, axis=-1, keepdims=True)
                p = jnp.exp(s)
                p = p * pl.reciprocal(jnp.sum(p, axis=-1, keepdims=True),
                                      approx=True)
                ctx = jnp.einsum("bqk,bkd->bqd", p.astype(jnp.bfloat16),
                                 v3[:, :, cs],
                                 preferred_element_type=jnp.float32)  # (B,T,dh)
                part = jnp.dot(ctx.reshape(N, dh).astype(jnp.bfloat16),
                               wo[cs, :], preferred_element_type=jnp.float32)
                acc = part if acc is None else acc + part
            return acc + bseg(wo_name)

        ln_p = ln_ref[...]                               # (8, D) LN params
        resid = o_ref[...]                               # (N, D) f32 residual

        # ---- self attention: LN1 -> fused QKV -> attn -> out proj -> residual
        xn = layer_norm(resid, ln_p[0:1, :], ln_p[1:2, :])
        qkv = proj(xn, "wqkv")                           # (N, 3D)
        resid = attention(qkv[:, :D], qkv[:, D:2 * D], qkv[:, 2 * D:],
                          T, "wo_self", mself_ref[...]) + resid

        # ---- context attention over memory_bank (LN2 fused into Q proj) -----
        xn = layer_norm(resid, ln_p[2:3, :], ln_p[3:4, :])
        q = proj(xn, "wq_ctx")
        kv = proj(mem_ref[...], "wkv_ctx")               # (B*S, 2D)
        resid = attention(q, kv[:, :D], kv[:, D:], S, "wo_ctx",
                          msrc_ref[...]) + resid

        # ---- document attention over doc_memory_bank (LN3 fused) ------------
        xn = layer_norm(resid, ln_p[4:5, :], ln_p[5:6, :])
        q = proj(xn, "wq_doc")
        kv = proj(doc_ref[...], "wkv_doc")               # (B*Sd, 2D)
        resid = attention(q, kv[:, :D], kv[:, D:], Sd, "wo_doc",
                          mdoc_ref[...]) + resid

        # ---- position-wise FFN: LN -> w1 -> relu -> w2 -> residual ----------
        xn = layer_norm(resid, ln_p[6:7, :], ln_p[7:8, :])
        inter = jnp.maximum(proj(xn, "w1"), 0.0)
        resid = (jnp.dot(inter.astype(jnp.bfloat16), w2_ref[...],
                         preferred_element_type=jnp.float32)
                 + bseg("b2") + resid)

        o_ref[...] = resid

        @pl.when(l == pl.num_programs(0) - 1)
        def _():
            o_ref[...] = layer_norm(resid, lnf_ref[0:1, :], lnf_ref[1:2, :])

    # ------------------------------ BlockSpecs --------------------------------
    def const_spec(shape):
        zeros = (0,) * len(shape)
        return pl.BlockSpec(shape, lambda l: zeros)

    def layer_spec(shape):
        zeros = (0,) * len(shape)
        return pl.BlockSpec((None,) + shape, lambda l: (l,) + zeros)

    in_specs = [
        const_spec((N, D)),             # x0 (residual init; read at l==0 only)
        const_spec((B * S, D)),         # memory bank (bf16)
        const_spec((B * Sd, D)),        # doc memory bank (bf16)
        const_spec((B, T, T)),          # additive self-attn mask
        const_spec((B, T, S)),          # additive ctx-attn mask
        const_spec((B, T, Sd)),         # additive doc-attn mask
        layer_spec((D, W_IN)),          # packed (D -> *) weights, bf16
        layer_spec((F, D)),             # FFN w2, bf16
        layer_spec((1, BIAS_W)),        # packed biases, f32
        layer_spec((8, D)),             # per-layer LayerNorm params
        const_spec((2, D)),             # final LayerNorm gamma/beta
    ]

    out = pl.pallas_call(
        kernel,
        out_shape=jax.ShapeDtypeStruct((N, D), jnp.float32),
        grid=(L,),
        in_specs=in_specs,
        out_specs=const_spec((N, D)),
        compiler_params=pltpu.CompilerParams(
            dimension_semantics=("arbitrary",),
            # ~1.2 MiB actually used at this config; re-derive (and tile the
            # packed weights) before scaling D/F, especially for v7x (64 MiB).
            vmem_limit_bytes=32 * 1024 * 1024,
        ),
    )(x0, mem, doc, mask_self, mask_src, mask_doc,
      params["w_in"], params["w2"], params["bias"], params["ln"], params["lnf"])

    # config.pointer == False: the reference's non-pointer return path uses
    # unbound attn/doc_attn names (bug in the source); we return the normed
    # decoder output, which is the only well-defined tensor.
    return out.reshape(B, T, D)


# ------------------------------ parameter init -------------------------------

def make_positional_encoding(dim, max_len=1000):
    pos = np.arange(max_len, dtype=np.float32)[:, None]
    div = np.exp(np.arange(0, dim, 2, dtype=np.float32)
                 * -(math.log(10000.0) / dim))
    pe = np.zeros((max_len, dim), np.float32)
    pe[:, 0::2] = np.sin(pos * div)
    pe[:, 1::2] = np.cos(pos * div)
    return jnp.asarray(pe[None])                  # (1, max_len, dim)


def init_params(key, cfg):
    D, F = cfg["hidden_size"], cfg["d_ff"]
    V, L, E = cfg["vocab_size"], cfg["num_layers"], cfg["emb_size"]
    _, _, w_width = _weight_segments(D, F)
    k_emb, k_win, k_w2 = jax.random.split(key, 3)

    ones_d = jnp.ones((D,), jnp.float32)
    zeros_d = jnp.zeros((D,), jnp.float32)
    # rows: [ln1_g, ln1_b, ln2_g, ln2_b, ln3_g, ln3_b, ffn_ln_g, ffn_ln_b]
    ln_layer = jnp.stack([ones_d, zeros_d] * 4)                     # (8, D)

    emb = 0.05 * jax.random.normal(k_emb, (V, E), jnp.float32)
    return {
        "embedding": emb.at[0].set(0.0),          # padding_idx=0 row is zero
        "pe": make_positional_encoding(E),
        "ln": jnp.tile(ln_layer[None], (L, 1, 1)),                  # (L, 8, D)
        # packed per-layer weights (bf16 streamed, f32 accumulation in-kernel)
        "w_in": (0.05 * jax.random.normal(k_win, (L, D, w_width),
                                          jnp.float32)).astype(jnp.bfloat16),
        "w2": (0.05 * jax.random.normal(k_w2, (L, F, D),
                                        jnp.float32)).astype(jnp.bfloat16),
        "bias": jnp.zeros((L, 1, w_width + D), jnp.float32),
        "lnf": jnp.stack([ones_d, zeros_d]),                        # (2, D)
    }


# ----------------------------------- main -------------------------------------

if __name__ == "__main__":
    # Lane-dense toy config: D and every projection width are multiples of 128.
    cfg = dict(vocab_size=50, emb_size=128, hidden_size=128, heads=4, d_ff=256,
               dropout=0.0, num_layers=2, positional=True, pointer=False)

    key = jax.random.PRNGKey(0)
    k1, k2, k3, k4, k5, kp = jax.random.split(key, 6)

    B, T = 2, 8                 # batch, target length
    sent_len, per_sent = 3, 8   # doc sentences, tokens per sentence
    src_len, doc_len = per_sent, sent_len * per_sent

    tgt = jax.random.randint(k1, (B, T), 1, cfg["vocab_size"])
    tgt = tgt.at[:, -1].set(0)  # one padded target position
    # state['src'] flattens to (B, (sent_len+1)*per_sent): row 0 = question, rest = doc
    src = jax.random.randint(k2, (B, (sent_len + 1) * per_sent), 0, cfg["vocab_size"])
    memory_bank = jax.random.normal(k3, (B, src_len, cfg["hidden_size"]), jnp.float32)
    doc_memory_bank = jax.random.normal(k4, (B, doc_len, cfg["hidden_size"]), jnp.float32)
    sent_vec = jax.random.normal(k5, (B, sent_len, cfg["hidden_size"]), jnp.float32)
    sent_pad_mask = jnp.zeros((B, sent_len), jnp.float32)

    params = init_params(kp, cfg)

    fwd = jax.jit(lambda p, t, mb, dmb, sv, spm, s:
                  transformer_decoder_forward(p, cfg, t, mb, dmb, sv, spm, s))
    out = fwd(params, tgt, memory_bank, doc_memory_bank,
              sent_vec, sent_pad_mask, src)
    jax.block_until_ready(out)
    assert out.shape == (B, T, cfg["hidden_size"])
    assert bool(jnp.all(jnp.isfinite(out)))
    print("KERNEL_OK")
</pallas_src>

<mosaic_0001>
module attributes {stable_mosaic.version = 11 : i64} {
  func.func @kernel(%arg0: i32, %arg1: memref<16x128xf32, #tpu.memory_space<vmem>>, %arg2: memref<16x128xbf16, #tpu.memory_space<vmem>>, %arg3: memref<48x128xbf16, #tpu.memory_space<vmem>>, %arg4: memref<2x8x8xf32, #tpu.memory_space<vmem>>, %arg5: memref<2x8x8xf32, #tpu.memory_space<vmem>>, %arg6: memref<2x8x24xf32, #tpu.memory_space<vmem>>, %arg7: memref<1x128x1792xbf16, #tpu.memory_space<vmem>>, %arg8: memref<1x256x128xbf16, #tpu.memory_space<vmem>>, %arg9: memref<1x1x1920xf32, #tpu.memory_space<vmem>>, %arg10: memref<1x8x128xf32, #tpu.memory_space<vmem>>, %arg11: memref<2x128xf32, #tpu.memory_space<vmem>>, %arg12: memref<16x128xf32, #tpu.memory_space<vmem>>) attributes {dimension_semantics = [#tpu.dimension_semantics<arbitrary>], iteration_bounds = array<i64: 2>, scalar_prefetch = 0 : i64, scratch_operands = 0 : i64, tpu.core_type = #tpu.core_type<tc>, window_params = [{pipeline_mode = #tpu.pipeline_mode<synchronous>, transform_indices = @transform_0, window_bounds = array<i64: 16, 128>}, {pipeline_mode = #tpu.pipeline_mode<synchronous>, transform_indices = @transform_1, window_bounds = array<i64: 16, 128>}, {pipeline_mode = #tpu.pipeline_mode<synchronous>, transform_indices = @transform_2, window_bounds = array<i64: 48, 128>}, {pipeline_mode = #tpu.pipeline_mode<synchronous>, transform_indices = @transform_3, window_bounds = array<i64: 2, 8, 8>}, {pipeline_mode = #tpu.pipeline_mode<synchronous>, transform_indices = @transform_4, window_bounds = array<i64: 2, 8, 8>}, {pipeline_mode = #tpu.pipeline_mode<synchronous>, transform_indices = @transform_5, window_bounds = array<i64: 2, 8, 24>}, {transform_indices = @transform_6, window_bounds = array<i64: 1, 128, 1792>}, {transform_indices = @transform_7, window_bounds = array<i64: 1, 256, 128>}, {transform_indices = @transform_8, window_bounds = array<i64: 1, 1, 1920>}, {transform_indices = @transform_9, window_bounds = array<i64: 1, 8, 128>}, {pipeline_mode = #tpu.pipeline_mode<synchronous>, transform_indices = @transform_10, window_bounds = array<i64: 2, 128>}, {pipeline_mode = #tpu.pipeline_mode<synchronous>, transform_indices = @transform_11, window_bounds = array<i64: 16, 128>}]} {
    %c0_i32 = arith.constant 0 : i32
    %0 = arith.cmpi eq, %arg0, %c0_i32 : i32
    %1 = arith.extui %0 : i1 to i32
    %c0_i32_0 = arith.constant 0 : i32
    %2 = arith.cmpi ne, %1, %c0_i32_0 : i32
    scf.if %2 {
      %c0_162 = arith.constant 0 : index
      %c0_163 = arith.constant 0 : index
      %481 = vector.load %arg1[%c0_162, %c0_163] : memref<16x128xf32, #tpu.memory_space<vmem>>, vector<16x128xf32>
      %c0_164 = arith.constant 0 : index
      %c0_165 = arith.constant 0 : index
      %482 = vector.load %arg12[%c0_164, %c0_165] : memref<16x128xf32, #tpu.memory_space<vmem>>, vector<16x128xf32>
      tpu.vector_store %arg12[%c0_164, %c0_165], %481 {strides = array<i32>} : memref<16x128xf32, #tpu.memory_space<vmem>>, vector<16x128xf32>,
    } else {
    }
    %c0 = arith.constant 0 : index
    %c0_1 = arith.constant 0 : index
    %c0_2 = arith.constant 0 : index
    %3 = vector.load %arg10[%c0, %c0_1, %c0_2] : memref<1x8x128xf32, #tpu.memory_space<vmem>>, vector<1x8x128xf32>
    %4 = vector.shape_cast %3 : vector<1x8x128xf32> to vector<8x128xf32>
    %c0_3 = arith.constant 0 : index
    %c0_4 = arith.constant 0 : index
    %5 = vector.load %arg12[%c0_3, %c0_4] : memref<16x128xf32, #tpu.memory_space<vmem>>, vector<16x128xf32>
    %6 = vector.extract_strided_slice %4 {offsets = [0, 0], sizes = [1, 128], strides = [1, 1]} : vector<8x128xf32> to vector<1x128xf32>
    %7 = vector.extract_strided_slice %4 {offsets = [1, 0], sizes = [1, 128], strides = [1, 1]} : vector<8x128xf32> to vector<1x128xf32>
    %cst = arith.constant dense<0.000000e+00> : vector<16xf32>
    %8 = vector.multi_reduction <add>, %5, %cst [1] : vector<16x128xf32> to vector<16xf32>
    %9 = vector.shape_cast %8 : vector<16xf32> to vector<16x1xf32>
    %cst_5 = arith.constant 1.280000e+02 : f32
    %10 = vector.broadcast %cst_5 : f32 to vector<16x1xf32>
    %11 = arith.divf %9, %10 : vector<16x1xf32>
    %12 = vector.broadcast %11 : vector<16x1xf32> to vector<16x128xf32>
    %13 = arith.subf %5, %12 : vector<16x128xf32>
    %14 = arith.mulf %13, %13 : vector<16x128xf32>
    %cst_6 = arith.constant dense<0.000000e+00> : vector<16xf32>
    %15 = vector.multi_reduction <add>, %14, %cst_6 [1] : vector<16x128xf32> to vector<16xf32>
    %16 = vector.shape_cast %15 : vector<16xf32> to vector<16x1xf32>
    %cst_7 = arith.constant 1.280000e+02 : f32
    %17 = vector.broadcast %cst_7 : f32 to vector<16x1xf32>
    %18 = arith.divf %16, %17 : vector<16x1xf32>
    %19 = vector.broadcast %11 : vector<16x1xf32> to vector<16x128xf32>
    %20 = arith.subf %5, %19 : vector<16x128xf32>
    %cst_8 = arith.constant 9.99999997E-7 : f32
    %21 = vector.broadcast %cst_8 : f32 to vector<16x1xf32>
    %22 = arith.addf %18, %21 : vector<16x1xf32>
    %23 = math.rsqrt %22 : vector<16x1xf32>
    %24 = vector.broadcast %23 : vector<16x1xf32> to vector<16x128xf32>
    %25 = arith.mulf %20, %24 : vector<16x128xf32>
    %26 = vector.broadcast %6 : vector<1x128xf32> to vector<16x128xf32>
    %27 = arith.mulf %25, %26 : vector<16x128xf32>
    %28 = vector.broadcast %7 : vector<1x128xf32> to vector<16x128xf32>
    %29 = arith.addf %27, %28 : vector<16x128xf32>
    %30 = arith.truncf %29 : vector<16x128xf32> to vector<16x128xbf16>
    %c0_9 = arith.constant 0 : index
    %c0_10 = arith.constant 0 : index
    %c0_11 = arith.constant 0 : index
    %31 = vector.load %arg7[%c0_9, %c0_10, %c0_11] : memref<1x128x1792xbf16, #tpu.memory_space<vmem>>, vector<1x128x384xbf16>
    %32 = vector.shape_cast %31 : vector<1x128x384xbf16> to vector<128x384xbf16>
    %cst_12 = arith.constant dense<0.000000e+00> : vector<16x384xf32>
    %33 = tpu.matmul %30, %32, %cst_12 {dimension_numbers = #tpu.dot_dimension_numbers<[1], [0], [0], [1], [0, 0, 1, 1], [], []>} : vector<16x128xbf16>, vector<128x384xbf16>, vector<16x384xf32> -> vector<16x384xf32>
    %c0_13 = arith.constant 0 : index
    %c0_14 = arith.constant 0 : index
    %c0_15 = arith.constant 0 : index
    %34 = vector.load %arg9[%c0_13, %c0_14, %c0_15] : memref<1x1x1920xf32, #tpu.memory_space<vmem>>, vector<1x1x384xf32>
    %35 = vector.shape_cast %34 : vector<1x1x384xf32> to vector<1x384xf32>
    %36 = vector.broadcast %35 : vector<1x384xf32> to vector<16x384xf32>
    %37 = arith.addf %33, %36 : vector<16x384xf32>
    %38 = vector.extract_strided_slice %37 {offsets = [0, 0], sizes = [16, 128], strides = [1, 1]} : vector<16x384xf32> to vector<16x128xf32>
    %39 = vector.extract_strided_slice %37 {offsets = [0, 128], sizes = [16, 128], strides = [1, 1]} : vector<16x384xf32> to vector<16x128xf32>
    %40 = vector.extract_strided_slice %37 {offsets = [0, 256], sizes = [16, 128], strides = [1, 1]} : vector<16x384xf32> to vector<16x128xf32>
    %c0_16 = arith.constant 0 : index
    %c0_17 = arith.constant 0 : index
    %c0_18 = arith.constant 0 : index
    %41 = vector.load %arg4[%c0_16, %c0_17, %c0_18] : memref<2x8x8xf32, #tpu.memory_space<vmem>>, vector<2x8x8xf32>
    %cst_19 = arith.constant 0.176776692 : f32
    %42 = vector.broadcast %cst_19 : f32 to vector<16x128xf32>
    %43 = arith.mulf %38, %42 : vector<16x128xf32>
    %44 = arith.truncf %43 : vector<16x128xf32> to vector<16x128xbf16>
    %45 = vector.shape_cast %44 : vector<16x128xbf16> to vector<2x8x128xbf16>
    %46 = arith.truncf %39 : vector<16x128xf32> to vector<16x128xbf16>
    %47 = vector.shape_cast %46 : vector<16x128xbf16> to vector<2x8x128xbf16>
    %48 = arith.truncf %40 : vector<16x128xf32> to vector<16x128xbf16>
    %49 = vector.shape_cast %48 : vector<16x128xbf16> to vector<2x8x128xbf16>
    %c0_20 = arith.constant 0 : index
    %c0_21 = arith.constant 0 : index
    %c384 = arith.constant 384 : index
    %50 = vector.load %arg7[%c0_20, %c0_21, %c384] : memref<1x128x1792xbf16, #tpu.memory_space<vmem>>, vector<1x128x128xbf16>
    %51 = vector.shape_cast %50 : vector<1x128x128xbf16> to vector<128x128xbf16>
    %52 = vector.extract_strided_slice %45 {offsets = [0, 0, 0], sizes = [2, 8, 32], strides = [1, 1, 1]} : vector<2x8x128xbf16> to vector<2x8x32xbf16>
    %53 = vector.extract_strided_slice %47 {offsets = [0, 0, 0], sizes = [2, 8, 32], strides = [1, 1, 1]} : vector<2x8x128xbf16> to vector<2x8x32xbf16>
    "tpu.trace_start"() <{level = 10 : i32, message = "bqd,bkd->bqk"}> : () -> ()
    %cst_22 = arith.constant dense<0.000000e+00> : vector<2x8x8xf32>
    %54 = tpu.matmul %52, %53, %cst_22 {dimension_numbers = #tpu.dot_dimension_numbers<[2], [2], [1], [1], [0, 0, 0, 1, 1, 1], [0], [0]>} : vector<2x8x32xbf16>, vector<2x8x32xbf16>, vector<2x8x8xf32> -> vector<2x8x8xf32>
    "tpu.trace_stop"() : () -> ()
    %55 = arith.addf %54, %41 : vector<2x8x8xf32>
    %cst_23 = arith.constant dense<0xFF800000> : vector<2x8xf32>
    %56 = vector.multi_reduction <maximumf>, %55, %cst_23 [2] : vector<2x8x8xf32> to vector<2x8xf32>
    %57 = vector.shape_cast %56 : vector<2x8xf32> to vector<2x8x1xf32>
    %58 = vector.broadcast %57 : vector<2x8x1xf32> to vector<2x8x8xf32>
    %59 = arith.subf %55, %58 : vector<2x8x8xf32>
    %60 = math.exp %59 : vector<2x8x8xf32>
    %cst_24 = arith.constant dense<0.000000e+00> : vector<2x8xf32>
    %61 = vector.multi_reduction <add>, %60, %cst_24 [2] : vector<2x8x8xf32> to vector<2x8xf32>
    %62 = vector.shape_cast %61 : vector<2x8xf32> to vector<2x8x1xf32>
    %63 = tpu.reciprocal %62 {approx = true} : vector<2x8x1xf32> -> vector<2x8x1xf32>
    %64 = vector.broadcast %63 : vector<2x8x1xf32> to vector<2x8x8xf32>
    %65 = arith.mulf %60, %64 : vector<2x8x8xf32>
    %66 = arith.truncf %65 : vector<2x8x8xf32> to vector<2x8x8xbf16>
    %67 = vector.extract_strided_slice %49 {offsets = [0, 0, 0], sizes = [2, 8, 32], strides = [1, 1, 1]} : vector<2x8x128xbf16> to vector<2x8x32xbf16>
    "tpu.trace_start"() <{level = 10 : i32, message = "bqk,bkd->bqd"}> : () -> ()
    %cst_25 = arith.constant dense<0.000000e+00> : vector<2x8x32xf32>
    %68 = tpu.matmul %66, %67, %cst_25 {dimension_numbers = #tpu.dot_dimension_numbers<[2], [1], [1], [2], [0, 0, 0, 1, 1, 2], [0], [0]>} : vector<2x8x8xbf16>, vector<2x8x32xbf16>, vector<2x8x32xf32> -> vector<2x8x32xf32>
    "tpu.trace_stop"() : () -> ()
    %69 = vector.shape_cast %68 : vector<2x8x32xf32> to vector<16x32xf32>
    %70 = arith.truncf %69 : vector<16x32xf32> to vector<16x32xbf16>
    %71 = vector.extract_strided_slice %51 {offsets = [0, 0], sizes = [32, 128], strides = [1, 1]} : vector<128x128xbf16> to vector<32x128xbf16>
    %cst_26 = arith.constant dense<0.000000e+00> : vector<16x128xf32>
    %72 = tpu.matmul %70, %71, %cst_26 {dimension_numbers = #tpu.dot_dimension_numbers<[1], [0], [0], [1], [0, 0, 1, 1], [], []>} : vector<16x32xbf16>, vector<32x128xbf16>, vector<16x128xf32> -> vector<16x128xf32>
    %73 = vector.extract_strided_slice %45 {offsets = [0, 0, 32], sizes = [2, 8, 32], strides = [1, 1, 1]} : vector<2x8x128xbf16> to vector<2x8x32xbf16>
    %74 = vector.extract_strided_slice %47 {offsets = [0, 0, 32], sizes = [2, 8, 32], strides = [1, 1, 1]} : vector<2x8x128xbf16> to vector<2x8x32xbf16>
    "tpu.trace_start"() <{level = 10 : i32, message = "bqd,bkd->bqk"}> : () -> ()
    %cst_27 = arith.constant dense<0.000000e+00> : vector<2x8x8xf32>
    %75 = tpu.matmul %73, %74, %cst_27 {dimension_numbers = #tpu.dot_dimension_numbers<[2], [2], [1], [1], [0, 0, 0, 1, 1, 1], [0], [0]>} : vector<2x8x32xbf16>, vector<2x8x32xbf16>, vector<2x8x8xf32> -> vector<2x8x8xf32>
    "tpu.trace_stop"() : () -> ()
    %76 = arith.addf %75, %41 : vector<2x8x8xf32>
    %cst_28 = arith.constant dense<0xFF800000> : vector<2x8xf32>
    %77 = vector.multi_reduction <maximumf>, %76, %cst_28 [2] : vector<2x8x8xf32> to vector<2x8xf32>
    %78 = vector.shape_cast %77 : vector<2x8xf32> to vector<2x8x1xf32>
    %79 = vector.broadcast %78 : vector<2x8x1xf32> to vector<2x8x8xf32>
    %80 = arith.subf %76, %79 : vector<2x8x8xf32>
    %81 = math.exp %80 : vector<2x8x8xf32>
    %cst_29 = arith.constant dense<0.000000e+00> : vector<2x8xf32>
    %82 = vector.multi_reduction <add>, %81, %cst_29 [2] : vector<2x8x8xf32> to vector<2x8xf32>
    %83 = vector.shape_cast %82 : vector<2x8xf32> to vector<2x8x1xf32>
    %84 = tpu.reciprocal %83 {approx = true} : vector<2x8x1xf32> -> vector<2x8x1xf32>
    %85 = vector.broadcast %84 : vector<2x8x1xf32> to vector<2x8x8xf32>
    %86 = arith.mulf %81, %85 : vector<2x8x8xf32>
    %87 = arith.truncf %86 : vector<2x8x8xf32> to vector<2x8x8xbf16>
    %88 = vector.extract_strided_slice %49 {offsets = [0, 0, 32], sizes = [2, 8, 32], strides = [1, 1, 1]} : vector<2x8x128xbf16> to vector<2x8x32xbf16>
    "tpu.trace_start"() <{level = 10 : i32, message = "bqk,bkd->bqd"}> : () -> ()
    %cst_30 = arith.constant dense<0.000000e+00> : vector<2x8x32xf32>
    %89 = tpu.matmul %87, %88, %cst_30 {dimension_numbers = #tpu.dot_dimension_numbers<[2], [1], [1], [2], [0, 0, 0, 1, 1, 2], [0], [0]>} : vector<2x8x8xbf16>, vector<2x8x32xbf16>, vector<2x8x32xf32> -> vector<2x8x32xf32>
    "tpu.trace_stop"() : () -> ()
    %90 = vector.shape_cast %89 : vector<2x8x32xf32> to vector<16x32xf32>
    %91 = arith.truncf %90 : vector<16x32xf32> to vector<16x32xbf16>
    %92 = vector.extract_strided_slice %51 {offsets = [32, 0], sizes = [32, 128], strides = [1, 1]} : vector<128x128xbf16> to vector<32x128xbf16>
    %cst_31 = arith.constant dense<0.000000e+00> : vector<16x128xf32>
    %93 = tpu.matmul %91, %92, %cst_31 {dimension_numbers = #tpu.dot_dimension_numbers<[1], [0], [0], [1], [0, 0, 1, 1], [], []>} : vector<16x32xbf16>, vector<32x128xbf16>, vector<16x128xf32> -> vector<16x128xf32>
    %94 = arith.addf %72, %93 : vector<16x128xf32>
    %95 = vector.extract_strided_slice %45 {offsets = [0, 0, 64], sizes = [2, 8, 32], strides = [1, 1, 1]} : vector<2x8x128xbf16> to vector<2x8x32xbf16>
    %96 = vector.extract_strided_slice %47 {offsets = [0, 0, 64], sizes = [2, 8, 32], strides = [1, 1, 1]} : vector<2x8x128xbf16> to vector<2x8x32xbf16>
    "tpu.trace_start"() <{level = 10 : i32, message = "bqd,bkd->bqk"}> : () -> ()
    %cst_32 = arith.constant dense<0.000000e+00> : vector<2x8x8xf32>
    %97 = tpu.matmul %95, %96, %cst_32 {dimension_numbers = #tpu.dot_dimension_numbers<[2], [2], [1], [1], [0, 0, 0, 1, 1, 1], [0], [0]>} : vector<2x8x32xbf16>, vector<2x8x32xbf16>, vector<2x8x8xf32> -> vector<2x8x8xf32>
    "tpu.trace_stop"() : () -> ()
    %98 = arith.addf %97, %41 : vector<2x8x8xf32>
    %cst_33 = arith.constant dense<0xFF800000> : vector<2x8xf32>
    %99 = vector.multi_reduction <maximumf>, %98, %cst_33 [2] : vector<2x8x8xf32> to vector<2x8xf32>
    %100 = vector.shape_cast %99 : vector<2x8xf32> to vector<2x8x1xf32>
    %101 = vector.broadcast %100 : vector<2x8x1xf32> to vector<2x8x8xf32>
    %102 = arith.subf %98, %101 : vector<2x8x8xf32>
    %103 = math.exp %102 : vector<2x8x8xf32>
    %cst_34 = arith.constant dense<0.000000e+00> : vector<2x8xf32>
    %104 = vector.multi_reduction <add>, %103, %cst_34 [2] : vector<2x8x8xf32> to vector<2x8xf32>
    %105 = vector.shape_cast %104 : vector<2x8xf32> to vector<2x8x1xf32>
    %106 = tpu.reciprocal %105 {approx = true} : vector<2x8x1xf32> -> vector<2x8x1xf32>
    %107 = vector.broadcast %106 : vector<2x8x1xf32> to vector<2x8x8xf32>
    %108 = arith.mulf %103, %107 : vector<2x8x8xf32>
    %109 = arith.truncf %108 : vector<2x8x8xf32> to vector<2x8x8xbf16>
    %110 = vector.extract_strided_slice %49 {offsets = [0, 0, 64], sizes = [2, 8, 32], strides = [1, 1, 1]} : vector<2x8x128xbf16> to vector<2x8x32xbf16>
    "tpu.trace_start"() <{level = 10 : i32, message = "bqk,bkd->bqd"}> : () -> ()
    %cst_35 = arith.constant dense<0.000000e+00> : vector<2x8x32xf32>
    %111 = tpu.matmul %109, %110, %cst_35 {dimension_numbers = #tpu.dot_dimension_numbers<[2], [1], [1], [2], [0, 0, 0, 1, 1, 2], [0], [0]>} : vector<2x8x8xbf16>, vector<2x8x32xbf16>, vector<2x8x32xf32> -> vector<2x8x32xf32>
    "tpu.trace_stop"() : () -> ()
    %112 = vector.shape_cast %111 : vector<2x8x32xf32> to vector<16x32xf32>
    %113 = arith.truncf %112 : vector<16x32xf32> to vector<16x32xbf16>
    %114 = vector.extract_strided_slice %51 {offsets = [64, 0], sizes = [32, 128], strides = [1, 1]} : vector<128x128xbf16> to vector<32x128xbf16>
    %cst_36 = arith.constant dense<0.000000e+00> : vector<16x128xf32>
    %115 = tpu.matmul %113, %114, %cst_36 {dimension_numbers = #tpu.dot_dimension_numbers<[1], [0], [0], [1], [0, 0, 1, 1], [], []>} : vector<16x32xbf16>, vector<32x128xbf16>, vector<16x128xf32> -> vector<16x128xf32>
    %116 = arith.addf %94, %115 : vector<16x128xf32>
    %117 = vector.extract_strided_slice %45 {offsets = [0, 0, 96], sizes = [2, 8, 32], strides = [1, 1, 1]} : vector<2x8x128xbf16> to vector<2x8x32xbf16>
    %118 = vector.extract_strided_slice %47 {offsets = [0, 0, 96], sizes = [2, 8, 32], strides = [1, 1, 1]} : vector<2x8x128xbf16> to vector<2x8x32xbf16>
    "tpu.trace_start"() <{level = 10 : i32, message = "bqd,bkd->bqk"}> : () -> ()
    %cst_37 = arith.constant dense<0.000000e+00> : vector<2x8x8xf32>
    %119 = tpu.matmul %117, %118, %cst_37 {dimension_numbers = #tpu.dot_dimension_numbers<[2], [2], [1], [1], [0, 0, 0, 1, 1, 1], [0], [0]>} : vector<2x8x32xbf16>, vector<2x8x32xbf16>, vector<2x8x8xf32> -> vector<2x8x8xf32>
    "tpu.trace_stop"() : () -> ()
    %120 = arith.addf %119, %41 : vector<2x8x8xf32>
    %cst_38 = arith.constant dense<0xFF800000> : vector<2x8xf32>
    %121 = vector.multi_reduction <maximumf>, %120, %cst_38 [2] : vector<2x8x8xf32> to vector<2x8xf32>
    %122 = vector.shape_cast %121 : vector<2x8xf32> to vector<2x8x1xf32>
    %123 = vector.broadcast %122 : vector<2x8x1xf32> to vector<2x8x8xf32>
    %124 = arith.subf %120, %123 : vector<2x8x8xf32>
    %125 = math.exp %124 : vector<2x8x8xf32>
    %cst_39 = arith.constant dense<0.000000e+00> : vector<2x8xf32>
    %126 = vector.multi_reduction <add>, %125, %cst_39 [2] : vector<2x8x8xf32> to vector<2x8xf32>
    %127 = vector.shape_cast %126 : vector<2x8xf32> to vector<2x8x1xf32>
    %128 = tpu.reciprocal %127 {approx = true} : vector<2x8x1xf32> -> vector<2x8x1xf32>
    %129 = vector.broadcast %128 : vector<2x8x1xf32> to vector<2x8x8xf32>
    %130 = arith.mulf %125, %129 : vector<2x8x8xf32>
    %131 = arith.truncf %130 : vector<2x8x8xf32> to vector<2x8x8xbf16>
    %132 = vector.extract_strided_slice %49 {offsets = [0, 0, 96], sizes = [2, 8, 32], strides = [1, 1, 1]} : vector<2x8x128xbf16> to vector<2x8x32xbf16>
    "tpu.trace_start"() <{level = 10 : i32, message = "bqk,bkd->bqd"}> : () -> ()
    %cst_40 = arith.constant dense<0.000000e+00> : vector<2x8x32xf32>
    %133 = tpu.matmul %131, %132, %cst_40 {dimension_numbers = #tpu.dot_dimension_numbers<[2], [1], [1], [2], [0, 0, 0, 1, 1, 2], [0], [0]>} : vector<2x8x8xbf16>, vector<2x8x32xbf16>, vector<2x8x32xf32> -> vector<2x8x32xf32>
    "tpu.trace_stop"() : () -> ()
    %134 = vector.shape_cast %133 : vector<2x8x32xf32> to vector<16x32xf32>
    %135 = arith.truncf %134 : vector<16x32xf32> to vector<16x32xbf16>
    %136 = vector.extract_strided_slice %51 {offsets = [96, 0], sizes = [32, 128], strides = [1, 1]} : vector<128x128xbf16> to vector<32x128xbf16>
    %cst_41 = arith.constant dense<0.000000e+00> : vector<16x128xf32>
    %137 = tpu.matmul %135, %136, %cst_41 {dimension_numbers = #tpu.dot_dimension_numbers<[1], [0], [0], [1], [0, 0, 1, 1], [], []>} : vector<16x32xbf16>, vector<32x128xbf16>, vector<16x128xf32> -> vector<16x128xf32>
    %138 = arith.addf %116, %137 : vector<16x128xf32>
    %c0_42 = arith.constant 0 : index
    %c0_43 = arith.constant 0 : index
    %c384_44 = arith.constant 384 : index
    %139 = vector.load %arg9[%c0_42, %c0_43, %c384_44] : memref<1x1x1920xf32, #tpu.memory_space<vmem>>, vector<1x1x128xf32>
    %140 = vector.shape_cast %139 : vector<1x1x128xf32> to vector<1x128xf32>
    %141 = vector.broadcast %140 : vector<1x128xf32> to vector<16x128xf32>
    %142 = arith.addf %138, %141 : vector<16x128xf32>
    %143 = arith.addf %142, %5 : vector<16x128xf32>
    %144 = vector.extract_strided_slice %4 {offsets = [2, 0], sizes = [1, 128], strides = [1, 1]} : vector<8x128xf32> to vector<1x128xf32>
    %145 = vector.extract_strided_slice %4 {offsets = [3, 0], sizes = [1, 128], strides = [1, 1]} : vector<8x128xf32> to vector<1x128xf32>
    %cst_45 = arith.constant dense<0.000000e+00> : vector<16xf32>
    %146 = vector.multi_reduction <add>, %143, %cst_45 [1] : vector<16x128xf32> to vector<16xf32>
    %147 = vector.shape_cast %146 : vector<16xf32> to vector<16x1xf32>
    %cst_46 = arith.constant 1.280000e+02 : f32
    %148 = vector.broadcast %cst_46 : f32 to vector<16x1xf32>
    %149 = arith.divf %147, %148 : vector<16x1xf32>
    %150 = vector.broadcast %149 : vector<16x1xf32> to vector<16x128xf32>
    %151 = arith.subf %143, %150 : vector<16x128xf32>
    %152 = arith.mulf %151, %151 : vector<16x128xf32>
    %cst_47 = arith.constant dense<0.000000e+00> : vector<16xf32>
    %153 = vector.multi_reduction <add>, %152, %cst_47 [1] : vector<16x128xf32> to vector<16xf32>
    %154 = vector.shape_cast %153 : vector<16xf32> to vector<16x1xf32>
    %cst_48 = arith.constant 1.280000e+02 : f32
    %155 = vector.broadcast %cst_48 : f32 to vector<16x1xf32>
    %156 = arith.divf %154, %155 : vector<16x1xf32>
    %157 = vector.broadcast %149 : vector<16x1xf32> to vector<16x128xf32>
    %158 = arith.subf %143, %157 : vector<16x128xf32>
    %cst_49 = arith.constant 9.99999997E-7 : f32
    %159 = vector.broadcast %cst_49 : f32 to vector<16x1xf32>
    %160 = arith.addf %156, %159 : vector<16x1xf32>
    %161 = math.rsqrt %160 : vector<16x1xf32>
    %162 = vector.broadcast %161 : vector<16x1xf32> to vector<16x128xf32>
    %163 = arith.mulf %158, %162 : vector<16x128xf32>
    %164 = vector.broadcast %144 : vector<1x128xf32> to vector<16x128xf32>
    %165 = arith.mulf %163, %164 : vector<16x128xf32>
    %166 = vector.broadcast %145 : vector<1x128xf32> to vector<16x128xf32>
    %167 = arith.addf %165, %166 : vector<16x128xf32>
    %168 = arith.truncf %167 : vector<16x128xf32> to vector<16x128xbf16>
    %c0_50 = arith.constant 0 : index
    %c0_51 = arith.constant 0 : index
    %c512 = arith.constant 512 : index
    %169 = vector.load %arg7[%c0_50, %c0_51, %c512] : memref<1x128x1792xbf16, #tpu.memory_space<vmem>>, vector<1x128x128xbf16>
    %170 = vector.shape_cast %169 : vector<1x128x128xbf16> to vector<128x128xbf16>
    %cst_52 = arith.constant dense<0.000000e+00> : vector<16x128xf32>
    %171 = tpu.matmul %168, %170, %cst_52 {dimension_numbers = #tpu.dot_dimension_numbers<[1], [0], [0], [1], [0, 0, 1, 1], [], []>} : vector<16x128xbf16>, vector<128x128xbf16>, vector<16x128xf32> -> vector<16x128xf32>
    %c0_53 = arith.constant 0 : index
    %c0_54 = arith.constant 0 : index
    %c512_55 = arith.constant 512 : index
    %172 = vector.load %arg9[%c0_53, %c0_54, %c512_55] : memref<1x1x1920xf32, #tpu.memory_space<vmem>>, vector<1x1x128xf32>
    %173 = vector.shape_cast %172 : vector<1x1x128xf32> to vector<1x128xf32>
    %174 = vector.broadcast %173 : vector<1x128xf32> to vector<16x128xf32>
    %175 = arith.addf %171, %174 : vector<16x128xf32>
    %c0_56 = arith.constant 0 : index
    %c0_57 = arith.constant 0 : index
    %176 = vector.load %arg2[%c0_56, %c0_57] : memref<16x128xbf16, #tpu.memory_space<vmem>>, vector<16x128xbf16>
    %c0_58 = arith.constant 0 : index
    %c0_59 = arith.constant 0 : index
    %c640 = arith.constant 640 : index
    %177 = vector.load %arg7[%c0_58, %c0_59, %c640] : memref<1x128x1792xbf16, #tpu.memory_space<vmem>>, vector<1x128x256xbf16>
    %178 = vector.shape_cast %177 : vector<1x128x256xbf16> to vector<128x256xbf16>
    %cst_60 = arith.constant dense<0.000000e+00> : vector<16x256xf32>
    %179 = tpu.matmul %176, %178, %cst_60 {dimension_numbers = #tpu.dot_dimension_numbers<[1], [0], [0], [1], [0, 0, 1, 1], [], []>} : vector<16x128xbf16>, vector<128x256xbf16>, vector<16x256xf32> -> vector<16x256xf32>
    %c0_61 = arith.constant 0 : index
    %c0_62 = arith.constant 0 : index
    %c640_63 = arith.constant 640 : index
    %180 = vector.load %arg9[%c0_61, %c0_62, %c640_63] : memref<1x1x1920xf32, #tpu.memory_space<vmem>>, vector<1x1x256xf32>
    %181 = vector.shape_cast %180 : vector<1x1x256xf32> to vector<1x256xf32>
    %182 = vector.broadcast %181 : vector<1x256xf32> to vector<16x256xf32>
    %183 = arith.addf %179, %182 : vector<16x256xf32>
    %184 = vector.extract_strided_slice %183 {offsets = [0, 0], sizes = [16, 128], strides = [1, 1]} : vector<16x256xf32> to vector<16x128xf32>
    %185 = vector.extract_strided_slice %183 {offsets = [0, 128], sizes = [16, 128], strides = [1, 1]} : vector<16x256xf32> to vector<16x128xf32>
    %c0_64 = arith.constant 0 : index
    %c0_65 = arith.constant 0 : index
    %c0_66 = arith.constant 0 : index
    %186 = vector.load %arg5[%c0_64, %c0_65, %c0_66] : memref<2x8x8xf32, #tpu.memory_space<vmem>>, vector<2x8x8xf32>
    %cst_67 = arith.constant 0.176776692 : f32
    %187 = vector.broadcast %cst_67 : f32 to vector<16x128xf32>
    %188 = arith.mulf %175, %187 : vector<16x128xf32>
    %189 = arith.truncf %188 : vector<16x128xf32> to vector<16x128xbf16>
    %190 = vector.shape_cast %189 : vector<16x128xbf16> to vector<2x8x128xbf16>
    %191 = arith.truncf %184 : vector<16x128xf32> to vector<16x128xbf16>
    %192 = vector.shape_cast %191 : vector<16x128xbf16> to vector<2x8x128xbf16>
    %193 = arith.truncf %185 : vector<16x128xf32> to vector<16x128xbf16>
    %194 = vector.shape_cast %193 : vector<16x128xbf16> to vector<2x8x128xbf16>
    %c0_68 = arith.constant 0 : index
    %c0_69 = arith.constant 0 : index
    %c896 = arith.constant 896 : index
    %195 = vector.load %arg7[%c0_68, %c0_69, %c896] : memref<1x128x1792xbf16, #tpu.memory_space<vmem>>, vector<1x128x128xbf16>
    %196 = vector.shape_cast %195 : vector<1x128x128xbf16> to vector<128x128xbf16>
    %197 = vector.extract_strided_slice %190 {offsets = [0, 0, 0], sizes = [2, 8, 32], strides = [1, 1, 1]} : vector<2x8x128xbf16> to vector<2x8x32xbf16>
    %198 = vector.extract_strided_slice %192 {offsets = [0, 0, 0], sizes = [2, 8, 32], strides = [1, 1, 1]} : vector<2x8x128xbf16> to vector<2x8x32xbf16>
    "tpu.trace_start"() <{level = 10 : i32, message = "bqd,bkd->bqk"}> : () -> ()
    %cst_70 = arith.constant dense<0.000000e+00> : vector<2x8x8xf32>
    %199 = tpu.matmul %197, %198, %cst_70 {dimension_numbers = #tpu.dot_dimension_numbers<[2], [2], [1], [1], [0, 0, 0, 1, 1, 1], [0], [0]>} : vector<2x8x32xbf16>, vector<2x8x32xbf16>, vector<2x8x8xf32> -> vector<2x8x8xf32>
    "tpu.trace_stop"() : () -> ()
    %200 = arith.addf %199, %186 : vector<2x8x8xf32>
    %cst_71 = arith.constant dense<0xFF800000> : vector<2x8xf32>
    %201 = vector.multi_reduction <maximumf>, %200, %cst_71 [2] : vector<2x8x8xf32> to vector<2x8xf32>
    %202 = vector.shape_cast %201 : vector<2x8xf32> to vector<2x8x1xf32>
    %203 = vector.broadcast %202 : vector<2x8x1xf32> to vector<2x8x8xf32>
    %204 = arith.subf %200, %203 : vector<2x8x8xf32>
    %205 = math.exp %204 : vector<2x8x8xf32>
    %cst_72 = arith.constant dense<0.000000e+00> : vector<2x8xf32>
    %206 = vector.multi_reduction <add>, %205, %cst_72 [2] : vector<2x8x8xf32> to vector<2x8xf32>
    %207 = vector.shape_cast %206 : vector<2x8xf32> to vector<2x8x1xf32>
    %208 = tpu.reciprocal %207 {approx = true} : vector<2x8x1xf32> -> vector<2x8x1xf32>
    %209 = vector.broadcast %208 : vector<2x8x1xf32> to vector<2x8x8xf32>
    %210 = arith.mulf %205, %209 : vector<2x8x8xf32>
    %211 = arith.truncf %210 : vector<2x8x8xf32> to vector<2x8x8xbf16>
    %212 = vector.extract_strided_slice %194 {offsets = [0, 0, 0], sizes = [2, 8, 32], strides = [1, 1, 1]} : vector<2x8x128xbf16> to vector<2x8x32xbf16>
    "tpu.trace_start"() <{level = 10 : i32, message = "bqk,bkd->bqd"}> : () -> ()
    %cst_73 = arith.constant dense<0.000000e+00> : vector<2x8x32xf32>
    %213 = tpu.matmul %211, %212, %cst_73 {dimension_numbers = #tpu.dot_dimension_numbers<[2], [1], [1], [2], [0, 0, 0, 1, 1, 2], [0], [0]>} : vector<2x8x8xbf16>, vector<2x8x32xbf16>, vector<2x8x32xf32> -> vector<2x8x32xf32>
    "tpu.trace_stop"() : () -> ()
    %214 = vector.shape_cast %213 : vector<2x8x32xf32> to vector<16x32xf32>
    %215 = arith.truncf %214 : vector<16x32xf32> to vector<16x32xbf16>
    %216 = vector.extract_strided_slice %196 {offsets = [0, 0], sizes = [32, 128], strides = [1, 1]} : vector<128x128xbf16> to vector<32x128xbf16>
    %cst_74 = arith.constant dense<0.000000e+00> : vector<16x128xf32>
    %217 = tpu.matmul %215, %216, %cst_74 {dimension_numbers = #tpu.dot_dimension_numbers<[1], [0], [0], [1], [0, 0, 1, 1], [], []>} : vector<16x32xbf16>, vector<32x128xbf16>, vector<16x128xf32> -> vector<16x128xf32>
    %218 = vector.extract_strided_slice %190 {offsets = [0, 0, 32], sizes = [2, 8, 32], strides = [1, 1, 1]} : vector<2x8x128xbf16> to vector<2x8x32xbf16>
    %219 = vector.extract_strided_slice %192 {offsets = [0, 0, 32], sizes = [2, 8, 32], strides = [1, 1, 1]} : vector<2x8x128xbf16> to vector<2x8x32xbf16>
    "tpu.trace_start"() <{level = 10 : i32, message = "bqd,bkd->bqk"}> : () -> ()
    %cst_75 = arith.constant dense<0.000000e+00> : vector<2x8x8xf32>
    %220 = tpu.matmul %218, %219, %cst_75 {dimension_numbers = #tpu.dot_dimension_numbers<[2], [2], [1], [1], [0, 0, 0, 1, 1, 1], [0], [0]>} : vector<2x8x32xbf16>, vector<2x8x32xbf16>, vector<2x8x8xf32> -> vector<2x8x8xf32>
    "tpu.trace_stop"() : () -> ()
    %221 = arith.addf %220, %186 : vector<2x8x8xf32>
    %cst_76 = arith.constant dense<0xFF800000> : vector<2x8xf32>
    %222 = vector.multi_reduction <maximumf>, %221, %cst_76 [2] : vector<2x8x8xf32> to vector<2x8xf32>
    %223 = vector.shape_cast %222 : vector<2x8xf32> to vector<2x8x1xf32>
    %224 = vector.broadcast %223 : vector<2x8x1xf32> to vector<2x8x8xf32>
    %225 = arith.subf %221, %224 : vector<2x8x8xf32>
    %226 = math.exp %225 : vector<2x8x8xf32>
    %cst_77 = arith.constant dense<0.000000e+00> : vector<2x8xf32>
    %227 = vector.multi_reduction <add>, %226, %cst_77 [2] : vector<2x8x8xf32> to vector<2x8xf32>
    %228 = vector.shape_cast %227 : vector<2x8xf32> to vector<2x8x1xf32>
    %229 = tpu.reciprocal %228 {approx = true} : vector<2x8x1xf32> -> vector<2x8x1xf32>
    %230 = vector.broadcast %229 : vector<2x8x1xf32> to vector<2x8x8xf32>
    %231 = arith.mulf %226, %230 : vector<2x8x8xf32>
    %232 = arith.truncf %231 : vector<2x8x8xf32> to vector<2x8x8xbf16>
    %233 = vector.extract_strided_slice %194 {offsets = [0, 0, 32], sizes = [2, 8, 32], strides = [1, 1, 1]} : vector<2x8x128xbf16> to vector<2x8x32xbf16>
    "tpu.trace_start"() <{level = 10 : i32, message = "bqk,bkd->bqd"}> : () -> ()
    %cst_78 = arith.constant dense<0.000000e+00> : vector<2x8x32xf32>
    %234 = tpu.matmul %232, %233, %cst_78 {dimension_numbers = #tpu.dot_dimension_numbers<[2], [1], [1], [2], [0, 0, 0, 1, 1, 2], [0], [0]>} : vector<2x8x8xbf16>, vector<2x8x32xbf16>, vector<2x8x32xf32> -> vector<2x8x32xf32>
    "tpu.trace_stop"() : () -> ()
    %235 = vector.shape_cast %234 : vector<2x8x32xf32> to vector<16x32xf32>
    %236 = arith.truncf %235 : vector<16x32xf32> to vector<16x32xbf16>
    %237 = vector.extract_strided_slice %196 {offsets = [32, 0], sizes = [32, 128], strides = [1, 1]} : vector<128x128xbf16> to vector<32x128xbf16>
    %cst_79 = arith.constant dense<0.000000e+00> : vector<16x128xf32>
    %238 = tpu.matmul %236, %237, %cst_79 {dimension_numbers = #tpu.dot_dimension_numbers<[1], [0], [0], [1], [0, 0, 1, 1], [], []>} : vector<16x32xbf16>, vector<32x128xbf16>, vector<16x128xf32> -> vector<16x128xf32>
    %239 = arith.addf %217, %238 : vector<16x128xf32>
    %240 = vector.extract_strided_slice %190 {offsets = [0, 0, 64], sizes = [2, 8, 32], strides = [1, 1, 1]} : vector<2x8x128xbf16> to vector<2x8x32xbf16>
    %241 = vector.extract_strided_slice %192 {offsets = [0, 0, 64], sizes = [2, 8, 32], strides = [1, 1, 1]} : vector<2x8x128xbf16> to vector<2x8x32xbf16>
    "tpu.trace_start"() <{level = 10 : i32, message = "bqd,bkd->bqk"}> : () -> ()
    %cst_80 = arith.constant dense<0.000000e+00> : vector<2x8x8xf32>
    %242 = tpu.matmul %240, %241, %cst_80 {dimension_numbers = #tpu.dot_dimension_numbers<[2], [2], [1], [1], [0, 0, 0, 1, 1, 1], [0], [0]>} : vector<2x8x32xbf16>, vector<2x8x32xbf16>, vector<2x8x8xf32> -> vector<2x8x8xf32>
    "tpu.trace_stop"() : () -> ()
    %243 = arith.addf %242, %186 : vector<2x8x8xf32>
    %cst_81 = arith.constant dense<0xFF800000> : vector<2x8xf32>
    %244 = vector.multi_reduction <maximumf>, %243, %cst_81 [2] : vector<2x8x8xf32> to vector<2x8xf32>
    %245 = vector.shape_cast %244 : vector<2x8xf32> to vector<2x8x1xf32>
    %246 = vector.broadcast %245 : vector<2x8x1xf32> to vector<2x8x8xf32>
    %247 = arith.subf %243, %246 : vector<2x8x8xf32>
    %248 = math.exp %247 : vector<2x8x8xf32>
    %cst_82 = arith.constant dense<0.000000e+00> : vector<2x8xf32>
    %249 = vector.multi_reduction <add>, %248, %cst_82 [2] : vector<2x8x8xf32> to vector<2x8xf32>
    %250 = vector.shape_cast %249 : vector<2x8xf32> to vector<2x8x1xf32>
    %251 = tpu.reciprocal %250 {approx = true} : vector<2x8x1xf32> -> vector<2x8x1xf32>
    %252 = vector.broadcast %251 : vector<2x8x1xf32> to vector<2x8x8xf32>
    %253 = arith.mulf %248, %252 : vector<2x8x8xf32>
    %254 = arith.truncf %253 : vector<2x8x8xf32> to vector<2x8x8xbf16>
    %255 = vector.extract_strided_slice %194 {offsets = [0, 0, 64], sizes = [2, 8, 32], strides = [1, 1, 1]} : vector<2x8x128xbf16> to vector<2x8x32xbf16>
    "tpu.trace_start"() <{level = 10 : i32, message = "bqk,bkd->bqd"}> : () -> ()
    %cst_83 = arith.constant dense<0.000000e+00> : vector<2x8x32xf32>
    %256 = tpu.matmul %254, %255, %cst_83 {dimension_numbers = #tpu.dot_dimension_numbers<[2], [1], [1], [2], [0, 0, 0, 1, 1, 2], [0], [0]>} : vector<2x8x8xbf16>, vector<2x8x32xbf16>, vector<2x8x32xf32> -> vector<2x8x32xf32>
    "tpu.trace_stop"() : () -> ()
    %257 = vector.shape_cast %256 : vector<2x8x32xf32> to vector<16x32xf32>
    %258 = arith.truncf %257 : vector<16x32xf32> to vector<16x32xbf16>
    %259 = vector.extract_strided_slice %196 {offsets = [64, 0], sizes = [32, 128], strides = [1, 1]} : vector<128x128xbf16> to vector<32x128xbf16>
    %cst_84 = arith.constant dense<0.000000e+00> : vector<16x128xf32>
    %260 = tpu.matmul %258, %259, %cst_84 {dimension_numbers = #tpu.dot_dimension_numbers<[1], [0], [0], [1], [0, 0, 1, 1], [], []>} : vector<16x32xbf16>, vector<32x128xbf16>, vector<16x128xf32> -> vector<16x128xf32>
    %261 = arith.addf %239, %260 : vector<16x128xf32>
    %262 = vector.extract_strided_slice %190 {offsets = [0, 0, 96], sizes = [2, 8, 32], strides = [1, 1, 1]} : vector<2x8x128xbf16> to vector<2x8x32xbf16>
    %263 = vector.extract_strided_slice %192 {offsets = [0, 0, 96], sizes = [2, 8, 32], strides = [1, 1, 1]} : vector<2x8x128xbf16> to vector<2x8x32xbf16>
    "tpu.trace_start"() <{level = 10 : i32, message = "bqd,bkd->bqk"}> : () -> ()
    %cst_85 = arith.constant dense<0.000000e+00> : vector<2x8x8xf32>
    %264 = tpu.matmul %262, %263, %cst_85 {dimension_numbers = #tpu.dot_dimension_numbers<[2], [2], [1], [1], [0, 0, 0, 1, 1, 1], [0], [0]>} : vector<2x8x32xbf16>, vector<2x8x32xbf16>, vector<2x8x8xf32> -> vector<2x8x8xf32>
    "tpu.trace_stop"() : () -> ()
    %265 = arith.addf %264, %186 : vector<2x8x8xf32>
    %cst_86 = arith.constant dense<0xFF800000> : vector<2x8xf32>
    %266 = vector.multi_reduction <maximumf>, %265, %cst_86 [2] : vector<2x8x8xf32> to vector<2x8xf32>
    %267 = vector.shape_cast %266 : vector<2x8xf32> to vector<2x8x1xf32>
    %268 = vector.broadcast %267 : vector<2x8x1xf32> to vector<2x8x8xf32>
    %269 = arith.subf %265, %268 : vector<2x8x8xf32>
    %270 = math.exp %269 : vector<2x8x8xf32>
    %cst_87 = arith.constant dense<0.000000e+00> : vector<2x8xf32>
    %271 = vector.multi_reduction <add>, %270, %cst_87 [2] : vector<2x8x8xf32> to vector<2x8xf32>
    %272 = vector.shape_cast %271 : vector<2x8xf32> to vector<2x8x1xf32>
    %273 = tpu.reciprocal %272 {approx = true} : vector<2x8x1xf32> -> vector<2x8x1xf32>
    %274 = vector.broadcast %273 : vector<2x8x1xf32> to vector<2x8x8xf32>
    %275 = arith.mulf %270, %274 : vector<2x8x8xf32>
    %276 = arith.truncf %275 : vector<2x8x8xf32> to vector<2x8x8xbf16>
    %277 = vector.extract_strided_slice %194 {offsets = [0, 0, 96], sizes = [2, 8, 32], strides = [1, 1, 1]} : vector<2x8x128xbf16> to vector<2x8x32xbf16>
    "tpu.trace_start"() <{level = 10 : i32, message = "bqk,bkd->bqd"}> : () -> ()
    %cst_88 = arith.constant dense<0.000000e+00> : vector<2x8x32xf32>
    %278 = tpu.matmul %276, %277, %cst_88 {dimension_numbers = #tpu.dot_dimension_numbers<[2], [1], [1], [2], [0, 0, 0, 1, 1, 2], [0], [0]>} : vector<2x8x8xbf16>, vector<2x8x32xbf16>, vector<2x8x32xf32> -> vector<2x8x32xf32>
    "tpu.trace_stop"() : () -> ()
    %279 = vector.shape_cast %278 : vector<2x8x32xf32> to vector<16x32xf32>
    %280 = arith.truncf %279 : vector<16x32xf32> to vector<16x32xbf16>
    %281 = vector.extract_strided_slice %196 {offsets = [96, 0], sizes = [32, 128], strides = [1, 1]} : vector<128x128xbf16> to vector<32x128xbf16>
    %cst_89 = arith.constant dense<0.000000e+00> : vector<16x128xf32>
    %282 = tpu.matmul %280, %281, %cst_89 {dimension_numbers = #tpu.dot_dimension_numbers<[1], [0], [0], [1], [0, 0, 1, 1], [], []>} : vector<16x32xbf16>, vector<32x128xbf16>, vector<16x128xf32> -> vector<16x128xf32>
    %283 = arith.addf %261, %282 : vector<16x128xf32>
    %c0_90 = arith.constant 0 : index
    %c0_91 = arith.constant 0 : index
    %c896_92 = arith.constant 896 : index
    %284 = vector.load %arg9[%c0_90, %c0_91, %c896_92] : memref<1x1x1920xf32, #tpu.memory_space<vmem>>, vector<1x1x128xf32>
    %285 = vector.shape_cast %284 : vector<1x1x128xf32> to vector<1x128xf32>
    %286 = vector.broadcast %285 : vector<1x128xf32> to vector<16x128xf32>
    %287 = arith.addf %283, %286 : vector<16x128xf32>
    %288 = arith.addf %287, %143 : vector<16x128xf32>
    %289 = vector.extract_strided_slice %4 {offsets = [4, 0], sizes = [1, 128], strides = [1, 1]} : vector<8x128xf32> to vector<1x128xf32>
    %290 = vector.extract_strided_slice %4 {offsets = [5, 0], sizes = [1, 128], strides = [1, 1]} : vector<8x128xf32> to vector<1x128xf32>
    %cst_93 = arith.constant dense<0.000000e+00> : vector<16xf32>
    %291 = vector.multi_reduction <add>, %288, %cst_93 [1] : vector<16x128xf32> to vector<16xf32>
    %292 = vector.shape_cast %291 : vector<16xf32> to vector<16x1xf32>
    %cst_94 = arith.constant 1.280000e+02 : f32
    %293 = vector.broadcast %cst_94 : f32 to vector<16x1xf32>
    %294 = arith.divf %292, %293 : vector<16x1xf32>
    %295 = vector.broadcast %294 : vector<16x1xf32> to vector<16x128xf32>
    %296 = arith.subf %288, %295 : vector<16x128xf32>
    %297 = arith.mulf %296, %296 : vector<16x128xf32>
    %cst_95 = arith.constant dense<0.000000e+00> : vector<16xf32>
    %298 = vector.multi_reduction <add>, %297, %cst_95 [1] : vector<16x128xf32> to vector<16xf32>
    %299 = vector.shape_cast %298 : vector<16xf32> to vector<16x1xf32>
    %cst_96 = arith.constant 1.280000e+02 : f32
    %300 = vector.broadcast %cst_96 : f32 to vector<16x1xf32>
    %301 = arith.divf %299, %300 : vector<16x1xf32>
    %302 = vector.broadcast %294 : vector<16x1xf32> to vector<16x128xf32>
    %303 = arith.subf %288, %302 : vector<16x128xf32>
    %cst_97 = arith.constant 9.99999997E-7 : f32
    %304 = vector.broadcast %cst_97 : f32 to vector<16x1xf32>
    %305 = arith.addf %301, %304 : vector<16x1xf32>
    %306 = math.rsqrt %305 : vector<16x1xf32>
    %307 = vector.broadcast %306 : vector<16x1xf32> to vector<16x128xf32>
    %308 = arith.mulf %303, %307 : vector<16x128xf32>
    %309 = vector.broadcast %289 : vector<1x128xf32> to vector<16x128xf32>
    %310 = arith.mulf %308, %309 : vector<16x128xf32>
    %311 = vector.broadcast %290 : vector<1x128xf32> to vector<16x128xf32>
    %312 = arith.addf %310, %311 : vector<16x128xf32>
    %313 = arith.truncf %312 : vector<16x128xf32> to vector<16x128xbf16>
    %c0_98 = arith.constant 0 : index
    %c0_99 = arith.constant 0 : index
    %c1024 = arith.constant 1024 : index
    %314 = vector.load %arg7[%c0_98, %c0_99, %c1024] : memref<1x128x1792xbf16, #tpu.memory_space<vmem>>, vector<1x128x128xbf16>
    %315 = vector.shape_cast %314 : vector<1x128x128xbf16> to vector<128x128xbf16>
    %cst_100 = arith.constant dense<0.000000e+00> : vector<16x128xf32>
    %316 = tpu.matmul %313, %315, %cst_100 {dimension_numbers = #tpu.dot_dimension_numbers<[1], [0], [0], [1], [0, 0, 1, 1], [], []>} : vector<16x128xbf16>, vector<128x128xbf16>, vector<16x128xf32> -> vector<16x128xf32>
    %c0_101 = arith.constant 0 : index
    %c0_102 = arith.constant 0 : index
    %c1024_103 = arith.constant 1024 : index
    %317 = vector.load %arg9[%c0_101, %c0_102, %c1024_103] : memref<1x1x1920xf32, #tpu.memory_space<vmem>>, vector<1x1x128xf32>
    %318 = vector.shape_cast %317 : vector<1x1x128xf32> to vector<1x128xf32>
    %319 = vector.broadcast %318 : vector<1x128xf32> to vector<16x128xf32>
    %320 = arith.addf %316, %319 : vector<16x128xf32>
    %c0_104 = arith.constant 0 : index
    %c0_105 = arith.constant 0 : index
    %321 = vector.load %arg3[%c0_104, %c0_105] : memref<48x128xbf16, #tpu.memory_space<vmem>>, vector<48x128xbf16>
    %c0_106 = arith.constant 0 : index
    %c0_107 = arith.constant 0 : index
    %c1152 = arith.constant 1152 : index
    %322 = vector.load %arg7[%c0_106, %c0_107, %c1152] : memref<1x128x1792xbf16, #tpu.memory_space<vmem>>, vector<1x128x256xbf16>
    %323 = vector.shape_cast %322 : vector<1x128x256xbf16> to vector<128x256xbf16>
    %cst_108 = arith.constant dense<0.000000e+00> : vector<48x256xf32>
    %324 = tpu.matmul %321, %323, %cst_108 {dimension_numbers = #tpu.dot_dimension_numbers<[1], [0], [0], [1], [0, 0, 1, 1], [], []>} : vector<48x128xbf16>, vector<128x256xbf16>, vector<48x256xf32> -> vector<48x256xf32>
    %c0_109 = arith.constant 0 : index
    %c0_110 = arith.constant 0 : index
    %c1152_111 = arith.constant 1152 : index
    %325 = vector.load %arg9[%c0_109, %c0_110, %c1152_111] : memref<1x1x1920xf32, #tpu.memory_space<vmem>>, vector<1x1x256xf32>
    %326 = vector.shape_cast %325 : vector<1x1x256xf32> to vector<1x256xf32>
    %327 = vector.broadcast %326 : vector<1x256xf32> to vector<48x256xf32>
    %328 = arith.addf %324, %327 : vector<48x256xf32>
    %329 = vector.extract_strided_slice %328 {offsets = [0, 0], sizes = [48, 128], strides = [1, 1]} : vector<48x256xf32> to vector<48x128xf32>
    %330 = vector.extract_strided_slice %328 {offsets = [0, 128], sizes = [48, 128], strides = [1, 1]} : vector<48x256xf32> to vector<48x128xf32>
    %c0_112 = arith.constant 0 : index
    %c0_113 = arith.constant 0 : index
    %c0_114 = arith.constant 0 : index
    %331 = vector.load %arg6[%c0_112, %c0_113, %c0_114] : memref<2x8x24xf32, #tpu.memory_space<vmem>>, vector<2x8x24xf32>
    %cst_115 = arith.constant 0.176776692 : f32
    %332 = vector.broadcast %cst_115 : f32 to vector<16x128xf32>
    %333 = arith.mulf %320, %332 : vector<16x128xf32>
    %334 = arith.truncf %333 : vector<16x128xf32> to vector<16x128xbf16>
    %335 = vector.shape_cast %334 : vector<16x128xbf16> to vector<2x8x128xbf16>
    %336 = arith.truncf %329 : vector<48x128xf32> to vector<48x128xbf16>
    %337 = vector.shape_cast %336 : vector<48x128xbf16> to vector<2x24x128xbf16>
    %338 = arith.truncf %330 : vector<48x128xf32> to vector<48x128xbf16>
    %339 = vector.shape_cast %338 : vector<48x128xbf16> to vector<2x24x128xbf16>
    %c0_116 = arith.constant 0 : index
    %c0_117 = arith.constant 0 : index
    %c1408 = arith.constant 1408 : index
    %340 = vector.load %arg7[%c0_116, %c0_117, %c1408] : memref<1x128x1792xbf16, #tpu.memory_space<vmem>>, vector<1x128x128xbf16>
    %341 = vector.shape_cast %340 : vector<1x128x128xbf16> to vector<128x128xbf16>
    %342 = vector.extract_strided_slice %335 {offsets = [0, 0, 0], sizes = [2, 8, 32], strides = [1, 1, 1]} : vector<2x8x128xbf16> to vector<2x8x32xbf16>
    %343 = vector.extract_strided_slice %337 {offsets = [0, 0, 0], sizes = [2, 24, 32], strides = [1, 1, 1]} : vector<2x24x128xbf16> to vector<2x24x32xbf16>
    "tpu.trace_start"() <{level = 10 : i32, message = "bqd,bkd->bqk"}> : () -> ()
    %cst_118 = arith.constant dense<0.000000e+00> : vector<2x8x24xf32>
    %344 = tpu.matmul %342, %343, %cst_118 {dimension_numbers = #tpu.dot_dimension_numbers<[2], [2], [1], [1], [0, 0, 0, 1, 1, 1], [0], [0]>} : vector<2x8x32xbf16>, vector<2x24x32xbf16>, vector<2x8x24xf32> -> vector<2x8x24xf32>
    "tpu.trace_stop"() : () -> ()
    %345 = arith.addf %344, %331 : vector<2x8x24xf32>
    %cst_119 = arith.constant dense<0xFF800000> : vector<2x8xf32>
    %346 = vector.multi_reduction <maximumf>, %345, %cst_119 [2] : vector<2x8x24xf32> to vector<2x8xf32>
    %347 = vector.shape_cast %346 : vector<2x8xf32> to vector<2x8x1xf32>
    %348 = vector.broadcast %347 : vector<2x8x1xf32> to vector<2x8x24xf32>
    %349 = arith.subf %345, %348 : vector<2x8x24xf32>
    %350 = math.exp %349 : vector<2x8x24xf32>
    %cst_120 = arith.constant dense<0.000000e+00> : vector<2x8xf32>
    %351 = vector.multi_reduction <add>, %350, %cst_120 [2] : vector<2x8x24xf32> to vector<2x8xf32>
    %352 = vector.shape_cast %351 : vector<2x8xf32> to vector<2x8x1xf32>
    %353 = tpu.reciprocal %352 {approx = true} : vector<2x8x1xf32> -> vector<2x8x1xf32>
    %354 = vector.broadcast %353 : vector<2x8x1xf32> to vector<2x8x24xf32>
    %355 = arith.mulf %350, %354 : vector<2x8x24xf32>
    %356 = arith.truncf %355 : vector<2x8x24xf32> to vector<2x8x24xbf16>
    %357 = vector.extract_strided_slice %339 {offsets = [0, 0, 0], sizes = [2, 24, 32], strides = [1, 1, 1]} : vector<2x24x128xbf16> to vector<2x24x32xbf16>
    "tpu.trace_start"() <{level = 10 : i32, message = "bqk,bkd->bqd"}> : () -> ()
    %cst_121 = arith.constant dense<0.000000e+00> : vector<2x8x32xf32>
    %358 = tpu.matmul %356, %357, %cst_121 {dimension_numbers = #tpu.dot_dimension_numbers<[2], [1], [1], [2], [0, 0, 0, 1, 1, 2], [0], [0]>} : vector<2x8x24xbf16>, vector<2x24x32xbf16>, vector<2x8x32xf32> -> vector<2x8x32xf32>
    "tpu.trace_stop"() : () -> ()
    %359 = vector.shape_cast %358 : vector<2x8x32xf32> to vector<16x32xf32>
    %360 = arith.truncf %359 : vector<16x32xf32> to vector<16x32xbf16>
    %361 = vector.extract_strided_slice %341 {offsets = [0, 0], sizes = [32, 128], strides = [1, 1]} : vector<128x128xbf16> to vector<32x128xbf16>
    %cst_122 = arith.constant dense<0.000000e+00> : vector<16x128xf32>
    %362 = tpu.matmul %360, %361, %cst_122 {dimension_numbers = #tpu.dot_dimension_numbers<[1], [0], [0], [1], [0, 0, 1, 1], [], []>} : vector<16x32xbf16>, vector<32x128xbf16>, vector<16x128xf32> -> vector<16x128xf32>
    %363 = vector.extract_strided_slice %335 {offsets = [0, 0, 32], sizes = [2, 8, 32], strides = [1, 1, 1]} : vector<2x8x128xbf16> to vector<2x8x32xbf16>
    %364 = vector.extract_strided_slice %337 {offsets = [0, 0, 32], sizes = [2, 24, 32], strides = [1, 1, 1]} : vector<2x24x128xbf16> to vector<2x24x32xbf16>
    "tpu.trace_start"() <{level = 10 : i32, message = "bqd,bkd->bqk"}> : () -> ()
    %cst_123 = arith.constant dense<0.000000e+00> : vector<2x8x24xf32>
    %365 = tpu.matmul %363, %364, %cst_123 {dimension_numbers = #tpu.dot_dimension_numbers<[2], [2], [1], [1], [0, 0, 0, 1, 1, 1], [0], [0]>} : vector<2x8x32xbf16>, vector<2x24x32xbf16>, vector<2x8x24xf32> -> vector<2x8x24xf32>
    "tpu.trace_stop"() : () -> ()
    %366 = arith.addf %365, %331 : vector<2x8x24xf32>
    %cst_124 = arith.constant dense<0xFF800000> : vector<2x8xf32>
    %367 = vector.multi_reduction <maximumf>, %366, %cst_124 [2] : vector<2x8x24xf32> to vector<2x8xf32>
    %368 = vector.shape_cast %367 : vector<2x8xf32> to vector<2x8x1xf32>
    %369 = vector.broadcast %368 : vector<2x8x1xf32> to vector<2x8x24xf32>
    %370 = arith.subf %366, %369 : vector<2x8x24xf32>
    %371 = math.exp %370 : vector<2x8x24xf32>
    %cst_125 = arith.constant dense<0.000000e+00> : vector<2x8xf32>
    %372 = vector.multi_reduction <add>, %371, %cst_125 [2] : vector<2x8x24xf32> to vector<2x8xf32>
    %373 = vector.shape_cast %372 : vector<2x8xf32> to vector<2x8x1xf32>
    %374 = tpu.reciprocal %373 {approx = true} : vector<2x8x1xf32> -> vector<2x8x1xf32>
    %375 = vector.broadcast %374 : vector<2x8x1xf32> to vector<2x8x24xf32>
    %376 = arith.mulf %371, %375 : vector<2x8x24xf32>
    %377 = arith.truncf %376 : vector<2x8x24xf32> to vector<2x8x24xbf16>
    %378 = vector.extract_strided_slice %339 {offsets = [0, 0, 32], sizes = [2, 24, 32], strides = [1, 1, 1]} : vector<2x24x128xbf16> to vector<2x24x32xbf16>
    "tpu.trace_start"() <{level = 10 : i32, message = "bqk,bkd->bqd"}> : () -> ()
    %cst_126 = arith.constant dense<0.000000e+00> : vector<2x8x32xf32>
    %379 = tpu.matmul %377, %378, %cst_126 {dimension_numbers = #tpu.dot_dimension_numbers<[2], [1], [1], [2], [0, 0, 0, 1, 1, 2], [0], [0]>} : vector<2x8x24xbf16>, vector<2x24x32xbf16>, vector<2x8x32xf32> -> vector<2x8x32xf32>
    "tpu.trace_stop"() : () -> ()
    %380 = vector.shape_cast %379 : vector<2x8x32xf32> to vector<16x32xf32>
    %381 = arith.truncf %380 : vector<16x32xf32> to vector<16x32xbf16>
    %382 = vector.extract_strided_slice %341 {offsets = [32, 0], sizes = [32, 128], strides = [1, 1]} : vector<128x128xbf16> to vector<32x128xbf16>
    %cst_127 = arith.constant dense<0.000000e+00> : vector<16x128xf32>
    %383 = tpu.matmul %381, %382, %cst_127 {dimension_numbers = #tpu.dot_dimension_numbers<[1], [0], [0], [1], [0, 0, 1, 1], [], []>} : vector<16x32xbf16>, vector<32x128xbf16>, vector<16x128xf32> -> vector<16x128xf32>
    %384 = arith.addf %362, %383 : vector<16x128xf32>
    %385 = vector.extract_strided_slice %335 {offsets = [0, 0, 64], sizes = [2, 8, 32], strides = [1, 1, 1]} : vector<2x8x128xbf16> to vector<2x8x32xbf16>
    %386 = vector.extract_strided_slice %337 {offsets = [0, 0, 64], sizes = [2, 24, 32], strides = [1, 1, 1]} : vector<2x24x128xbf16> to vector<2x24x32xbf16>
    "tpu.trace_start"() <{level = 10 : i32, message = "bqd,bkd->bqk"}> : () -> ()
    %cst_128 = arith.constant dense<0.000000e+00> : vector<2x8x24xf32>
    %387 = tpu.matmul %385, %386, %cst_128 {dimension_numbers = #tpu.dot_dimension_numbers<[2], [2], [1], [1], [0, 0, 0, 1, 1, 1], [0], [0]>} : vector<2x8x32xbf16>, vector<2x24x32xbf16>, vector<2x8x24xf32> -> vector<2x8x24xf32>
    "tpu.trace_stop"() : () -> ()
    %388 = arith.addf %387, %331 : vector<2x8x24xf32>
    %cst_129 = arith.constant dense<0xFF800000> : vector<2x8xf32>
    %389 = vector.multi_reduction <maximumf>, %388, %cst_129 [2] : vector<2x8x24xf32> to vector<2x8xf32>
    %390 = vector.shape_cast %389 : vector<2x8xf32> to vector<2x8x1xf32>
    %391 = vector.broadcast %390 : vector<2x8x1xf32> to vector<2x8x24xf32>
    %392 = arith.subf %388, %391 : vector<2x8x24xf32>
    %393 = math.exp %392 : vector<2x8x24xf32>
    %cst_130 = arith.constant dense<0.000000e+00> : vector<2x8xf32>
    %394 = vector.multi_reduction <add>, %393, %cst_130 [2] : vector<2x8x24xf32> to vector<2x8xf32>
    %395 = vector.shape_cast %394 : vector<2x8xf32> to vector<2x8x1xf32>
    %396 = tpu.reciprocal %395 {approx = true} : vector<2x8x1xf32> -> vector<2x8x1xf32>
    %397 = vector.broadcast %396 : vector<2x8x1xf32> to vector<2x8x24xf32>
    %398 = arith.mulf %393, %397 : vector<2x8x24xf32>
    %399 = arith.truncf %398 : vector<2x8x24xf32> to vector<2x8x24xbf16>
    %400 = vector.extract_strided_slice %339 {offsets = [0, 0, 64], sizes = [2, 24, 32], strides = [1, 1, 1]} : vector<2x24x128xbf16> to vector<2x24x32xbf16>
    "tpu.trace_start"() <{level = 10 : i32, message = "bqk,bkd->bqd"}> : () -> ()
    %cst_131 = arith.constant dense<0.000000e+00> : vector<2x8x32xf32>
    %401 = tpu.matmul %399, %400, %cst_131 {dimension_numbers = #tpu.dot_dimension_numbers<[2], [1], [1], [2], [0, 0, 0, 1, 1, 2], [0], [0]>} : vector<2x8x24xbf16>, vector<2x24x32xbf16>, vector<2x8x32xf32> -> vector<2x8x32xf32>
    "tpu.trace_stop"() : () -> ()
    %402 = vector.shape_cast %401 : vector<2x8x32xf32> to vector<16x32xf32>
    %403 = arith.truncf %402 : vector<16x32xf32> to vector<16x32xbf16>
    %404 = vector.extract_strided_slice %341 {offsets = [64, 0], sizes = [32, 128], strides = [1, 1]} : vector<128x128xbf16> to vector<32x128xbf16>
    %cst_132 = arith.constant dense<0.000000e+00> : vector<16x128xf32>
    %405 = tpu.matmul %403, %404, %cst_132 {dimension_numbers = #tpu.dot_dimension_numbers<[1], [0], [0], [1], [0, 0, 1, 1], [], []>} : vector<16x32xbf16>, vector<32x128xbf16>, vector<16x128xf32> -> vector<16x128xf32>
    %406 = arith.addf %384, %405 : vector<16x128xf32>
    %407 = vector.extract_strided_slice %335 {offsets = [0, 0, 96], sizes = [2, 8, 32], strides = [1, 1, 1]} : vector<2x8x128xbf16> to vector<2x8x32xbf16>
    %408 = vector.extract_strided_slice %337 {offsets = [0, 0, 96], sizes = [2, 24, 32], strides = [1, 1, 1]} : vector<2x24x128xbf16> to vector<2x24x32xbf16>
    "tpu.trace_start"() <{level = 10 : i32, message = "bqd,bkd->bqk"}> : () -> ()
    %cst_133 = arith.constant dense<0.000000e+00> : vector<2x8x24xf32>
    %409 = tpu.matmul %407, %408, %cst_133 {dimension_numbers = #tpu.dot_dimension_numbers<[2], [2], [1], [1], [0, 0, 0, 1, 1, 1], [0], [0]>} : vector<2x8x32xbf16>, vector<2x24x32xbf16>, vector<2x8x24xf32> -> vector<2x8x24xf32>
    "tpu.trace_stop"() : () -> ()
    %410 = arith.addf %409, %331 : vector<2x8x24xf32>
    %cst_134 = arith.constant dense<0xFF800000> : vector<2x8xf32>
    %411 = vector.multi_reduction <maximumf>, %410, %cst_134 [2] : vector<2x8x24xf32> to vector<2x8xf32>
    %412 = vector.shape_cast %411 : vector<2x8xf32> to vector<2x8x1xf32>
    %413 = vector.broadcast %412 : vector<2x8x1xf32> to vector<2x8x24xf32>
    %414 = arith.subf %410, %413 : vector<2x8x24xf32>
    %415 = math.exp %414 : vector<2x8x24xf32>
    %cst_135 = arith.constant dense<0.000000e+00> : vector<2x8xf32>
    %416 = vector.multi_reduction <add>, %415, %cst_135 [2] : vector<2x8x24xf32> to vector<2x8xf32>
    %417 = vector.shape_cast %416 : vector<2x8xf32> to vector<2x8x1xf32>
    %418 = tpu.reciprocal %417 {approx = true} : vector<2x8x1xf32> -> vector<2x8x1xf32>
    %419 = vector.broadcast %418 : vector<2x8x1xf32> to vector<2x8x24xf32>
    %420 = arith.mulf %415, %419 : vector<2x8x24xf32>
    %421 = arith.truncf %420 : vector<2x8x24xf32> to vector<2x8x24xbf16>
    %422 = vector.extract_strided_slice %339 {offsets = [0, 0, 96], sizes = [2, 24, 32], strides = [1, 1, 1]} : vector<2x24x128xbf16> to vector<2x24x32xbf16>
    "tpu.trace_start"() <{level = 10 : i32, message = "bqk,bkd->bqd"}> : () -> ()
    %cst_136 = arith.constant dense<0.000000e+00> : vector<2x8x32xf32>
    %423 = tpu.matmul %421, %422, %cst_136 {dimension_numbers = #tpu.dot_dimension_numbers<[2], [1], [1], [2], [0, 0, 0, 1, 1, 2], [0], [0]>} : vector<2x8x24xbf16>, vector<2x24x32xbf16>, vector<2x8x32xf32> -> vector<2x8x32xf32>
    "tpu.trace_stop"() : () -> ()
    %424 = vector.shape_cast %423 : vector<2x8x32xf32> to vector<16x32xf32>
    %425 = arith.truncf %424 : vector<16x32xf32> to vector<16x32xbf16>
    %426 = vector.extract_strided_slice %341 {offsets = [96, 0], sizes = [32, 128], strides = [1, 1]} : vector<128x128xbf16> to vector<32x128xbf16>
    %cst_137 = arith.constant dense<0.000000e+00> : vector<16x128xf32>
    %427 = tpu.matmul %425, %426, %cst_137 {dimension_numbers = #tpu.dot_dimension_numbers<[1], [0], [0], [1], [0, 0, 1, 1], [], []>} : vector<16x32xbf16>, vector<32x128xbf16>, vector<16x128xf32> -> vector<16x128xf32>
    %428 = arith.addf %406, %427 : vector<16x128xf32>
    %c0_138 = arith.constant 0 : index
    %c0_139 = arith.constant 0 : index
    %c1408_140 = arith.constant 1408 : index
    %429 = vector.load %arg9[%c0_138, %c0_139, %c1408_140] : memref<1x1x1920xf32, #tpu.memory_space<vmem>>, vector<1x1x128xf32>
    %430 = vector.shape_cast %429 : vector<1x1x128xf32> to vector<1x128xf32>
    %431 = vector.broadcast %430 : vector<1x128xf32> to vector<16x128xf32>
    %432 = arith.addf %428, %431 : vector<16x128xf32>
    %433 = arith.addf %432, %288 : vector<16x128xf32>
    %434 = vector.extract_strided_slice %4 {offsets = [6, 0], sizes = [1, 128], strides = [1, 1]} : vector<8x128xf32> to vector<1x128xf32>
    %435 = vector.extract_strided_slice %4 {offsets = [7, 0], sizes = [1, 128], strides = [1, 1]} : vector<8x128xf32> to vector<1x128xf32>
    %cst_141 = arith.constant dense<0.000000e+00> : vector<16xf32>
    %436 = vector.multi_reduction <add>, %433, %cst_141 [1] : vector<16x128xf32> to vector<16xf32>
    %437 = vector.shape_cast %436 : vector<16xf32> to vector<16x1xf32>
    %cst_142 = arith.constant 1.280000e+02 : f32
    %438 = vector.broadcast %cst_142 : f32 to vector<16x1xf32>
    %439 = arith.divf %437, %438 : vector<16x1xf32>
    %440 = vector.broadcast %439 : vector<16x1xf32> to vector<16x128xf32>
    %441 = arith.subf %433, %440 : vector<16x128xf32>
    %442 = arith.mulf %441, %441 : vector<16x128xf32>
    %cst_143 = arith.constant dense<0.000000e+00> : vector<16xf32>
    %443 = vector.multi_reduction <add>, %442, %cst_143 [1] : vector<16x128xf32> to vector<16xf32>
    %444 = vector.shape_cast %443 : vector<16xf32> to vector<16x1xf32>
    %cst_144 = arith.constant 1.280000e+02 : f32
    %445 = vector.broadcast %cst_144 : f32 to vector<16x1xf32>
    %446 = arith.divf %444, %445 : vector<16x1xf32>
    %447 = vector.broadcast %439 : vector<16x1xf32> to vector<16x128xf32>
    %448 = arith.subf %433, %447 : vector<16x128xf32>
    %cst_145 = arith.constant 9.99999997E-7 : f32
    %449 = vector.broadcast %cst_145 : f32 to vector<16x1xf32>
    %450 = arith.addf %446, %449 : vector<16x1xf32>
    %451 = math.rsqrt %450 : vector<16x1xf32>
    %452 = vector.broadcast %451 : vector<16x1xf32> to vector<16x128xf32>
    %453 = arith.mulf %448, %452 : vector<16x128xf32>
    %454 = vector.broadcast %434 : vector<1x128xf32> to vector<16x128xf32>
    %455 = arith.mulf %453, %454 : vector<16x128xf32>
    %456 = vector.broadcast %435 : vector<1x128xf32> to vector<16x128xf32>
    %457 = arith.addf %455, %456 : vector<16x128xf32>
    %458 = arith.truncf %457 : vector<16x128xf32> to vector<16x128xbf16>
    %c0_146 = arith.constant 0 : index
    %c0_147 = arith.constant 0 : index
    %c1536 = arith.constant 1536 : index
    %459 = vector.load %arg7[%c0_146, %c0_147, %c1536] : memref<1x128x1792xbf16, #tpu.memory_space<vmem>>, vector<1x128x256xbf16>
    %460 = vector.shape_cast %459 : vector<1x128x256xbf16> to vector<128x256xbf16>
    %cst_148 = arith.constant dense<0.000000e+00> : vector<16x256xf32>
    %461 = tpu.matmul %458, %460, %cst_148 {dimension_numbers = #tpu.dot_dimension_numbers<[1], [0], [0], [1], [0, 0, 1, 1], [], []>} : vector<16x128xbf16>, vector<128x256xbf16>, vector<16x256xf32> -> vector<16x256xf32>
    %c0_149 = arith.constant 0 : index
    %c0_150 = arith.constant 0 : index
    %c1536_151 = arith.constant 1536 : index
    %462 = vector.load %arg9[%c0_149, %c0_150, %c1536_151] : memref<1x1x1920xf32, #tpu.memory_space<vmem>>, vector<1x1x256xf32>
    %463 = vector.shape_cast %462 : vector<1x1x256xf32> to vector<1x256xf32>
    %464 = vector.broadcast %463 : vector<1x256xf32> to vector<16x256xf32>
    %465 = arith.addf %461, %464 : vector<16x256xf32>
    %cst_152 = arith.constant 0.000000e+00 : f32
    %466 = vector.broadcast %cst_152 : f32 to vector<16x256xf32>
    %467 = arith.maximumf %465, %466 : vector<16x256xf32>
    %468 = arith.truncf %467 : vector<16x256xf32> to vector<16x256xbf16>
    %c0_153 = arith.constant 0 : index
    %c0_154 = arith.constant 0 : index
    %c0_155 = arith.constant 0 : index
    %469 = vector.load %arg8[%c0_153, %c0_154, %c0_155] : memref<1x256x128xbf16, #tpu.memory_space<vmem>>, vector<1x256x128xbf16>
    %470 = vector.shape_cast %469 : vector<1x256x128xbf16> to vector<256x128xbf16>
    %cst_156 = arith.constant dense<0.000000e+00> : vector<16x128xf32>
    %471 = tpu.matmul %468, %470, %cst_156 {dimension_numbers = #tpu.dot_dimension_numbers<[1], [0], [0], [1], [0, 0, 1, 1], [], []>} : vector<16x256xbf16>, vector<256x128xbf16>, vector<16x128xf32> -> vector<16x128xf32>
    %c0_157 = arith.constant 0 : index
    %c0_158 = arith.constant 0 : index
    %c1792 = arith.constant 1792 : index
    %472 = vector.load %arg9[%c0_157, %c0_158, %c1792] : memref<1x1x1920xf32, #tpu.memory_space<vmem>>, vector<1x1x128xf32>
    %473 = vector.shape_cast %472 : vector<1x1x128xf32> to vector<1x128xf32>
    %474 = vector.broadcast %473 : vector<1x128xf32> to vector<16x128xf32>
    %475 = arith.addf %471, %474 : vector<16x128xf32>
    %476 = arith.addf %475, %433 : vector<16x128xf32>
    %c0_159 = arith.constant 0 : index
    %c0_160 = arith.constant 0 : index
    %477 = vector.load %arg12[%c0_159, %c0_160] : memref<16x128xf32, #tpu.memory_space<vmem>>, vector<16x128xf32>
    tpu.vector_store %arg12[%c0_159, %c0_160], %476 {strides = array<i32>} : memref<16x128xf32, #tpu.memory_space<vmem>>, vector<16x128xf32>,
    %c1_i32 = arith.constant 1 : i32
    %478 = arith.cmpi eq, %arg0, %c1_i32 : i32
    %479 = arith.extui %478 : i1 to i32
    %c0_i32_161 = arith.constant 0 : i32
    %480 = arith.cmpi ne, %479, %c0_i32_161 : i32
    scf.if %480 {
      %c0_162 = arith.constant 0 : index
      %c0_163 = arith.constant 0 : index
      %481 = vector.load %arg11[%c0_162, %c0_163] : memref<2x128xf32, #tpu.memory_space<vmem>>, vector<1x128xf32>
      %c1 = arith.constant 1 : index
      %c0_164 = arith.constant 0 : index
      %482 = vector.load %arg11[%c1, %c0_164] : memref<2x128xf32, #tpu.memory_space<vmem>>, vector<1x128xf32>
      %cst_165 = arith.constant dense<0.000000e+00> : vector<16xf32>
      %483 = vector.multi_reduction <add>, %476, %cst_165 [1] : vector<16x128xf32> to vector<16xf32>
      %484 = vector.shape_cast %483 : vector<16xf32> to vector<16x1xf32>
      %cst_166 = arith.constant 1.280000e+02 : f32
      %485 = vector.broadcast %cst_166 : f32 to vector<16x1xf32>
      %486 = arith.divf %484, %485 : vector<16x1xf32>
      %487 = vector.broadcast %486 : vector<16x1xf32> to vector<16x128xf32>
      %488 = arith.subf %476, %487 : vector<16x128xf32>
      %489 = arith.mulf %488, %488 : vector<16x128xf32>
      %cst_167 = arith.constant dense<0.000000e+00> : vector<16xf32>
      %490 = vector.multi_reduction <add>, %489, %cst_167 [1] : vector<16x128xf32> to vector<16xf32>
      %491 = vector.shape_cast %490 : vector<16xf32> to vector<16x1xf32>
      %cst_168 = arith.constant 1.280000e+02 : f32
      %492 = vector.broadcast %cst_168 : f32 to vector<16x1xf32>
      %493 = arith.divf %491, %492 : vector<16x1xf32>
      %494 = vector.broadcast %486 : vector<16x1xf32> to vector<16x128xf32>
      %495 = arith.subf %476, %494 : vector<16x128xf32>
      %cst_169 = arith.constant 9.99999997E-7 : f32
      %496 = vector.broadcast %cst_169 : f32 to vector<16x1xf32>
      %497 = arith.addf %493, %496 : vector<16x1xf32>
      %498 = math.rsqrt %497 : vector<16x1xf32>
      %499 = vector.broadcast %498 : vector<16x1xf32> to vector<16x128xf32>
      %500 = arith.mulf %495, %499 : vector<16x128xf32>
      %501 = vector.broadcast %481 : vector<1x128xf32> to vector<16x128xf32>
      %502 = arith.mulf %500, %501 : vector<16x128xf32>
      %503 = vector.broadcast %482 : vector<1x128xf32> to vector<16x128xf32>
      %504 = arith.addf %502, %503 : vector<16x128xf32>
      %c0_170 = arith.constant 0 : index
      %c0_171 = arith.constant 0 : index
      %505 = vector.load %arg12[%c0_170, %c0_171] : memref<16x128xf32, #tpu.memory_space<vmem>>, vector<16x128xf32>
      tpu.vector_store %arg12[%c0_170, %c0_171], %504 {strides = array<i32>} : memref<16x128xf32, #tpu.memory_space<vmem>>, vector<16x128xf32>,
    } else {
    }
    return
  }
  func.func @transform_0(%arg0: i32) -> (i32, i32) {
    %c0_i32 = arith.constant 0 : i32
    %c0_i32_0 = arith.constant 0 : i32
    %c0_i32_1 = arith.constant 0 : i32
    return %c0_i32, %c0_i32_0 : i32, i32
  }
  func.func @transform_1(%arg0: i32) -> (i32, i32) {
    %c0_i32 = arith.constant 0 : i32
    %c0_i32_0 = arith.constant 0 : i32
    %c0_i32_1 = arith.constant 0 : i32
    return %c0_i32, %c0_i32_0 : i32, i32
  }
  func.func @transform_2(%arg0: i32) -> (i32, i32) {
    %c0_i32 = arith.constant 0 : i32
    %c0_i32_0 = arith.constant 0 : i32
    %c0_i32_1 = arith.constant 0 : i32
    return %c0_i32, %c0_i32_0 : i32, i32
  }
  func.func @transform_3(%arg0: i32) -> (i32, i32, i32) {
    %c0_i32 = arith.constant 0 : i32
    %c0_i32_0 = arith.constant 0 : i32
    %c0_i32_1 = arith.constant 0 : i32
    %c0_i32_2 = arith.constant 0 : i32
    return %c0_i32, %c0_i32_0, %c0_i32_1 : i32, i32, i32
  }
  func.func @transform_4(%arg0: i32) -> (i32, i32, i32) {
    %c0_i32 = arith.constant 0 : i32
    %c0_i32_0 = arith.constant 0 : i32
    %c0_i32_1 = arith.constant 0 : i32
    %c0_i32_2 = arith.constant 0 : i32
    return %c0_i32, %c0_i32_0, %c0_i32_1 : i32, i32, i32
  }
  func.func @transform_5(%arg0: i32) -> (i32, i32, i32) {
    %c0_i32 = arith.constant 0 : i32
    %c0_i32_0 = arith.constant 0 : i32
    %c0_i32_1 = arith.constant 0 : i32
    %c0_i32_2 = arith.constant 0 : i32
    return %c0_i32, %c0_i32_0, %c0_i32_1 : i32, i32, i32
  }
  func.func @transform_6(%arg0: i32) -> (i32, i32, i32) {
    %c0_i32 = arith.constant 0 : i32
    %c0_i32_0 = arith.constant 0 : i32
    %c0_i32_1 = arith.constant 0 : i32
    return %arg0, %c0_i32, %c0_i32_0 : i32, i32, i32
  }
  func.func @transform_7(%arg0: i32) -> (i32, i32, i32) {
    %c0_i32 = arith.constant 0 : i32
    %c0_i32_0 = arith.constant 0 : i32
    %c0_i32_1 = arith.constant 0 : i32
    return %arg0, %c0_i32, %c0_i32_0 : i32, i32, i32
  }
  func.func @transform_8(%arg0: i32) -> (i32, i32, i32) {
    %c0_i32 = arith.constant 0 : i32
    %c0_i32_0 = arith.constant 0 : i32
    %c0_i32_1 = arith.constant 0 : i32
    return %arg0, %c0_i32, %c0_i32_0 : i32, i32, i32
  }
  func.func @transform_9(%arg0: i32) -> (i32, i32, i32) {
    %c0_i32 = arith.constant 0 : i32
    %c0_i32_0 = arith.constant 0 : i32
    %c0_i32_1 = arith.constant 0 : i32
    return %arg0, %c0_i32, %c0_i32_0 : i32, i32, i32
  }
  func.func @transform_10(%arg0: i32) -> (i32, i32) {
    %c0_i32 = arith.constant 0 : i32
    %c0_i32_0 = arith.constant 0 : i32
    %c0_i32_1 = arith.constant 0 : i32
    return %c0_i32, %c0_i32_0 : i32, i32
  }
  func.func @transform_11(%arg0: i32) -> (i32, i32) {
    %c0_i32 = arith.constant 0 : i32
    %c0_i32_0 = arith.constant 0 : i32
    %c0_i32_1 = arith.constant 0 : i32
    return %c0_i32, %c0_i32_0 : i32, i32
  }
}

</mosaic_0001>

<llo_original>
// kernel: _lambda_.1
$region0: #{_lambda_.1}
  #allocation0 [shape = 'u32[]', space=smem, size = 0x4, offset = 0x4, fixed_abs, tag = 'smem constant byte address 0x4 - core index']
  #allocation1 [shape = 'u32[144,128]{1,0:T(1,128)}', space=vmem, size = 0x12000, scoped, tag = 'internal scratch']
  %s0 = inlined_call_operand.vmem [shape: f32[16,128], index: 0, kind: input, shape index: {}]
  %s1 = inlined_call_operand.vmem [shape: bf16[16,128], index: 1, kind: input, shape index: {}]
  %s2 = inlined_call_operand.vmem [shape: bf16[48,128], index: 2, kind: input, shape index: {}]
  %s3 = inlined_call_operand.vmem [shape: f32[2,8,8], index: 3, kind: input, shape index: {}]
  %s4 = inlined_call_operand.vmem [shape: f32[2,8,8], index: 4, kind: input, shape index: {}]
  %s5 = inlined_call_operand.vmem [shape: f32[2,8,24], index: 5, kind: input, shape index: {}]
  %s6 = inlined_call_operand.hbm [shape: bf16[2,128,1792], index: 6, kind: input, shape index: {}]
  %s7 = inlined_call_operand.vmem [shape: bf16[2,256,128], index: 7, kind: input, shape index: {}]
  %s8 = inlined_call_operand.vmem [shape: f32[2,1,1920], index: 8, kind: input, shape index: {}]
  %s9 = inlined_call_operand.vmem [shape: f32[2,8,128], index: 9, kind: input, shape index: {}]
  %s10 = inlined_call_operand.vmem [shape: f32[2,128], index: 10, kind: input, shape index: {}]
  %s11 = inlined_call_operand.hbm [shape: f32[16,128], index: 11, kind: output, shape index: {}]
  %s12 = sld [smem:[#allocation0]]
  $region89: #{_lambda_.1} parent=0
    _
  %s14 = ssub.s32 1, %s12
  %s15 = scalar_select 0, %s14, %s12
  $region1: #{_lambda_.1} parent=0
    #allocation2 [shape = 'u8[917504]{0}', space=vmem, size = 0xe0000, scoped, tag = 'input window, operand 6']
    #allocation3 [shape = 's32[2]{0}', space=sflag, size = 0x8, scoped, tag = 'scoped memory for _lambda_.1']
    #allocation4 [shape = 's32[2]{0}', space=sflag, size = 0x8, scoped, tag = 'scoped memory for _lambda_.1']
    #allocation5 [shape = 'u8[8192]{0}', space=vmem, size = 0x2000, scoped, tag = 'output window, operand 0, single buffered']
    %16 = vsyncpa [#allocation3], 0
    %s17 = scalar_lea.sflag [#allocation3], 1
    %18 = vsyncpa %s17, 0
    %19 = vsyncpa [#allocation4], 0
    loop: start=0, step=1, limit=4
    $region2: #{_lambda_.1} parent=1 // loop_pre_header
      _
    $region3: #{_lambda_.1} parent=1 // loop_header
      %s21 = sphi 0, %s25
      %p22 = scmp.ge.s32.totalorder %s21, 4
      %s29 = sphi 0, %s29
      %s31 = sphi 0, %s29
      %s32 = sphi 0, %s31
      %s46 = sphi 0, %s32
      %s50 = sphi 0, %s50
      %s52 = sphi 0, %s50
      %s53 = sphi 0, %s52
      %s67 = sphi 0, %s53
      %s71 = sphi 0, %s71
      %s73 = sphi 0, %s71
      %s74 = sphi 0, %s73
      %s88 = sphi 0, %s74
      %s92 = sphi 0, %s92
      %s94 = sphi 0, %s92
      %s95 = sphi 0, %s94
      %s109 = sphi 0, %s95
      %s113 = sphi 0, %s113
      %s115 = sphi 0, %s113
      %s116 = sphi 0, %s115
      %s130 = sphi 0, %s116
      %s134 = sphi 0, %s134
      %s136 = sphi 0, %s134
      %s137 = sphi 0, %s136
      %s151 = sphi 0, %s137
      %s157 = sphi 0, %s159
      %s160 = sphi 0, %s157
      %s161 = sphi 0, %s160
      %s177 = sphi 0, %s161
      %s183 = sphi 0, %s185
      %s186 = sphi 0, %s183
      %s187 = sphi 0, %s186
      %s203 = sphi 0, %s187
      %s209 = sphi 0, %s211
      %s212 = sphi 0, %s209
      %s213 = sphi 0, %s212
      %s229 = sphi 0, %s213
      %s235 = sphi 0, %s237
      %s238 = sphi 0, %s235
      %s239 = sphi 0, %s238
      %s255 = sphi 0, %s239
      %s259 = sphi 0, %s259
      %s261 = sphi 0, %s259
      %s262 = sphi 0, %s261
      %s276 = sphi 0, %s262
      %s280 = sphi 0, %s280
      %s282 = sphi 0, %s280
      %s283 = sphi 0, %s282
      %s297 = sphi 0, %s283
    $region4: #{_lambda_.1} parent=1 // loop_header_branch
      %24 = sbr.rel (%p22) target = $region8
    $region5: #{_lambda_.1} parent=1 // loop_body
      %s26 = ssub.s32 %s21, 1
      %s27 = ssub.s32 %s21, 2
      %s28 = sadd.s32 %s21, 1
      %s30 = sadd.s32 %s29, 1
      %p33 = scmp.eq.s32.totalorder %s21, 1
      %p34 = scmp.ne.s32.totalorder %s29, %s31
      %p35 = scmp.eq.s32.totalorder %s21, 0
      %p36 = por %p34, %p35
      %p37 = scmp.ne.s32.totalorder %s29, %s31
      %p38 = scmp.eq.s32.totalorder %s26, 1
      %p39 = por %p37, %p38
      %p40 = scmp.ne.s32.totalorder %s31, %s32
      %p41 = scmp.eq.s32.totalorder %s26, 0
      %p42 = por %p40, %p41
      %p43 = scmp.ne.s32.totalorder %s31, %s32
      %p44 = scmp.eq.s32.totalorder %s27, 1
      %p45 = por %p43, %p44
      %p47 = scmp.ne.s32.totalorder %s32, %s46
      %p48 = scmp.eq.s32.totalorder %s27, 0
      %p49 = por %p47, %p48
      %s51 = sadd.s32 %s50, 1
      %p54 = scmp.eq.s32.totalorder %s21, 1
      %p55 = scmp.ne.s32.totalorder %s50, %s52
      %p56 = scmp.eq.s32.totalorder %s21, 0
      %p57 = por %p55, %p56
      %p58 = scmp.ne.s32.totalorder %s50, %s52
      %p59 = scmp.eq.s32.totalorder %s26, 1
      %p60 = por %p58, %p59
      %p61 = scmp.ne.s32.totalorder %s52, %s53
      %p62 = scmp.eq.s32.totalorder %s26, 0
      %p63 = por %p61, %p62
      %p64 = scmp.ne.s32.totalorder %s52, %s53
      %p65 = scmp.eq.s32.totalorder %s27, 1
      %p66 = por %p64, %p65
      %p68 = scmp.ne.s32.totalorder %s53, %s67
      %p69 = scmp.eq.s32.totalorder %s27, 0
      %p70 = por %p68, %p69
      %s72 = sadd.s32 %s71, 1
      %p75 = scmp.eq.s32.totalorder %s21, 1
      %p76 = scmp.ne.s32.totalorder %s71, %s73
      %p77 = scmp.eq.s32.totalorder %s21, 0
      %p78 = por %p76, %p77
      %p79 = scmp.ne.s32.totalorder %s71, %s73
      %p80 = scmp.eq.s32.totalorder %s26, 1
      %p81 = por %p79, %p80
      %p82 = scmp.ne.s32.totalorder %s73, %s74
      %p83 = scmp.eq.s32.totalorder %s26, 0
      %p84 = por %p82, %p83
      %p85 = scmp.ne.s32.totalorder %s73, %s74
      %p86 = scmp.eq.s32.totalorder %s27, 1
      %p87 = por %p85, %p86
      %p89 = scmp.ne.s32.totalorder %s74, %s88
      %p90 = scmp.eq.s32.totalorder %s27, 0
      %p91 = por %p89, %p90
      %s93 = sadd.s32 %s92, 1
      %p96 = scmp.eq.s32.totalorder %s21, 1
      %p97 = scmp.ne.s32.totalorder %s92, %s94
      %p98 = scmp.eq.s32.totalorder %s21, 0
      %p99 = por %p97, %p98
      %p100 = scmp.ne.s32.totalorder %s92, %s94
      %p101 = scmp.eq.s32.totalorder %s26, 1
      %p102 = por %p100, %p101
      %p103 = scmp.ne.s32.totalorder %s94, %s95
      %p104 = scmp.eq.s32.totalorder %s26, 0
      %p105 = por %p103, %p104
      %p106 = scmp.ne.s32.totalorder %s94, %s95
      %p107 = scmp.eq.s32.totalorder %s27, 1
      %p108 = por %p106, %p107
      %p110 = scmp.ne.s32.totalorder %s95, %s109
      %p111 = scmp.eq.s32.totalorder %s27, 0
      %p112 = por %p110, %p111
      %s114 = sadd.s32 %s113, 1
      %p117 = scmp.eq.s32.totalorder %s21, 1
      %p118 = scmp.ne.s32.totalorder %s113, %s115
      %p119 = scmp.eq.s32.totalorder %s21, 0
      %p120 = por %p118, %p119
      %p121 = scmp.ne.s32.totalorder %s113, %s115
      %p122 = scmp.eq.s32.totalorder %s26, 1
      %p123 = por %p121, %p122
      %p124 = scmp.ne.s32.totalorder %s115, %s116
      %p125 = scmp.eq.s32.totalorder %s26, 0
      %p126 = por %p124, %p125
      %p127 = scmp.ne.s32.totalorder %s115, %s116
      %p128 = scmp.eq.s32.totalorder %s27, 1
      %p129 = por %p127, %p128
      %p131 = scmp.ne.s32.totalorder %s116, %s130
      %p132 = scmp.eq.s32.totalorder %s27, 0
      %p133 = por %p131, %p132
      %s135 = sadd.s32 %s134, 1
      %p138 = scmp.eq.s32.totalorder %s21, 1
      %p139 = scmp.ne.s32.totalorder %s134, %s136
      %p140 = scmp.eq.s32.totalorder %s21, 0
      %p141 = por %p139, %p140
      %p142 = scmp.ne.s32.totalorder %s134, %s136
      %p143 = scmp.eq.s32.totalorder %s26, 1
      %p144 = por %p142, %p143
      %p145 = scmp.ne.s32.totalorder %s136, %s137
      %p146 = scmp.eq.s32.totalorder %s26, 0
      %p147 = por %p145, %p146
      %p148 = scmp.ne.s32.totalorder %s136, %s137
      %p149 = scmp.eq.s32.totalorder %s27, 1
      %p150 = por %p148, %p149
      %p152 = scmp.ne.s32.totalorder %s137, %s151
      %p153 = scmp.eq.s32.totalorder %s27, 0
      %p154 = por %p152, %p153
      %s155 = ssub.s32 %s21, %s28
      %p156 = scmp.eq.s32.totalorder %s155, 0
      %s158 = sadd.s32 %s157, 1
      %s159 = scalar_select %p156, %s157, %s158
      %p162 = pneg %p156
      %p163 = scmp.eq.s32.totalorder %s21, 1
      %p164 = por %p162, %p163
      %p165 = scmp.ne.s32.totalorder %s157, %s160
      %p166 = scmp.eq.s32.totalorder %s21, 0
      %p167 = por %p165, %p166
      %p168 = scmp.ne.s32.totalorder %s157, %s160
      %p169 = scmp.eq.s32.totalorder %s26, 1
      %p170 = por %p168, %p169
      %p171 = scmp.ne.s32.totalorder %s160, %s161
      %p172 = scmp.eq.s32.totalorder %s26, 0
      %p173 = por %p171, %p172
      %p174 = scmp.ne.s32.totalorder %s160, %s161
      %p175 = scmp.eq.s32.totalorder %s27, 1
      %p176 = por %p174, %p175
      %p178 = scmp.ne.s32.totalorder %s161, %s177
      %p179 = scmp.eq.s32.totalorder %s27, 0
      %p180 = por %p178, %p179
      %s181 = ssub.s32 %s21, %s28
      %p182 = scmp.eq.s32.totalorder %s181, 0
      %s184 = sadd.s32 %s183, 1
      %s185 = scalar_select %p182, %s183, %s184
      %p188 = pneg %p182
      %p189 = scmp.eq.s32.totalorder %s21, 1
      %p190 = por %p188, %p189
      %p191 = scmp.ne.s32.totalorder %s183, %s186
      %p192 = scmp.eq.s32.totalorder %s21, 0
      %p193 = por %p191, %p192
      %p194 = scmp.ne.s32.totalorder %s183, %s186
      %p195 = scmp.eq.s32.totalorder %s26, 1
      %p196 = por %p194, %p195
      %p197 = scmp.ne.s32.totalorder %s186, %s187
      %p198 = scmp.eq.s32.totalorder %s26, 0
      %p199 = por %p197, %p198
      %p200 = scmp.ne.s32.totalorder %s186, %s187
      %p201 = scmp.eq.s32.totalorder %s27, 1
      %p202 = por %p200, %p201
      %p204 = scmp.ne.s32.totalorder %s187, %s203
      %p205 = scmp.eq.s32.totalorder %s27, 0
      %p206 = por %p204, %p205
      %s207 = ssub.s32 %s21, %s28
      %p208 = scmp.eq.s32.totalorder %s207, 0
      %s210 = sadd.s32 %s209, 1
      %s211 = scalar_select %p208, %s209, %s210
      %p214 = pneg %p208
      %p215 = scmp.eq.s32.totalorder %s21, 1
      %p216 = por %p214, %p215
      %p217 = scmp.ne.s32.totalorder %s209, %s212
      %p218 = scmp.eq.s32.totalorder %s21, 0
      %p219 = por %p217, %p218
      %p220 = scmp.ne.s32.totalorder %s209, %s212
      %p221 = scmp.eq.s32.totalorder %s26, 1
      %p222 = por %p220, %p221
      %p223 = scmp.ne.s32.totalorder %s212, %s213
      %p224 = scmp.eq.s32.totalorder %s26, 0
      %p225 = por %p223, %p224
      %p226 = scmp.ne.s32.totalorder %s212, %s213
      %p227 = scmp.eq.s32.totalorder %s27, 1
      %p228 = por %p226, %p227
      %p230 = scmp.ne.s32.totalorder %s213, %s229
      %p231 = scmp.eq.s32.totalorder %s27, 0
      %p232 = por %p230, %p231
      %s233 = ssub.s32 %s21, %s28
      %p234 = scmp.eq.s32.totalorder %s233, 0
      %s236 = sadd.s32 %s235, 1
      %s237 = scalar_select %p234, %s235, %s236
      %p240 = pneg %p234
      %p241 = scmp.eq.s32.totalorder %s21, 1
      %p242 = por %p240, %p241
      %p243 = scmp.ne.s32.totalorder %s235, %s238
      %p244 = scmp.eq.s32.totalorder %s21, 0
      %p245 = por %p243, %p244
      %p246 = scmp.ne.s32.totalorder %s235, %s238
      %p247 = scmp.eq.s32.totalorder %s26, 1
      %p248 = por %p246, %p247
      %p249 = scmp.ne.s32.totalorder %s238, %s239
      %p250 = scmp.eq.s32.totalorder %s26, 0
      %p251 = por %p249, %p250
      %p252 = scmp.ne.s32.totalorder %s238, %s239
      %p253 = scmp.eq.s32.totalorder %s27, 1
      %p254 = por %p252, %p253
      %p256 = scmp.ne.s32.totalorder %s239, %s255
      %p257 = scmp.eq.s32.totalorder %s27, 0
      %p258 = por %p256, %p257
      %s260 = sadd.s32 %s259, 1
      %p263 = scmp.eq.s32.totalorder %s21, 1
      %p264 = scmp.ne.s32.totalorder %s259, %s261
      %p265 = scmp.eq.s32.totalorder %s21, 0
      %p266 = por %p264, %p265
      %p267 = scmp.ne.s32.totalorder %s259, %s261
      %p268 = scmp.eq.s32.totalorder %s26, 1
      %p269 = por %p267, %p268
      %p270 = scmp.ne.s32.totalorder %s261, %s262
      %p271 = scmp.eq.s32.totalorder %s26, 0
      %p272 = por %p270, %p271
      %p273 = scmp.ne.s32.totalorder %s261, %s262
      %p274 = scmp.eq.s32.totalorder %s27, 1
      %p275 = por %p273, %p274
      %p277 = scmp.ne.s32.totalorder %s262, %s276
      %p278 = scmp.eq.s32.totalorder %s27, 0
      %p279 = por %p277, %p278
      %s281 = sadd.s32 %s280, 1
      %p284 = scmp.eq.s32.totalorder %s21, 1
      %p285 = scmp.ne.s32.totalorder %s280, %s282
      %p286 = scmp.eq.s32.totalorder %s21, 0
      %p287 = por %p285, %p286
      %p288 = scmp.ne.s32.totalorder %s280, %s282
      %p289 = scmp.eq.s32.totalorder %s26, 1
      %p290 = por %p288, %p289
      %p291 = scmp.ne.s32.totalorder %s282, %s283
      %p292 = scmp.eq.s32.totalorder %s26, 0
      %p293 = por %p291, %p292
      %p294 = scmp.ne.s32.totalorder %s282, %s283
      %p295 = scmp.eq.s32.totalorder %s27, 1
      %p296 = por %p294, %p295
      %p298 = scmp.ne.s32.totalorder %s283, %s297
      %p299 = scmp.eq.s32.totalorder %s27, 0
      %p300 = por %p298, %p299
      %p301 = scmp.le.s32.totalorder 1, %s21
      %p302 = scmp.lt.s32.totalorder %s21, 3
      %p303 = pnand %p301, %p302
      %p304 = pneg %p303
      // Predicated region
      $region9: #{_lambda_.1} parent=5 // pred_check
        _
      $region10: #{_lambda_.1} parent=5 // pred_check_branch
        %306 = sbr.rel (%p303) target = $region12
      $region11: #{_lambda_.1} parent=5 // pred_region
        %s307 = ssub.s32 %s21, 1
        // Predicated region
        $region13: #{_lambda_.1} parent=11 // pred_check
          %p308 = pneg %p42
        $region14: #{_lambda_.1} parent=11 // pred_check_branch
          %310 = sbr.rel (%p308) target = $region16
        $region15: #{_lambda_.1} parent=11 // pred_region
          _
        $region16: #{_lambda_.1} parent=11 // pred_fallthru
          _
        // Predicated region
        $region17: #{_lambda_.1} parent=11 // pred_check
          %p311 = pneg %p63
        $region18: #{_lambda_.1} parent=11 // pred_check_branch
          %313 = sbr.rel (%p311) target = $region20
        $region19: #{_lambda_.1} parent=11 // pred_region
          _
        $region20: #{_lambda_.1} parent=11 // pred_fallthru
          _
        // Predicated region
        $region21: #{_lambda_.1} parent=11 // pred_check
          %p314 = pneg %p84
        $region22: #{_lambda_.1} parent=11 // pred_check_branch
          %316 = sbr.rel (%p314) target = $region24
        $region23: #{_lambda_.1} parent=11 // pred_region
          _
        $region24: #{_lambda_.1} parent=11 // pred_fallthru
          _
        // Predicated region
        $region25: #{_lambda_.1} parent=11 // pred_check
          %p317 = pneg %p105
        $region26: #{_lambda_.1} parent=11 // pred_check_branch
          %319 = sbr.rel (%p317) target = $region28
        $region27: #{_lambda_.1} parent=11 // pred_region
          _
        $region28: #{_lambda_.1} parent=11 // pred_fallthru
          _
        // Predicated region
        $region29: #{_lambda_.1} parent=11 // pred_check
          %p320 = pneg %p126
        $region30: #{_lambda_.1} parent=11 // pred_check_branch
          %322 = sbr.rel (%p320) target = $region32
        $region31: #{_lambda_.1} parent=11 // pred_region
          _
        $region32: #{_lambda_.1} parent=11 // pred_fallthru
          _
        // Predicated region
        $region33: #{_lambda_.1} parent=11 // pred_check
          %p323 = pneg %p147
        $region34: #{_lambda_.1} parent=11 // pred_check_branch
          %325 = sbr.rel (%p323) target = $region36
        $region35: #{_lambda_.1} parent=11 // pred_region
          _
        $region36: #{_lambda_.1} parent=11 // pred_fallthru
          _
        // Predicated region
        $region37: #{_lambda_.1} parent=11 // pred_check
          %p326 = pneg %p272
        $region38: #{_lambda_.1} parent=11 // pred_check_branch
          %328 = sbr.rel (%p326) target = $region40
        $region39: #{_lambda_.1} parent=11 // pred_region
          _
        $region40: #{_lambda_.1} parent=11 // pred_fallthru
          _
      $region12: #{_lambda_.1} parent=5 // pred_fallthru
        _
      %p329 = scmp.lt.s32.totalorder %s21, 2
      // Predicated region
      $region41: #{_lambda_.1} parent=5 // pred_check
        %p330 = pneg %p329
      $region42: #{_lambda_.1} parent=5 // pred_check_branch
        %332 = sbr.rel (%p330) target = $region44
      $region43: #{_lambda_.1} parent=5 // pred_region
        // Predicated region
        $region45: #{_lambda_.1} parent=43 // pred_check
          %p333 = pneg %p167
        $region46: #{_lambda_.1} parent=43 // pred_check_branch
          %335 = sbr.rel (%p333) target = $region48
        $region47: #{_lambda_.1} parent=43 // pred_region
          %s336 = sand.u32 %s157, 1
          %s337 = scalar_lea.sflag [#allocation3], %s336
          %s338 = sand.u32 %s157, 1
          %s339 = smul.addr %s338, 896
          %s340 = scalar_lea.vmem [#allocation2], %s339
          %s342 = ssub.s32 14336, 14336
          %343 = vsyncadd %s337, %s342
          %s344 = smul.addr %s21, 224
          %s345 = smul.addr %s344, 64
          %s346 = scalar_lea.hbm %s6, %s345
          %s347 = sshll.u32 %s340, 4
          %s348 = int_to_ptr.vmem [resolvable:$true] %s347
          %353 = dma.hbm_to_vmem [thread:$0]  %s346, 14336, %s348, %s337, 896, 896, 56
        $region48: #{_lambda_.1} parent=43 // pred_fallthru
          _
        // Predicated region
        $region49: #{_lambda_.1} parent=43 // pred_check
          %p354 = pneg %p193
        $region50: #{_lambda_.1} parent=43 // pred_check_branch
          %356 = sbr.rel (%p354) target = $region52
        $region51: #{_lambda_.1} parent=43 // pred_region
          %p357 = scmp.lt.s32.totalorder %s21, 1
          %s358 = scalar_select %p357, %s21, 1
          %s359 = smul.addr %s358, 32
          %s360 = smul.addr %s359, 4
          %s361 = scalar_lea.vmem %s7, %s360
        $region52: #{_lambda_.1} parent=43 // pred_fallthru
          _
        // Predicated region
        $region53: #{_lambda_.1} parent=43 // pred_check
          %p362 = pneg %p219
        $region54: #{_lambda_.1} parent=43 // pred_check_branch
          %364 = sbr.rel (%p362) target = $region56
        $region55: #{_lambda_.1} parent=43 // pred_region
          %p365 = scmp.lt.s32.totalorder %s21, 1
          %s366 = scalar_select %p365, %s21, 1
          %s367 = smul.addr %s366, 15
          %s368 = scalar_lea.vmem %s8, %s367
        $region56: #{_lambda_.1} parent=43 // pred_fallthru
          _
        // Predicated region
        $region57: #{_lambda_.1} parent=43 // pred_check
          %p369 = pneg %p245
        $region58: #{_lambda_.1} parent=43 // pred_check_branch
          %371 = sbr.rel (%p369) target = $region60
        $region59: #{_lambda_.1} parent=43 // pred_region
          %p372 = scmp.lt.s32.totalorder %s21, 1
          %s373 = scalar_select %p372, %s21, 1
          %s374 = smul.addr %s373, 8
          %s375 = scalar_lea.vmem %s9, %s374
        $region60: #{_lambda_.1} parent=43 // pred_fallthru
          _
      $region44: #{_lambda_.1} parent=5 // pred_fallthru
        _
      %p376 = scmp.le.s32.totalorder 1, %s21
      %p377 = scmp.lt.s32.totalorder %s21, 3
      %p378 = pnand %p376, %p377
      %p379 = pneg %p378
      // Predicated region
      $region61: #{_lambda_.1} parent=5 // pred_check
        _
      $region62: #{_lambda_.1} parent=5 // pred_check_branch
        %381 = sbr.rel (%p378) target = $region64
      $region63: #{_lambda_.1} parent=5 // pred_region
        %s382 = ssub.s32 %s21, 1
        %s383 = sand.u32 %s160, 1
        %s384 = scalar_lea.sflag [#allocation3], %s383
        %s385 = sand.u32 %s160, 1
        %s386 = smul.addr %s385, 896
        %s387 = scalar_lea.vmem [#allocation2], %s386
        // Predicated region
        $region65: #{_lambda_.1} parent=63 // pred_check
          %p388 = pneg %p173
        $region66: #{_lambda_.1} parent=63 // pred_check_branch
          %390 = sbr.rel (%p388) target = $region68
        $region67: #{_lambda_.1} parent=63 // pred_region
          %391 = dma.done %s384, 14336
        $region68: #{_lambda_.1} parent=63 // pred_fallthru
          _
        %p392 = pneg %p42
        %p393 = pneg %p39
        %p394 = pneg %p63
        %p395 = pneg %p60
        %p396 = pneg %p84
        %p397 = pneg %p81
        %p398 = pneg %p105
        %p399 = pneg %p102
        %p400 = pneg %p126
        %p401 = pneg %p123
        %p402 = pneg %p147
        %p403 = pneg %p144
        %s404 = sand.u32 %s160, 1
        %s405 = scalar_lea.sflag [#allocation3], %s404
        %s406 = sand.u32 %s160, 1
        %s407 = smul.addr %s406, 896
        %s408 = scalar_lea.vmem [#allocation2], %s407
        %p409 = pneg %p173
        %p410 = pneg %p170
        %p411 = scmp.lt.s32.totalorder %s26, 1
        %s412 = scalar_select %p411, %s26, 1
        %s413 = smul.addr %s412, 32
        %s414 = smul.addr %s413, 4
        %s415 = scalar_lea.vmem %s7, %s414
        %p416 = pneg %p199
        %p417 = pneg %p196
        %p418 = scmp.lt.s32.totalorder %s26, 1
        %s419 = scalar_select %p418, %s26, 1
        %s420 = smul.addr %s419, 15
        %s421 = scalar_lea.vmem %s8, %s420
        %p422 = pneg %p225
        %p423 = pneg %p222
        %p424 = scmp.lt.s32.totalorder %s26, 1
        %s425 = scalar_select %p424, %s26, 1
        %s426 = smul.addr %s425, 8
        %s427 = scalar_lea.vmem %s9, %s426
        %p428 = pneg %p251
        %p429 = pneg %p248
        %p430 = pneg %p272
        %p431 = pneg %p269
        %p432 = pneg %p293
        %p433 = pneg %p290
        %p434 = scmp.lt.s32.totalorder %s26, 1
        %s435 = scalar_select %p434, %s26, 1
        %s436 = smul.addr %s435, 32
        %s437 = smul.addr %s436, 4
        %s438 = scalar_lea.vmem %s7, %s437
        %p439 = scmp.lt.s32.totalorder %s26, 1
        %s440 = scalar_select %p439, %s26, 1
        %s441 = smul.addr %s440, 15
        %s442 = scalar_lea.vmem %s8, %s441
        %p443 = scmp.lt.s32.totalorder %s26, 1
        %s444 = scalar_select %p443, %s26, 1
        %s445 = smul.addr %s444, 8
        %s446 = scalar_lea.vmem %s9, %s445
        %p448 = scmp.eq.s32.totalorder %s26, 0
        // Predicated region
        $region69: #{_lambda_.1} parent=63 // pred_check
          %p449 = pneg %p448
        $region70: #{_lambda_.1} parent=63 // pred_check_branch
          %451 = sbr.rel (%p449) target = $region72
        $region71: #{_lambda_.1} parent=63 // pred_region
          %v452 = vld [vmem:[%s0] sm:$0xff]
          %v453 = vld [vmem:[%s0 + $0x8] sm:$0xff]
          %454 = vst [vmem:[#allocation5] sm:$0xff] %v452
          %455 = vst [vmem:[#allocation5 + $0x8] sm:$0xff] %v453
        $region72: #{_lambda_.1} parent=63 // pred_fallthru
          _
        %v456 = vld [vmem:[%s446] sm:$0xff]
        %v457 = vld [vmem:[#allocation5] sm:$0xff]
        %v458 = vld [vmem:[#allocation5 + $0x8] sm:$0xff]
        %459 = vadd.xlane.f32.xlu0 %v457
        %v460 = vpop.xlane.xlu0 %459
        %461 = vadd.xlane.f32.xlu0 %v458
        %v462 = vpop.xlane.xlu0 %461
        %v463 = vrcp.pop 128.0
        %v464 = vmul.f32 %v460, %v463
        %v465 = vmul.f32 %v462, %v463
        %v466 = vsub.f32 %v457, %v464
        %v467 = vsub.f32 %v458, %v465
        %v468 = vmul.f32 %v466, %v466
        %v469 = vmul.f32 %v467, %v467
        %470 = vadd.xlane.f32.xlu0 %v468
        %v471 = vpop.xlane.xlu0 %470
        %472 = vadd.xlane.f32.xlu0 %v469
        %v473 = vpop.xlane.xlu0 %472
        %v474 = vmul.f32 %v471, %v463
        %v475 = vmul.f32 %v473, %v463
        %v476 = vadd.f32 %v474, 1e-06
        %v477 = vadd.f32 %v475, 1e-06
        %v478 = vrsqrt.pop %v476
        %v479 = vrsqrt.pop %v477
        %v480 = vmul.f32 %v466, %v478
        %v481 = vmul.f32 %v467, %v479
        %v482 = vlaneseq
        %v483 = vshrl.u32 %v482, 7
        %v484 = vsub.s32 0, %v483
        %v485 = vrot.slane %v456, %v484
        %v486 = vmul.f32 %v480, %v485
        %v487 = vmul.f32 %v481, %v485
        %v488 = vlaneseq
        %v489 = vshrl.u32 %v488, 7
        %v490 = vsub.s32 1, %v489
        %v491 = vrot.slane %v456, %v490
        %v492 = vadd.f32 %v486, %v491
        %v493 = vadd.f32 %v487, %v491
        %v494 = vpack.c.bf16 %v493, %v492
        %v495 = vld [vmem:[%s387] sm:$0xff]
        %v496 = vld [vmem:[%s387 + $0x8] sm:$0xf]
        %v497 = vld [vmem:[%s387 + $0x38] sm:$0xff]
        %v498 = vld [vmem:[%s387 + $0x40] sm:$0xf]
        %v499 = vld [vmem:[%s387 + $0x70] sm:$0xff]
        %v500 = vld [vmem:[%s387 + $0x78] sm:$0xf]
        %v501 = vld [vmem:[%s387 + $0xa8] sm:$0xff]
        %v502 = vld [vmem:[%s387 + $0xb0] sm:$0xf]
        %v503 = vld [vmem:[%s387 + $0xe0] sm:$0xff]
        %v504 = vld [vmem:[%s387 + $0xe8] sm:$0xf]
        %v505 = vld [vmem:[%s387 + $0x118] sm:$0xff]
        %v506 = vld [vmem:[%s387 + $0x120] sm:$0xf]
        %v507 = vld [vmem:[%s387 + $0x150] sm:$0xff]
        %v508 = vld [vmem:[%s387 + $0x158] sm:$0xf]
        %v509 = vld [vmem:[%s387 + $0x188] sm:$0xff]
        %v510 = vld [vmem:[%s387 + $0x190] sm:$0xf]
        %v511 = vld [vmem:[%s387 + $0x1c0] sm:$0xff]
        %v512 = vld [vmem:[%s387 + $0x1c8] sm:$0xf]
        %v513 = vld [vmem:[%s387 + $0x1f8] sm:$0xff]
        %v514 = vld [vmem:[%s387 + $0x200] sm:$0xf]
        %v515 = vld [vmem:[%s387 + $0x230] sm:$0xff]
        %v516 = vld [vmem:[%s387 + $0x238] sm:$0xf]
        %v517 = vld [vmem:[%s387 + $0x268] sm:$0xff]
        %v518 = vld [vmem:[%s387 + $0x270] sm:$0xf]
        %v519 = vld [vmem:[%s387 + $0x2a0] sm:$0xff]
        %v520 = vld [vmem:[%s387 + $0x2a8] sm:$0xf]
        %v521 = vld [vmem:[%s387 + $0x2d8] sm:$0xff]
        %v522 = vld [vmem:[%s387 + $0x2e0] sm:$0xf]
        %v523 = vld [vmem:[%s387 + $0x310] sm:$0xff]
        %v524 = vld [vmem:[%s387 + $0x318] sm:$0xf]
        %v525 = vld [vmem:[%s387 + $0x348] sm:$0xff]
        %v526 = vld [vmem:[%s387 + $0x350] sm:$0xf]
        %v527 = vld [vmem:[%s442] sm:$0x7]
        %v529 = vlaneseq
        %v530 = vshrl.u32 %v529, 7
        %v531 = vsub.s32 0, %v530
        %v532 = vrot.slane %v527, %v531
        %v533 = vlaneseq
        %v534 = vshrl.u32 %v533, 7
        %v535 = vsub.s32 1, %v534
        %v536 = vrot.slane %v527, %v535
        %v537 = vlaneseq
        %v538 = vshrl.u32 %v537, 7
        %v539 = vsub.s32 2, %v538
        %v540 = vrot.slane %v527, %v539
        %v576 = vunpack.c.l.b16 %v495
        %v577 = vunpack.c.h.b16 %v495
        %v578 = vunpack.c.l.b16 %v496
        %v579 = vunpack.c.l.b16 %v497
        %v580 = vunpack.c.h.b16 %v497
        %v581 = vunpack.c.l.b16 %v498
        %v582 = vunpack.c.l.b16 %v499
        %v583 = vunpack.c.h.b16 %v499
        %v584 = vunpack.c.l.b16 %v500
        %v585 = vunpack.c.l.b16 %v501
        %v586 = vunpack.c.h.b16 %v501
        %v587 = vunpack.c.l.b16 %v502
        %v588 = vunpack.c.l.b16 %v503
        %v589 = vunpack.c.h.b16 %v503
        %v590 = vunpack.c.l.b16 %v504
        %v591 = vunpack.c.l.b16 %v505
        %v592 = vunpack.c.h.b16 %v505
        %v593 = vunpack.c.l.b16 %v506
        %v594 = vunpack.c.l.b16 %v507
        %v595 = vunpack.c.h.b16 %v507
        %v596 = vunpack.c.l.b16 %v508
        %v597 = vunpack.c.l.b16 %v509
        %v598 = vunpack.c.h.b16 %v509
        %v599 = vunpack.c.l.b16 %v510
        %v600 = vunpack.c.l.b16 %v511
        %v601 = vunpack.c.h.b16 %v511
        %v602 = vunpack.c.l.b16 %v512
        %v603 = vunpack.c.l.b16 %v513
        %v604 = vunpack.c.h.b16 %v513
        %v605 = vunpack.c.l.b16 %v514
        %v606 = vunpack.c.l.b16 %v515
        %v607 = vunpack.c.h.b16 %v515
        %v608 = vunpack.c.l.b16 %v516
        %v609 = vunpack.c.l.b16 %v517
        %v610 = vunpack.c.h.b16 %v517
        %v611 = vunpack.c.l.b16 %v518
        %v612 = vunpack.c.l.b16 %v519
        %v613 = vunpack.c.h.b16 %v519
        %v614 = vunpack.c.l.b16 %v520
        %v615 = vunpack.c.l.b16 %v521
        %v616 = vunpack.c.h.b16 %v521
        %v617 = vunpack.c.l.b16 %v522
        %v618 = vunpack.c.l.b16 %v523
        %v619 = vunpack.c.h.b16 %v523
        %v620 = vunpack.c.l.b16 %v524
        %v621 = vunpack.c.l.b16 %v525
        %v622 = vunpack.c.h.b16 %v525
        %v623 = vunpack.c.l.b16 %v526
        %v624 = vpack.c.b16 %v579, %v576
        %v625 = vpack.c.b16 %v580, %v577
        %v626 = vpack.c.b16 %v581, %v578
        %v627 = vpack.c.b16 %v585, %v582
        %v628 = vpack.c.b16 %v586, %v583
        %v629 = vpack.c.b16 %v587, %v584
        %v630 = vpack.c.b16 %v591, %v588
        %v631 = vpack.c.b16 %v592, %v589
        %v632 = vpack.c.b16 %v593, %v590
        %v633 = vpack.c.b16 %v597, %v594
        %v634 = vpack.c.b16 %v598, %v595
        %v635 = vpack.c.b16 %v599, %v596
        %v636 = vpack.c.b16 %v603, %v600
        %v637 = vpack.c.b16 %v604, %v601
        %v638 = vpack.c.b16 %v605, %v602
        %v639 = vpack.c.b16 %v609, %v606
        %v640 = vpack.c.b16 %v610, %v607
        %v641 = vpack.c.b16 %v611, %v608
        %v642 = vpack.c.b16 %v615, %v612
        %v643 = vpack.c.b16 %v616, %v613
        %v644 = vpack.c.b16 %v617, %v614
        %v645 = vpack.c.b16 %v621, %v618
        %v646 = vpack.c.b16 %v622, %v619
        %v647 = vpack.c.b16 %v623, %v620
        %672 = vmatprep.subr.bf16.mxu0 %v625
        %673 = vmatpush1.bf16.msra.mxu0 %v624
        %674 = vmatprep.subr.bf16.mxu0 %v628
        %675 = vmatpush1.bf16.msra.mxu0 %v627
        %676 = vmatprep.subr.bf16.mxu0 %v631
        %677 = vmatpush1.bf16.msra.mxu0 %v630
        %678 = vmatprep.subr.bf16.mxu0 %v634
        %679 = vmatpush1.bf16.msra.mxu0 %v633
        %680 = vmatprep.subr.bf16.mxu0 %v637
        %681 = vmatpush1.bf16.msra.mxu0 %v636
        %682 = vmatprep.subr.bf16.mxu0 %v640
        %683 = vmatpush1.bf16.msra.mxu0 %v639
        %684 = vmatprep.subr.bf16.mxu0 %v643
        %685 = vmatpush1.bf16.msra.mxu0 %v642
        %686 = vmatprep.subr.bf16.mxu0 %v646
        %687 = vmatpush1.bf16.msra.mxu0 %v645
        %688 = vmatprep.subr.bf16.mxu0 0
        %689 = vmatpush1.bf16.msra.mxu0 0
        %690 = vmatprep.subr.bf16.mxu0 0
        %691 = vmatpush1.bf16.msra.mxu0 0
        %692 = vmatprep.subr.bf16.mxu0 0
        %693 = vmatpush1.bf16.msra.mxu0 0
        %694 = vmatprep.subr.bf16.mxu0 0
        %695 = vmatpush1.bf16.msra.mxu0 0
        %696 = vmatprep.subr.bf16.mxu0 0
        %697 = vmatpush1.bf16.msra.mxu0 0
        %698 = vmatprep.subr.bf16.mxu0 0
        %699 = vmatpush1.bf16.msra.mxu0 0
        %700 = vmatprep.subr.bf16.mxu0 0
        %701 = vmatpush1.bf16.msra.mxu0 0
        %702 = vmatprep.subr.bf16.mxu0 0
        %703 = vmatpush1.bf16.msra.mxu0 0
        %704 = vmatprep.mubr.bf16.mxu0 0
        %705 = vmatmul.mubr.bf16.gmra.mrb[0].mxu0 %v494
        %v706 = vpop.f32.mrb[0].mxu0
        %v707 = vadd.f32 %v532, %v706
        %v708 = vpop.f32.mrb[0].mxu0
        %v709 = vadd.f32 %v536, %v708
        %v710 = vpop.f32.mrb[0].mxu0
        %v711 = vadd.f32 %v532, %v710
        %v712 = vpop.f32.mrb[0].mxu0
        %v713 = vadd.f32 %v536, %v712
        %714 = vdwg.mxu0
        %715 = vmatprep.subr.bf16.mxu0 0
        %716 = vmatpush1.bf16.msra.mxu0 %v626
        %717 = vmatprep.subr.bf16.mxu0 0
        %718 = vmatpush1.bf16.msra.mxu0 %v629
        %719 = vmatprep.subr.bf16.mxu0 0
        %720 = vmatpush1.bf16.msra.mxu0 %v632
        %721 = vmatprep.subr.bf16.mxu0 0
        %722 = vmatpush1.bf16.msra.mxu0 %v635
        %723 = vmatprep.subr.bf16.mxu0 0
        %724 = vmatpush1.bf16.msra.mxu0 %v638
        %725 = vmatprep.subr.bf16.mxu0 0
        %726 = vmatpush1.bf16.msra.mxu0 %v641
        %727 = vmatprep.subr.bf16.mxu0 0
        %728 = vmatpush1.bf16.msra.mxu0 %v644
        %729 = vmatprep.subr.bf16.mxu0 0
        %730 = vmatpush1.bf16.msra.mxu0 %v647
        %731 = vmatprep.subr.bf16.mxu0 0
        %732 = vmatpush1.bf16.msra.mxu0 0
        %733 = vmatprep.subr.bf16.mxu0 0
        %734 = vmatpush1.bf16.msra.mxu0 0
        %735 = vmatprep.subr.bf16.mxu0 0
        %736 = vmatpush1.bf16.msra.mxu0 0
        %737 = vmatprep.subr.bf16.mxu0 0
        %738 = vmatpush1.bf16.msra.mxu0 0
        %739 = vmatprep.subr.bf16.mxu0 0
        %740 = vmatpush1.bf16.msra.mxu0 0
        %741 = vmatprep.subr.bf16.mxu0 0
        %742 = vmatpush1.bf16.msra.mxu0 0
        %743 = vmatprep.subr.bf16.mxu0 0
        %744 = vmatpush1.bf16.msra.mxu0 0
        %745 = vmatprep.subr.bf16.mxu0 0
        %746 = vmatpush1.bf16.msra.mxu0 0
        %747 = vmatprep.mubr.bf16.mxu0 0
        %748 = vmatmul.mubr.bf16.gmra.mrb[0].mxu0 %v494
        %v749 = vpop.f32.mrb[0].mxu0
        %v750 = vadd.f32 %v540, %v749
        %v751 = vpop.f32.mrb[0].mxu0
        %v752 = vpop.f32.mrb[0].mxu0
        %v753 = vadd.f32 %v540, %v752
        %v754 = vpop.f32.mrb[0].mxu0
        %755 = vdwg.mxu0
        %v756 = vld [vmem:[%s3] sm:$0xff]
        %v757 = vld [vmem:[%s3 + $0x8] sm:$0xff]
        %v758 = vmul.f32 %v707, 0.17677669
        %v759 = vmul.f32 %v711, 0.17677669
        %v760 = vpack.c.bf16 %v759, %v758
        %v762 = vunpack.c.l.b16 %v760
        %v763 = vunpack.c.h.b16 %v760
        %v764 = vpack.c.b16 %v762, %v762
        %v765 = vpack.c.b16 %v763, %v763
        %v766 = vpack.c.bf16 %v713, %v709
        %v768 = vunpack.c.l.b16 %v766
        %v769 = vunpack.c.h.b16 %v766
        %v770 = vpack.c.b16 %v768, %v768
        %v771 = vpack.c.b16 %v769, %v769
        %v772 = vpack.c.bf16 %v753, %v750
        %v774 = vunpack.c.l.b16 %v772
        %v775 = vunpack.c.h.b16 %v772
        %v776 = vpack.c.b16 %v774, %v774
        %v777 = vpack.c.b16 %v775, %v775
        %v778 = vld [vmem:[%s387 + $0xc] sm:$0xf]
        %v779 = vld [vmem:[%s387 + $0x44] sm:$0xf]
        %v780 = vld [vmem:[%s387 + $0x7c] sm:$0xf]
        %v781 = vld [vmem:[%s387 + $0xb4] sm:$0xf]
        %v782 = vld [vmem:[%s387 + $0xec] sm:$0xf]
        %v783 = vld [vmem:[%s387 + $0x124] sm:$0xf]
        %v784 = vld [vmem:[%s387 + $0x15c] sm:$0xf]
        %v785 = vld [vmem:[%s387 + $0x194] sm:$0xf]
        %v786 = vld [vmem:[%s387 + $0x1cc] sm:$0xf]
        %v787 = vld [vmem:[%s387 + $0x204] sm:$0xf]
        %v788 = vld [vmem:[%s387 + $0x23c] sm:$0xf]
        %v789 = vld [vmem:[%s387 + $0x274] sm:$0xf]
        %v790 = vld [vmem:[%s387 + $0x2ac] sm:$0xf]
        %v791 = vld [vmem:[%s387 + $0x2e4] sm:$0xf]
        %v792 = vld [vmem:[%s387 + $0x31c] sm:$0xf]
        %v793 = vld [vmem:[%s387 + $0x354] sm:$0xf]
        %vm794 = vcmask 261120
        %v796 = vsel %vm794, %v764, 0
        %v799 = vsel %vm794, %v770, 0
        %801 = vmatprep.subr.bf16.mxu0 0
        %802 = vmatpush1.bf16.xpose.msra.mxu0 %v799
        %803 = vmatprep.subr.bf16.mxu0 0
        %804 = vmatpush1.bf16.xpose.msra.mxu0 0
        %805 = vmatprep.subr.bf16.mxu0 0
        %806 = vmatpush1.bf16.xpose.msra.mxu0 0
        %807 = vmatprep.subr.bf16.mxu0 0
        %808 = vmatpush1.bf16.xpose.msra.mxu0 0
        %809 = vmatprep.subr.bf16.mxu0 0
        %810 = vmatpush1.bf16.xpose.msra.mxu0 0
        %811 = vmatprep.subr.bf16.mxu0 0
        %812 = vmatpush1.bf16.xpose.msra.mxu0 0
        %813 = vmatprep.subr.bf16.mxu0 0
        %814 = vmatpush1.bf16.xpose.msra.mxu0 0
        %815 = vmatprep.subr.bf16.mxu0 0
        %816 = vmatpush1.bf16.xpose.msra.mxu0 0
        %817 = vmatprep.subr.bf16.mxu0 0
        %818 = vmatpush1.bf16.xpose.msra.mxu0 0
        %819 = vmatprep.subr.bf16.mxu0 0
        %820 = vmatpush1.bf16.xpose.msra.mxu0 0
        %821 = vmatprep.subr.bf16.mxu0 0
        %822 = vmatpush1.bf16.xpose.msra.mxu0 0
        %823 = vmatprep.subr.bf16.mxu0 0
        %824 = vmatpush1.bf16.xpose.msra.mxu0 0
        %825 = vmatprep.subr.bf16.mxu0 0
        %826 = vmatpush1.bf16.xpose.msra.mxu0 0
        %827 = vmatprep.subr.bf16.mxu0 0
        %828 = vmatpush1.bf16.xpose.msra.mxu0 0
        %829 = vmatprep.subr.bf16.mxu0 0
        %830 = vmatpush1.bf16.xpose.msra.mxu0 0
        %831 = vmatprep.subr.bf16.mxu0 0
        %832 = vmatpush1.bf16.xpose.msra.mxu0 0
        %833 = vmatprep.mubr.bf16.mxu0 0
        %834 = vmatmul.mubr.bf16.gmra.mrb[0].mxu0 %v796
        %v835 = vpop.f32.mrb[0].mxu0
        %v836 = vadd.f32 %v756, %v835
        %v837 = vpop.f32.mrb[0].mxu0
        %v838 = vpop.f32.mrb[0].mxu0
        %v839 = vpop.f32.mrb[0].mxu0
        %840 = vdwg.mxu0
        %v842 = vsel %vm794, %v765, 0
        %v845 = vsel %vm794, %v771, 0
        %847 = vmatprep.subr.bf16.mxu0 0
        %848 = vmatpush1.bf16.xpose.msra.mxu0 %v845
        %849 = vmatprep.subr.bf16.mxu0 0
        %850 = vmatpush1.bf16.xpose.msra.mxu0 0
        %851 = vmatprep.subr.bf16.mxu0 0
        %852 = vmatpush1.bf16.xpose.msra.mxu0 0
        %853 = vmatprep.subr.bf16.mxu0 0
        %854 = vmatpush1.bf16.xpose.msra.mxu0 0
        %855 = vmatprep.subr.bf16.mxu0 0
        %856 = vmatpush1.bf16.xpose.msra.mxu0 0
        %857 = vmatprep.subr.bf16.mxu0 0
        %858 = vmatpush1.bf16.xpose.msra.mxu0 0
        %859 = vmatprep.subr.bf16.mxu0 0
        %860 = vmatpush1.bf16.xpose.msra.mxu0 0
        %861 = vmatprep.subr.bf16.mxu0 0
        %862 = vmatpush1.bf16.xpose.msra.mxu0 0
        %863 = vmatprep.subr.bf16.mxu0 0
        %864 = vmatpush1.bf16.xpose.msra.mxu0 0
        %865 = vmatprep.subr.bf16.mxu0 0
        %866 = vmatpush1.bf16.xpose.msra.mxu0 0
        %867 = vmatprep.subr.bf16.mxu0 0
        %868 = vmatpush1.bf16.xpose.msra.mxu0 0
        %869 = vmatprep.subr.bf16.mxu0 0
        %870 = vmatpush1.bf16.xpose.msra.mxu0 0
        %871 = vmatprep.subr.bf16.mxu0 0
        %872 = vmatpush1.bf16.xpose.msra.mxu0 0
        %873 = vmatprep.subr.bf16.mxu0 0
        %874 = vmatpush1.bf16.xpose.msra.mxu0 0
        %875 = vmatprep.subr.bf16.mxu0 0
        %876 = vmatpush1.bf16.xpose.msra.mxu0 0
        %877 = vmatprep.subr.bf16.mxu0 0
        %878 = vmatpush1.bf16.xpose.msra.mxu0 0
        %879 = vmatprep.mubr.bf16.mxu0 0
        %880 = vmatmul.mubr.bf16.gmra.mrb[0].mxu0 %v842
        %v881 = vpop.f32.mrb[0].mxu0
        %v882 = vadd.f32 %v757, %v881
        %v883 = vpop.f32.mrb[0].mxu0
        %v884 = vpop.f32.mrb[0].mxu0
        %v885 = vpop.f32.mrb[0].mxu0
        %886 = vdwg.mxu0
        %vm887 = vcmask 64512
        %v888 = vsel %vm887, %v836, -inf
        %889 = vmax.xlane.f32.xlu0 %v888
        %v890 = vpop.xlane.xlu0 %889
        %v891 = vsel %vm887, %v882, -inf
        %892 = vmax.xlane.f32.xlu0 %v891
        %v893 = vpop.xlane.xlu0 %892
        %v894 = vsub.f32 %v836, %v890
        %v895 = vsub.f32 %v882, %v893
        %v896 = vmul.f32 %v894, 1.442695
        %v897 = vpow.pop %v896
        %v898 = vmul.f32 %v895, 1.442695
        %v899 = vpow.pop %v898
        %v900 = vsel %vm887, %v897, 0.0
        %901 = vadd.xlane.f32.xlu0 %v900
        %v902 = vpop.xlane.xlu0 %901
        %v903 = vsel %vm887, %v899, 0.0
        %904 = vadd.xlane.f32.xlu0 %v903
        %v905 = vpop.xlane.xlu0 %904
        %v906 = vrcp.pop %v902
        %v907 = vrcp.pop %v905
        %v908 = vmul.f32 %v897, %v906
        %v909 = vmul.f32 %v899, %v907
        %v910 = vpack.c.bf16 %v908, %v908
        %v911 = vpack.c.bf16 %v909, %v909
        %v913 = vsel %vm887, %v910, 0
        %vm915 = vcmask 1043456
        %v917 = vsel %vm915, %v776, 0
        %919 = vmatprep.subr.bf16.mxu0 0
        %920 = vmatpush1.bf16.msra.mxu0 %v917
        %921 = vmatprep.subr.bf16.mxu0 0
        %922 = vmatpush1.bf16.msra.mxu0 0
        %923 = vmatprep.subr.bf16.mxu0 0
        %924 = vmatpush1.bf16.msra.mxu0 0
        %925 = vmatprep.subr.bf16.mxu0 0
        %926 = vmatpush1.bf16.msra.mxu0 0
        %927 = vmatprep.subr.bf16.mxu0 0
        %928 = vmatpush1.bf16.msra.mxu0 0
        %929 = vmatprep.subr.bf16.mxu0 0
        %930 = vmatpush1.bf16.msra.mxu0 0
        %931 = vmatprep.subr.bf16.mxu0 0
        %932 = vmatpush1.bf16.msra.mxu0 0
        %933 = vmatprep.subr.bf16.mxu0 0
        %934 = vmatpush1.bf16.msra.mxu0 0
        %935 = vmatprep.subr.bf16.mxu0 0
        %936 = vmatpush1.bf16.msra.mxu0 0
        %937 = vmatprep.subr.bf16.mxu0 0
        %938 = vmatpush1.bf16.msra.mxu0 0
        %939 = vmatprep.subr.bf16.mxu0 0
        %940 = vmatpush1.bf16.msra.mxu0 0
        %941 = vmatprep.subr.bf16.mxu0 0
        %942 = vmatpush1.bf16.msra.mxu0 0
        %943 = vmatprep.subr.bf16.mxu0 0
        %944 = vmatpush1.bf16.msra.mxu0 0
        %945 = vmatprep.subr.bf16.mxu0 0
        %946 = vmatpush1.bf16.msra.mxu0 0
        %947 = vmatprep.subr.bf16.mxu0 0
        %948 = vmatpush1.bf16.msra.mxu0 0
        %949 = vmatprep.subr.bf16.mxu0 0
        %950 = vmatpush1.bf16.msra.mxu0 0
        %951 = vmatprep.mubr.bf16.mxu0 0
        %952 = vmatmul.mubr.bf16.gmra.mrb[0].mxu0 %v913
        %v953 = vpop.f32.mrb[0].mxu0
        %v954 = vadd.f32 0.0, %v953
        %v955 = vpop.f32.mrb[0].mxu0
        %v956 = vpop.f32.mrb[0].mxu0
        %v957 = vpop.f32.mrb[0].mxu0
        %958 = vdwg.mxu0
        %v960 = vsel %vm887, %v911, 0
        %v963 = vsel %vm915, %v777, 0
        %965 = vmatprep.subr.bf16.mxu0 0
        %966 = vmatpush1.bf16.msra.mxu0 %v963
        %967 = vmatprep.subr.bf16.mxu0 0
        %968 = vmatpush1.bf16.msra.mxu0 0
        %969 = vmatprep.subr.bf16.mxu0 0
        %970 = vmatpush1.bf16.msra.mxu0 0
        %971 = vmatprep.subr.bf16.mxu0 0
        %972 = vmatpush1.bf16.msra.mxu0 0
        %973 = vmatprep.subr.bf16.mxu0 0
        %974 = vmatpush1.bf16.msra.mxu0 0
        %975 = vmatprep.subr.bf16.mxu0 0
        %976 = vmatpush1.bf16.msra.mxu0 0
        %977 = vmatprep.subr.bf16.mxu0 0
        %978 = vmatpush1.bf16.msra.mxu0 0
        %979 = vmatprep.subr.bf16.mxu0 0
        %980 = vmatpush1.bf16.msra.mxu0 0
        %981 = vmatprep.subr.bf16.mxu0 0
        %982 = vmatpush1.bf16.msra.mxu0 0
        %983 = vmatprep.subr.bf16.mxu0 0
        %984 = vmatpush1.bf16.msra.mxu0 0
        %985 = vmatprep.subr.bf16.mxu0 0
        %986 = vmatpush1.bf16.msra.mxu0 0
        %987 = vmatprep.subr.bf16.mxu0 0
        %988 = vmatpush1.bf16.msra.mxu0 0
        %989 = vmatprep.subr.bf16.mxu0 0
        %990 = vmatpush1.bf16.msra.mxu0 0
        %991 = vmatprep.subr.bf16.mxu0 0
        %992 = vmatpush1.bf16.msra.mxu0 0
        %993 = vmatprep.subr.bf16.mxu0 0
        %994 = vmatpush1.bf16.msra.mxu0 0
        %995 = vmatprep.subr.bf16.mxu0 0
        %996 = vmatpush1.bf16.msra.mxu0 0
        %997 = vmatprep.mubr.bf16.mxu0 0
        %998 = vmatmul.mubr.bf16.gmra.mrb[0].mxu0 %v960
        %v999 = vpop.f32.mrb[0].mxu0
        %v1000 = vadd.f32 0.0, %v999
        %v1001 = vpop.f32.mrb[0].mxu0
        %v1002 = vpop.f32.mrb[0].mxu0
        %v1003 = vpop.f32.mrb[0].mxu0
        %1004 = vdwg.mxu0
        %v1005 = vpack.c.bf16 %v1000, %v954
        %1006 = vrot.lane.b32.xlu0 %v764, 96
        %v1007 = vpop.permute.xlu0 %1006
        %1008 = vrot.lane.b32.xlu0 %v770, 96
        %v1009 = vpop.permute.xlu0 %1008
        %v1011 = vsel %vm794, %v1007, 0
        %v1014 = vsel %vm794, %v1009, 0
        %1016 = vmatprep.subr.bf16.mxu0 0
        %1017 = vmatpush1.bf16.xpose.msra.mxu0 %v1014
        %1018 = vmatprep.subr.bf16.mxu0 0
        %1019 = vmatpush1.bf16.xpose.msra.mxu0 0
        %1020 = vmatprep.subr.bf16.mxu0 0
        %1021 = vmatpush1.bf16.xpose.msra.mxu0 0
        %1022 = vmatprep.subr.bf16.mxu0 0
        %1023 = vmatpush1.bf16.xpose.msra.mxu0 0
        %1024 = vmatprep.subr.bf16.mxu0 0
        %1025 = vmatpush1.bf16.xpose.msra.mxu0 0
        %1026 = vmatprep.subr.bf16.mxu0 0
        %1027 = vmatpush1.bf16.xpose.msra.mxu0 0
        %1028 = vmatprep.subr.bf16.mxu0 0
        %1029 = vmatpush1.bf16.xpose.msra.mxu0 0
        %1030 = vmatprep.subr.bf16.mxu0 0
        %1031 = vmatpush1.bf16.xpose.msra.mxu0 0
        %1032 = vmatprep.subr.bf16.mxu0 0
        %1033 = vmatpush1.bf16.xpose.msra.mxu0 0
        %1034 = vmatprep.subr.bf16.mxu0 0
        %1035 = vmatpush1.bf16.xpose.msra.mxu0 0
        %1036 = vmatprep.subr.bf16.mxu0 0
        %1037 = vmatpush1.bf16.xpose.msra.mxu0 0
        %1038 = vmatprep.subr.bf16.mxu0 0
        %1039 = vmatpush1.bf16.xpose.msra.mxu0 0
        %1040 = vmatprep.subr.bf16.mxu0 0
        %1041 = vmatpush1.bf16.xpose.msra.mxu0 0
        %1042 = vmatprep.subr.bf16.mxu0 0
        %1043 = vmatpush1.bf16.xpose.msra.mxu0 0
        %1044 = vmatprep.subr.bf16.mxu0 0
        %1045 = vmatpush1.bf16.xpose.msra.mxu0 0
        %1046 = vmatprep.subr.bf16.mxu0 0
        %1047 = vmatpush1.bf16.xpose.msra.mxu0 0
        %1048 = vmatprep.mubr.bf16.mxu0 0
        %1049 = vmatmul.mubr.bf16.gmra.mrb[0].mxu0 %v1011
        %v1050 = vpop.f32.mrb[0].mxu0
        %v1051 = vadd.f32 %v756, %v1050
        %v1052 = vpop.f32.mrb[0].mxu0
        %v1053 = vpop.f32.mrb[0].mxu0
        %v1054 = vpop.f32.mrb[0].mxu0
        %1055 = vdwg.mxu0
        %1056 = vrot.lane.b32.xlu0 %v765, 96
        %v1057 = vpop.permute.xlu0 %1056
        %1058 = vrot.lane.b32.xlu0 %v771, 96
        %v1059 = vpop.permute.xlu0 %1058
        %v1061 = vsel %vm794, %v1057, 0
        %v1064 = vsel %vm794, %v1059, 0
        %1066 = vmatprep.subr.bf16.mxu0 0
        %1067 = vmatpush1.bf16.xpose.msra.mxu0 %v1064
        %1068 = vmatprep.subr.bf16.mxu0 0
        %1069 = vmatpush1.bf16.xpose.msra.mxu0 0
        %1070 = vmatprep.subr.bf16.mxu0 0
        %1071 = vmatpush1.bf16.xpose.msra.mxu0 0
        %1072 = vmatprep.subr.bf16.mxu0 0
        %1073 = vmatpush1.bf16.xpose.msra.mxu0 0
        %1074 = vmatprep.subr.bf16.mxu0 0
        %1075 = vmatpush1.bf16.xpose.msra.mxu0 0
        %1076 = vmatprep.subr.bf16.mxu0 0
        %1077 = vmatpush1.bf16.xpose.msra.mxu0 0
        %1078 = vmatprep.subr.bf16.mxu0 0
        %1079 = vmatpush1.bf16.xpose.msra.mxu0 0
        %1080 = vmatprep.subr.bf16.mxu0 0
        %1081 = vmatpush1.bf16.xpose.msra.mxu0 0
        %1082 = vmatprep.subr.bf16.mxu0 0
        %1083 = vmatpush1.bf16.xpose.msra.mxu0 0
        %1084 = vmatprep.subr.bf16.mxu0 0
        %1085 = vmatpush1.bf16.xpose.msra.mxu0 0
        %1086 = vmatprep.subr.bf16.mxu0 0
        %1087 = vmatpush1.bf16.xpose.msra.mxu0 0
        %1088 = vmatprep.subr.bf16.mxu0 0
        %1089 = vmatpush1.bf16.xpose.msra.mxu0 0
        %1090 = vmatprep.subr.bf16.mxu0 0
        %1091 = vmatpush1.bf16.xpose.msra.mxu0 0
        %1092 = vmatprep.subr.bf16.mxu0 0
        %1093 = vmatpush1.bf16.xpose.msra.mxu0 0
        %1094 = vmatprep.subr.bf16.mxu0 0
        %1095 = vmatpush1.bf16.xpose.msra.mxu0 0
        %1096 = vmatprep.subr.bf16.mxu0 0
        %1097 = vmatpush1.bf16.xpose.msra.mxu0 0
        %1098 = vmatprep.mubr.bf16.mxu0 0
        %1099 = vmatmul.mubr.bf16.gmra.mrb[0].mxu0 %v1061
        %v1100 = vpop.f32.mrb[0].mxu0
        %v1101 = vadd.f32 %v757, %v1100
        %v1102 = vpop.f32.mrb[0].mxu0
        %v1103 = vpop.f32.mrb[0].mxu0
        %v1104 = vpop.f32.mrb[0].mxu0
        %1105 = vdwg.mxu0
        %v1106 = vsel %vm887, %v1051, -inf
        %1107 = vmax.xlane.f32.xlu0 %v1106
        %v1108 = vpop.xlane.xlu0 %1107
        %v1109 = vsel %vm887, %v1101, -inf
        %1110 = vmax.xlane.f32.xlu0 %v1109
        %v1111 = vpop.xlane.xlu0 %1110
        %v1112 = vsub.f32 %v1051, %v1108
        %v1113 = vsub.f32 %v1101, %v1111
        %v1114 = vmul.f32 %v1112, 1.442695
        %v1115 = vpow.pop %v1114
        %v1116 = vmul.f32 %v1113, 1.442695
        %v1117 = vpow.pop %v1116
        %v1118 = vsel %vm887, %v1115, 0.0
        %1119 = vadd.xlane.f32.xlu0 %v1118
        %v1120 = vpop.xlane.xlu0 %1119
        %v1121 = vsel %vm887, %v1117, 0.0
        %1122 = vadd.xlane.f32.xlu0 %v1121
        %v1123 = vpop.xlane.xlu0 %1122
        %v1124 = vrcp.pop %v1120
        %v1125 = vrcp.pop %v1123
        %v1126 = vmul.f32 %v1115, %v1124
        %v1127 = vmul.f32 %v1117, %v1125
        %v1128 = vpack.c.bf16 %v1126, %v1126
        %v1129 = vpack.c.bf16 %v1127, %v1127
        %1130 = vrot.lane.b32.xlu0 %v776, 96
        %v1131 = vpop.permute.xlu0 %1130
        %v1133 = vsel %vm887, %v1128, 0
        %v1136 = vsel %vm915, %v1131, 0
        %1138 = vmatprep.subr.bf16.mxu0 0
        %1139 = vmatpush1.bf16.msra.mxu0 %v1136
        %1140 = vmatprep.subr.bf16.mxu0 0
        %1141 = vmatpush1.bf16.msra.mxu0 0
        %1142 = vmatprep.subr.bf16.mxu0 0
        %1143 = vmatpush1.bf16.msra.mxu0 0
        %1144 = vmatprep.subr.bf16.mxu0 0
        %1145 = vmatpush1.bf16.msra.mxu0 0
        %1146 = vmatprep.subr.bf16.mxu0 0
        %1147 = vmatpush1.bf16.msra.mxu0 0
        %1148 = vmatprep.subr.bf16.mxu0 0
        %1149 = vmatpush1.bf16.msra.mxu0 0
        %1150 = vmatprep.subr.bf16.mxu0 0
        %1151 = vmatpush1.bf16.msra.mxu0 0
        %1152 = vmatprep.subr.bf16.mxu0 0
        %1153 = vmatpush1.bf16.msra.mxu0 0
        %1154 = vmatprep.subr.bf16.mxu0 0
        %1155 = vmatpush1.bf16.msra.mxu0 0
        %1156 = vmatprep.subr.bf16.mxu0 0
        %1157 = vmatpush1.bf16.msra.mxu0 0
        %1158 = vmatprep.subr.bf16.mxu0 0
        %1159 = vmatpush1.bf16.msra.mxu0 0
        %1160 = vmatprep.subr.bf16.mxu0 0
        %1161 = vmatpush1.bf16.msra.mxu0 0
        %1162 = vmatprep.subr.bf16.mxu0 0
        %1163 = vmatpush1.bf16.msra.mxu0 0
        %1164 = vmatprep.subr.bf16.mxu0 0
        %1165 = vmatpush1.bf16.msra.mxu0 0
        %1166 = vmatprep.subr.bf16.mxu0 0
        %1167 = vmatpush1.bf16.msra.mxu0 0
        %1168 = vmatprep.subr.bf16.mxu0 0
        %1169 = vmatpush1.bf16.msra.mxu0 0
        %1170 = vmatprep.mubr.bf16.mxu0 0
        %1171 = vmatmul.mubr.bf16.gmra.mrb[0].mxu0 %v1133
        %v1172 = vpop.f32.mrb[0].mxu0
        %v1173 = vadd.f32 0.0, %v1172
        %v1174 = vpop.f32.mrb[0].mxu0
        %v1175 = vpop.f32.mrb[0].mxu0
        %v1176 = vpop.f32.mrb[0].mxu0
        %1177 = vdwg.mxu0
        %1178 = vrot.lane.b32.xlu0 %v777, 96
        %v1179 = vpop.permute.xlu0 %1178
        %v1181 = vsel %vm887, %v1129, 0
        %v1184 = vsel %vm915, %v1179, 0
        %1186 = vmatprep.subr.bf16.mxu0 0
        %1187 = vmatpush1.bf16.msra.mxu0 %v1184
        %1188 = vmatprep.subr.bf16.mxu0 0
        %1189 = vmatpush1.bf16.msra.mxu0 0
        %1190 = vmatprep.subr.bf16.mxu0 0
        %1191 = vmatpush1.bf16.msra.mxu0 0
        %1192 = vmatprep.subr.bf16.mxu0 0
        %1193 = vmatpush1.bf16.msra.mxu0 0
        %1194 = vmatprep.subr.bf16.mxu0 0
        %1195 = vmatpush1.bf16.msra.mxu0 0
        %1196 = vmatprep.subr.bf16.mxu0 0
        %1197 = vmatpush1.bf16.msra.mxu0 0
        %1198 = vmatprep.subr.bf16.mxu0 0
        %1199 = vmatpush1.bf16.msra.mxu0 0
        %1200 = vmatprep.subr.bf16.mxu0 0
        %1201 = vmatpush1.bf16.msra.mxu0 0
        %1202 = vmatprep.subr.bf16.mxu0 0
        %1203 = vmatpush1.bf16.msra.mxu0 0
        %1204 = vmatprep.subr.bf16.mxu0 0
        %1205 = vmatpush1.bf16.msra.mxu0 0
        %1206 = vmatprep.subr.bf16.mxu0 0
        %1207 = vmatpush1.bf16.msra.mxu0 0
        %1208 = vmatprep.subr.bf16.mxu0 0
        %1209 = vmatpush1.bf16.msra.mxu0 0
        %1210 = vmatprep.subr.bf16.mxu0 0
        %1211 = vmatpush1.bf16.msra.mxu0 0
        %1212 = vmatprep.subr.bf16.mxu0 0
        %1213 = vmatpush1.bf16.msra.mxu0 0
        %1214 = vmatprep.subr.bf16.mxu0 0
        %1215 = vmatpush1.bf16.msra.mxu0 0
        %1216 = vmatprep.subr.bf16.mxu0 0
        %1217 = vmatpush1.bf16.msra.mxu0 0
        %1218 = vmatprep.mubr.bf16.mxu0 0
        %1219 = vmatmul.mubr.bf16.gmra.mrb[0].mxu0 %v1181
        %v1220 = vpop.f32.mrb[0].mxu0
        %v1221 = vadd.f32 0.0, %v1220
        %v1222 = vpop.f32.mrb[0].mxu0
        %v1223 = vpop.f32.mrb[0].mxu0
        %v1224 = vpop.f32.mrb[0].mxu0
        %1225 = vdwg.mxu0
        %v1226 = vpack.c.bf16 %v1221, %v1173
        %v1231 = vunpack.c.l.b16 %v782
        %v1232 = vunpack.c.l.b16 %v783
        %v1233 = vunpack.c.l.b16 %v784
        %v1234 = vunpack.c.l.b16 %v785
        %v1235 = vpack.c.b16 %v1232, %v1231
        %v1236 = vpack.c.b16 %v1234, %v1233
        %v1240 = vsel %vm794, %v1226, 0
        %1242 = vmatprep.subr.bf16.mxu0 0
        %1243 = vmatpush1.bf16.msra.mxu0 %v1235
        %1244 = vmatprep.subr.bf16.mxu0 0
        %1245 = vmatpush1.bf16.msra.mxu0 %v1236
        %1246 = vmatprep.subr.bf16.mxu0 0
        %1247 = vmatpush1.bf16.msra.mxu0 0
        %1248 = vmatprep.subr.bf16.mxu0 0
        %1249 = vmatpush1.bf16.msra.mxu0 0
        %1250 = vmatprep.subr.bf16.mxu0 0
        %1251 = vmatpush1.bf16.msra.mxu0 0
        %1252 = vmatprep.subr.bf16.mxu0 0
        %1253 = vmatpush1.bf16.msra.mxu0 0
        %1254 = vmatprep.subr.bf16.mxu0 0
        %1255 = vmatpush1.bf16.msra.mxu0 0
        %1256 = vmatprep.subr.bf16.mxu0 0
        %1257 = vmatpush1.bf16.msra.mxu0 0
        %1258 = vmatprep.subr.bf16.mxu0 0
        %1259 = vmatpush1.bf16.msra.mxu0 0
        %1260 = vmatprep.subr.bf16.mxu0 0
        %1261 = vmatpush1.bf16.msra.mxu0 0
        %1262 = vmatprep.subr.bf16.mxu0 0
        %1263 = vmatpush1.bf16.msra.mxu0 0
        %1264 = vmatprep.subr.bf16.mxu0 0
        %1265 = vmatpush1.bf16.msra.mxu0 0
        %1266 = vmatprep.subr.bf16.mxu0 0
        %1267 = vmatpush1.bf16.msra.mxu0 0
        %1268 = vmatprep.subr.bf16.mxu0 0
        %1269 = vmatpush1.bf16.msra.mxu0 0
        %1270 = vmatprep.subr.bf16.mxu0 0
        %1271 = vmatpush1.bf16.msra.mxu0 0
        %1272 = vmatprep.subr.bf16.mxu0 0
        %1273 = vmatpush1.bf16.msra.mxu0 0
        %1274 = vmatprep.mubr.bf16.mxu0 0
        %1275 = vmatmul.mubr.bf16.gmra.mrb[0].mxu0 %v1240
        %v1276 = vpop.f32.mrb[0].mxu0
        %v1277 = vadd.f32 0.0, %v1276
        %v1278 = vpop.f32.mrb[0].mxu0
        %v1279 = vpop.f32.mrb[0].mxu0
        %v1280 = vadd.f32 0.0, %v1279
        %v1281 = vpop.f32.mrb[0].mxu0
        %1282 = vdwg.mxu0
        %v1287 = vunpack.c.l.b16 %v778
        %v1288 = vunpack.c.l.b16 %v779
        %v1289 = vunpack.c.l.b16 %v780
        %v1290 = vunpack.c.l.b16 %v781
        %v1291 = vpack.c.b16 %v1288, %v1287
        %v1292 = vpack.c.b16 %v1290, %v1289
        %v1296 = vsel %vm794, %v1005, 0
        %1298 = vmatprep.subr.bf16.mxu0 0
        %1299 = vmatpush1.bf16.msra.mxu0 %v1291
        %1300 = vmatprep.subr.bf16.mxu0 0
        %1301 = vmatpush1.bf16.msra.mxu0 %v1292
        %1302 = vmatprep.subr.bf16.mxu0 0
        %1303 = vmatpush1.bf16.msra.mxu0 0
        %1304 = vmatprep.subr.bf16.mxu0 0
        %1305 = vmatpush1.bf16.msra.mxu0 0
        %1306 = vmatprep.subr.bf16.mxu0 0
        %1307 = vmatpush1.bf16.msra.mxu0 0
        %1308 = vmatprep.subr.bf16.mxu0 0
        %1309 = vmatpush1.bf16.msra.mxu0 0
        %1310 = vmatprep.subr.bf16.mxu0 0
        %1311 = vmatpush1.bf16.msra.mxu0 0
        %1312 = vmatprep.subr.bf16.mxu0 0
        %1313 = vmatpush1.bf16.msra.mxu0 0
        %1314 = vmatprep.subr.bf16.mxu0 0
        %1315 = vmatpush1.bf16.msra.mxu0 0
        %1316 = vmatprep.subr.bf16.mxu0 0
        %1317 = vmatpush1.bf16.msra.mxu0 0
        %1318 = vmatprep.subr.bf16.mxu0 0
        %1319 = vmatpush1.bf16.msra.mxu0 0
        %1320 = vmatprep.subr.bf16.mxu0 0
        %1321 = vmatpush1.bf16.msra.mxu0 0
        %1322 = vmatprep.subr.bf16.mxu0 0
        %1323 = vmatpush1.bf16.msra.mxu0 0
        %1324 = vmatprep.subr.bf16.mxu0 0
        %1325 = vmatpush1.bf16.msra.mxu0 0
        %1326 = vmatprep.subr.bf16.mxu0 0
        %1327 = vmatpush1.bf16.msra.mxu0 0
        %1328 = vmatprep.subr.bf16.mxu0 0
        %1329 = vmatpush1.bf16.msra.mxu0 0
        %1330 = vmatprep.mubr.bf16.mxu0 0
        %1331 = vmatmul.mubr.bf16.gmra.mrb[0].mxu0 %v1296
        %v1332 = vpop.f32.mrb[0].mxu0
        %v1333 = vadd.f32 %v1277, %v1332
        %v1334 = vpop.f32.mrb[0].mxu0
        %v1335 = vpop.f32.mrb[0].mxu0
        %v1336 = vadd.f32 %v1280, %v1335
        %v1337 = vpop.f32.mrb[0].mxu0
        %1338 = vdwg.mxu0
        %1339 = vrot.lane.b32.xlu0 %v764, 64
        %v1340 = vpop.permute.xlu0 %1339
        %1341 = vrot.lane.b32.xlu0 %v770, 64
        %v1342 = vpop.permute.xlu0 %1341
        %v1344 = vsel %vm794, %v1340, 0
        %v1347 = vsel %vm794, %v1342, 0
        %1349 = vmatprep.subr.bf16.mxu0 0
        %1350 = vmatpush1.bf16.xpose.msra.mxu0 %v1347
        %1351 = vmatprep.subr.bf16.mxu0 0
        %1352 = vmatpush1.bf16.xpose.msra.mxu0 0
        %1353 = vmatprep.subr.bf16.mxu0 0
        %1354 = vmatpush1.bf16.xpose.msra.mxu0 0
        %1355 = vmatprep.subr.bf16.mxu0 0
        %1356 = vmatpush1.bf16.xpose.msra.mxu0 0
        %1357 = vmatprep.subr.bf16.mxu0 0
        %1358 = vmatpush1.bf16.xpose.msra.mxu0 0
        %1359 = vmatprep.subr.bf16.mxu0 0
        %1360 = vmatpush1.bf16.xpose.msra.mxu0 0
        %1361 = vmatprep.subr.bf16.mxu0 0
        %1362 = vmatpush1.bf16.xpose.msra.mxu0 0
        %1363 = vmatprep.subr.bf16.mxu0 0
        %1364 = vmatpush1.bf16.xpose.msra.mxu0 0
        %1365 = vmatprep.subr.bf16.mxu0 0
        %1366 = vmatpush1.bf16.xpose.msra.mxu0 0
        %1367 = vmatprep.subr.bf16.mxu0 0
        %1368 = vmatpush1.bf16.xpose.msra.mxu0 0
        %1369 = vmatprep.subr.bf16.mxu0 0
        %1370 = vmatpush1.bf16.xpose.msra.mxu0 0
        %1371 = vmatprep.subr.bf16.mxu0 0
        %1372 = vmatpush1.bf16.xpose.msra.mxu0 0
        %1373 = vmatprep.subr.bf16.mxu0 0
        %1374 = vmatpush1.bf16.xpose.msra.mxu0 0
        %1375 = vmatprep.subr.bf16.mxu0 0
        %1376 = vmatpush1.bf16.xpose.msra.mxu0 0
        %1377 = vmatprep.subr.bf16.mxu0 0
        %1378 = vmatpush1.bf16.xpose.msra.mxu0 0
        %1379 = vmatprep.subr.bf16.mxu0 0
        %1380 = vmatpush1.bf16.xpose.msra.mxu0 0
        %1381 = vmatprep.mubr.bf16.mxu0 0
        %1382 = vmatmul.mubr.bf16.gmra.mrb[0].mxu0 %v1344
        %v1383 = vpop.f32.mrb[0].mxu0
        %v1384 = vadd.f32 %v756, %v1383
        %v1385 = vpop.f32.mrb[0].mxu0
        %v1386 = vpop.f32.mrb[0].mxu0
        %v1387 = vpop.f32.mrb[0].mxu0
        %1388 = vdwg.mxu0
        %1389 = vrot.lane.b32.xlu0 %v765, 64
        %v1390 = vpop.permute.xlu0 %1389
        %1391 = vrot.lane.b32.xlu0 %v771, 64
        %v1392 = vpop.permute.xlu0 %1391
        %v1394 = vsel %vm794, %v1390, 0
        %v1397 = vsel %vm794, %v1392, 0
        %1399 = vmatprep.subr.bf16.mxu0 0
        %1400 = vmatpush1.bf16.xpose.msra.mxu0 %v1397
        %1401 = vmatprep.subr.bf16.mxu0 0
        %1402 = vmatpush1.bf16.xpose.msra.mxu0 0
        %1403 = vmatprep.subr.bf16.mxu0 0
        %1404 = vmatpush1.bf16.xpose.msra.mxu0 0
        %1405 = vmatprep.subr.bf16.mxu0 0
        %1406 = vmatpush1.bf16.xpose.msra.mxu0 0
        %1407 = vmatprep.subr.bf16.mxu0 0
        %1408 = vmatpush1.bf16.xpose.msra.mxu0 0
        %1409 = vmatprep.subr.bf16.mxu0 0
        %1410 = vmatpush1.bf16.xpose.msra.mxu0 0
        %1411 = vmatprep.subr.bf16.mxu0 0
        %1412 = vmatpush1.bf16.xpose.msra.mxu0 0
        %1413 = vmatprep.subr.bf16.mxu0 0
        %1414 = vmatpush1.bf16.xpose.msra.mxu0 0
        %1415 = vmatprep.subr.bf16.mxu0 0
        %1416 = vmatpush1.bf16.xpose.msra.mxu0 0
        %1417 = vmatprep.subr.bf16.mxu0 0
        %1418 = vmatpush1.bf16.xpose.msra.mxu0 0
        %1419 = vmatprep.subr.bf16.mxu0 0
        %1420 = vmatpush1.bf16.xpose.msra.mxu0 0
        %1421 = vmatprep.subr.bf16.mxu0 0
        %1422 = vmatpush1.bf16.xpose.msra.mxu0 0
        %1423 = vmatprep.subr.bf16.mxu0 0
        %1424 = vmatpush1.bf16.xpose.msra.mxu0 0
        %1425 = vmatprep.subr.bf16.mxu0 0
        %1426 = vmatpush1.bf16.xpose.msra.mxu0 0
        %1427 = vmatprep.subr.bf16.mxu0 0
        %1428 = vmatpush1.bf16.xpose.msra.mxu0 0
        %1429 = vmatprep.subr.bf16.mxu0 0
        %1430 = vmatpush1.bf16.xpose.msra.mxu0 0
        %1431 = vmatprep.mubr.bf16.mxu0 0
        %1432 = vmatmul.mubr.bf16.gmra.mrb[0].mxu0 %v1394
        %v1433 = vpop.f32.mrb[0].mxu0
        %v1434 = vadd.f32 %v757, %v1433
        %v1435 = vpop.f32.mrb[0].mxu0
        %v1436 = vpop.f32.mrb[0].mxu0
        %v1437 = vpop.f32.mrb[0].mxu0
        %1438 = vdwg.mxu0
        %v1439 = vsel %vm887, %v1384, -inf
        %1440 = vmax.xlane.f32.xlu0 %v1439
        %v1441 = vpop.xlane.xlu0 %1440
        %v1442 = vsel %vm887, %v1434, -inf
        %1443 = vmax.xlane.f32.xlu0 %v1442
        %v1444 = vpop.xlane.xlu0 %1443
        %v1445 = vsub.f32 %v1384, %v1441
        %v1446 = vsub.f32 %v1434, %v1444
        %v1447 = vmul.f32 %v1445, 1.442695
        %v1448 = vpow.pop %v1447
        %v1449 = vmul.f32 %v1446, 1.442695
        %v1450 = vpow.pop %v1449
        %v1451 = vsel %vm887, %v1448, 0.0
        %1452 = vadd.xlane.f32.xlu0 %v1451
        %v1453 = vpop.xlane.xlu0 %1452
        %v1454 = vsel %vm887, %v1450, 0.0
        %1455 = vadd.xlane.f32.xlu0 %v1454
        %v1456 = vpop.xlane.xlu0 %1455
        %v1457 = vrcp.pop %v1453
        %v1458 = vrcp.pop %v1456
        %v1459 = vmul.f32 %v1448, %v1457
        %v1460 = vmul.f32 %v1450, %v1458
        %v1461 = vpack.c.bf16 %v1459, %v1459
        %v1462 = vpack.c.bf16 %v1460, %v1460
        %1463 = vrot.lane.b32.xlu0 %v776, 64
        %v1464 = vpop.permute.xlu0 %1463
        %v1466 = vsel %vm887, %v1461, 0
        %v1469 = vsel %vm915, %v1464, 0
        %1471 = vmatprep.subr.bf16.mxu0 0
        %1472 = vmatpush1.bf16.msra.mxu0 %v1469
        %1473 = vmatprep.subr.bf16.mxu0 0
        %1474 = vmatpush1.bf16.msra.mxu0 0
        %1475 = vmatprep.subr.bf16.mxu0 0
        %1476 = vmatpush1.bf16.msra.mxu0 0
        %1477 = vmatprep.subr.bf16.mxu0 0
        %1478 = vmatpush1.bf16.msra.mxu0 0
        %1479 = vmatprep.subr.bf16.mxu0 0
        %1480 = vmatpush1.bf16.msra.mxu0 0
        %1481 = vmatprep.subr.bf16.mxu0 0
        %1482 = vmatpush1.bf16.msra.mxu0 0
        %1483 = vmatprep.subr.bf16.mxu0 0
        %1484 = vmatpush1.bf16.msra.mxu0 0
        %1485 = vmatprep.subr.bf16.mxu0 0
        %1486 = vmatpush1.bf16.msra.mxu0 0
        %1487 = vmatprep.subr.bf16.mxu0 0
        %1488 = vmatpush1.bf16.msra.mxu0 0
        %1489 = vmatprep.subr.bf16.mxu0 0
        %1490 = vmatpush1.bf16.msra.mxu0 0
        %1491 = vmatprep.subr.bf16.mxu0 0
        %1492 = vmatpush1.bf16.msra.mxu0 0
        %1493 = vmatprep.subr.bf16.mxu0 0
        %1494 = vmatpush1.bf16.msra.mxu0 0
        %1495 = vmatprep.subr.bf16.mxu0 0
        %1496 = vmatpush1.bf16.msra.mxu0 0
        %1497 = vmatprep.subr.bf16.mxu0 0
        %1498 = vmatpush1.bf16.msra.mxu0 0
        %1499 = vmatprep.subr.bf16.mxu0 0
        %1500 = vmatpush1.bf16.msra.mxu0 0
        %1501 = vmatprep.subr.bf16.mxu0 0
        %1502 = vmatpush1.bf16.msra.mxu0 0
        %1503 = vmatprep.mubr.bf16.mxu0 0
        %1504 = vmatmul.mubr.bf16.gmra.mrb[0].mxu0 %v1466
        %v1505 = vpop.f32.mrb[0].mxu0
        %v1506 = vadd.f32 0.0, %v1505
        %v1507 = vpop.f32.mrb[0].mxu0
        %v1508 = vpop.f32.mrb[0].mxu0
        %v1509 = vpop.f32.mrb[0].mxu0
        %1510 = vdwg.mxu0
        %1511 = vrot.lane.b32.xlu0 %v777, 64
        %v1512 = vpop.permute.xlu0 %1511
        %v1514 = vsel %vm887, %v1462, 0
        %v1517 = vsel %vm915, %v1512, 0
        %1519 = vmatprep.subr.bf16.mxu0 0
        %1520 = vmatpush1.bf16.msra.mxu0 %v1517
        %1521 = vmatprep.subr.bf16.mxu0 0
        %1522 = vmatpush1.bf16.msra.mxu0 0
        %1523 = vmatprep.subr.bf16.mxu0 0
        %1524 = vmatpush1.bf16.msra.mxu0 0
        %1525 = vmatprep.subr.bf16.mxu0 0
        %1526 = vmatpush1.bf16.msra.mxu0 0
        %1527 = vmatprep.subr.bf16.mxu0 0
        %1528 = vmatpush1.bf16.msra.mxu0 0
        %1529 = vmatprep.subr.bf16.mxu0 0
        %1530 = vmatpush1.bf16.msra.mxu0 0
        %1531 = vmatprep.subr.bf16.mxu0 0
        %1532 = vmatpush1.bf16.msra.mxu0 0
        %1533 = vmatprep.subr.bf16.mxu0 0
        %1534 = vmatpush1.bf16.msra.mxu0 0
        %1535 = vmatprep.subr.bf16.mxu0 0
        %1536 = vmatpush1.bf16.msra.mxu0 0
        %1537 = vmatprep.subr.bf16.mxu0 0
        %1538 = vmatpush1.bf16.msra.mxu0 0
        %1539 = vmatprep.subr.bf16.mxu0 0
        %1540 = vmatpush1.bf16.msra.mxu0 0
        %1541 = vmatprep.subr.bf16.mxu0 0
        %1542 = vmatpush1.bf16.msra.mxu0 0
        %1543 = vmatprep.subr.bf16.mxu0 0
        %1544 = vmatpush1.bf16.msra.mxu0 0
        %1545 = vmatprep.subr.bf16.mxu0 0
        %1546 = vmatpush1.bf16.msra.mxu0 0
        %1547 = vmatprep.subr.bf16.mxu0 0
        %1548 = vmatpush1.bf16.msra.mxu0 0
        %1549 = vmatprep.subr.bf16.mxu0 0
        %1550 = vmatpush1.bf16.msra.mxu0 0
        %1551 = vmatprep.mubr.bf16.mxu0 0
        %1552 = vmatmul.mubr.bf16.gmra.mrb[0].mxu0 %v1514
        %v1553 = vpop.f32.mrb[0].mxu0
        %v1554 = vadd.f32 0.0, %v1553
        %v1555 = vpop.f32.mrb[0].mxu0
        %v1556 = vpop.f32.mrb[0].mxu0
        %v1557 = vpop.f32.mrb[0].mxu0
        %1558 = vdwg.mxu0
        %v1559 = vpack.c.bf16 %v1554, %v1506
        %v1564 = vunpack.c.l.b16 %v786
        %v1565 = vunpack.c.l.b16 %v787
        %v1566 = vunpack.c.l.b16 %v788
        %v1567 = vunpack.c.l.b16 %v789
        %v1568 = vpack.c.b16 %v1565, %v1564
        %v1569 = vpack.c.b16 %v1567, %v1566
        %v1573 = vsel %vm794, %v1559, 0
        %1575 = vmatprep.subr.bf16.mxu0 0
        %1576 = vmatpush1.bf16.msra.mxu0 %v1568
        %1577 = vmatprep.subr.bf16.mxu0 0
        %1578 = vmatpush1.bf16.msra.mxu0 %v1569
        %1579 = vmatprep.subr.bf16.mxu0 0
        %1580 = vmatpush1.bf16.msra.mxu0 0
        %1581 = vmatprep.subr.bf16.mxu0 0
        %1582 = vmatpush1.bf16.msra.mxu0 0
        %1583 = vmatprep.subr.bf16.mxu0 0
        %1584 = vmatpush1.bf16.msra.mxu0 0
        %1585 = vmatprep.subr.bf16.mxu0 0
        %1586 = vmatpush1.bf16.msra.mxu0 0
        %1587 = vmatprep.subr.bf16.mxu0 0
        %1588 = vmatpush1.bf16.msra.mxu0 0
        %1589 = vmatprep.subr.bf16.mxu0 0
        %1590 = vmatpush1.bf16.msra.mxu0 0
        %1591 = vmatprep.subr.bf16.mxu0 0
        %1592 = vmatpush1.bf16.msra.mxu0 0
        %1593 = vmatprep.subr.bf16.mxu0 0
        %1594 = vmatpush1.bf16.msra.mxu0 0
        %1595 = vmatprep.subr.bf16.mxu0 0
        %1596 = vmatpush1.bf16.msra.mxu0 0
        %1597 = vmatprep.subr.bf16.mxu0 0
        %1598 = vmatpush1.bf16.msra.mxu0 0
        %1599 = vmatprep.subr.bf16.mxu0 0
        %1600 = vmatpush1.bf16.msra.mxu0 0
        %1601 = vmatprep.subr.bf16.mxu0 0
        %1602 = vmatpush1.bf16.msra.mxu0 0
        %1603 = vmatprep.subr.bf16.mxu0 0
        %1604 = vmatpush1.bf16.msra.mxu0 0
        %1605 = vmatprep.subr.bf16.mxu0 0
        %1606 = vmatpush1.bf16.msra.mxu0 0
        %1607 = vmatprep.mubr.bf16.mxu0 0
        %1608 = vmatmul.mubr.bf16.gmra.mrb[0].mxu0 %v1573
        %v1609 = vpop.f32.mrb[0].mxu0
        %v1610 = vadd.f32 0.0, %v1609
        %v1611 = vpop.f32.mrb[0].mxu0
        %v1612 = vpop.f32.mrb[0].mxu0
        %v1613 = vadd.f32 0.0, %v1612
        %v1614 = vpop.f32.mrb[0].mxu0
        %1615 = vdwg.mxu0
        %v1616 = vadd.f32 %v1333, %v1610
        %v1617 = vadd.f32 %v1336, %v1613
        %1618 = vrot.lane.b32.xlu0 %v764, 32
        %v1619 = vpop.permute.xlu0 %1618
        %1620 = vrot.lane.b32.xlu0 %v770, 32
        %v1621 = vpop.permute.xlu0 %1620
        %v1623 = vsel %vm794, %v1619, 0
        %v1626 = vsel %vm794, %v1621, 0
        %1628 = vmatprep.subr.bf16.mxu0 0
        %1629 = vmatpush1.bf16.xpose.msra.mxu0 %v1626
        %1630 = vmatprep.subr.bf16.mxu0 0
        %1631 = vmatpush1.bf16.xpose.msra.mxu0 0
        %1632 = vmatprep.subr.bf16.mxu0 0
        %1633 = vmatpush1.bf16.xpose.msra.mxu0 0
        %1634 = vmatprep.subr.bf16.mxu0 0
        %1635 = vmatpush1.bf16.xpose.msra.mxu0 0
        %1636 = vmatprep.subr.bf16.mxu0 0
        %1637 = vmatpush1.bf16.xpose.msra.mxu0 0
        %1638 = vmatprep.subr.bf16.mxu0 0
        %1639 = vmatpush1.bf16.xpose.msra.mxu0 0
        %1640 = vmatprep.subr.bf16.mxu0 0
        %1641 = vmatpush1.bf16.xpose.msra.mxu0 0
        %1642 = vmatprep.subr.bf16.mxu0 0
        %1643 = vmatpush1.bf16.xpose.msra.mxu0 0
        %1644 = vmatprep.subr.bf16.mxu0 0
        %1645 = vmatpush1.bf16.xpose.msra.mxu0 0
        %1646 = vmatprep.subr.bf16.mxu0 0
        %1647 = vmatpush1.bf16.xpose.msra.mxu0 0
        %1648 = vmatprep.subr.bf16.mxu0 0
        %1649 = vmatpush1.bf16.xpose.msra.mxu0 0
        %1650 = vmatprep.subr.bf16.mxu0 0
        %1651 = vmatpush1.bf16.xpose.msra.mxu0 0
        %1652 = vmatprep.subr.bf16.mxu0 0
        %1653 = vmatpush1.bf16.xpose.msra.mxu0 0
        %1654 = vmatprep.subr.bf16.mxu0 0
        %1655 = vmatpush1.bf16.xpose.msra.mxu0 0
        %1656 = vmatprep.subr.bf16.mxu0 0
        %1657 = vmatpush1.bf16.xpose.msra.mxu0 0
        %1658 = vmatprep.subr.bf16.mxu0 0
        %1659 = vmatpush1.bf16.xpose.msra.mxu0 0
        %1660 = vmatprep.mubr.bf16.mxu0 0
        %1661 = vmatmul.mubr.bf16.gmra.mrb[0].mxu0 %v1623
        %v1662 = vpop.f32.mrb[0].mxu0
        %v1663 = vadd.f32 %v756, %v1662
        %v1664 = vpop.f32.mrb[0].mxu0
        %v1665 = vpop.f32.mrb[0].mxu0
        %v1666 = vpop.f32.mrb[0].mxu0
        %1667 = vdwg.mxu0
        %1668 = vrot.lane.b32.xlu0 %v765, 32
        %v1669 = vpop.permute.xlu0 %1668
        %1670 = vrot.lane.b32.xlu0 %v771, 32
        %v1671 = vpop.permute.xlu0 %1670
        %v1673 = vsel %vm794, %v1669, 0
        %v1676 = vsel %vm794, %v1671, 0
        %1678 = vmatprep.subr.bf16.mxu0 0
        %1679 = vmatpush1.bf16.xpose.msra.mxu0 %v1676
        %1680 = vmatprep.subr.bf16.mxu0 0
        %1681 = vmatpush1.bf16.xpose.msra.mxu0 0
        %1682 = vmatprep.subr.bf16.mxu0 0
        %1683 = vmatpush1.bf16.xpose.msra.mxu0 0
        %1684 = vmatprep.subr.bf16.mxu0 0
        %1685 = vmatpush1.bf16.xpose.msra.mxu0 0
        %1686 = vmatprep.subr.bf16.mxu0 0
        %1687 = vmatpush1.bf16.xpose.msra.mxu0 0
        %1688 = vmatprep.subr.bf16.mxu0 0
        %1689 = vmatpush1.bf16.xpose.msra.mxu0 0
        %1690 = vmatprep.subr.bf16.mxu0 0
        %1691 = vmatpush1.bf16.xpose.msra.mxu0 0
        %1692 = vmatprep.subr.bf16.mxu0 0
        %1693 = vmatpush1.bf16.xpose.msra.mxu0 0
        %1694 = vmatprep.subr.bf16.mxu0 0
        %1695 = vmatpush1.bf16.xpose.msra.mxu0 0
        %1696 = vmatprep.subr.bf16.mxu0 0
        %1697 = vmatpush1.bf16.xpose.msra.mxu0 0
        %1698 = vmatprep.subr.bf16.mxu0 0
        %1699 = vmatpush1.bf16.xpose.msra.mxu0 0
        %1700 = vmatprep.subr.bf16.mxu0 0
        %1701 = vmatpush1.bf16.xpose.msra.mxu0 0
        %1702 = vmatprep.subr.bf16.mxu0 0
        %1703 = vmatpush1.bf16.xpose.msra.mxu0 0
        %1704 = vmatprep.subr.bf16.mxu0 0
        %1705 = vmatpush1.bf16.xpose.msra.mxu0 0
        %1706 = vmatprep.subr.bf16.mxu0 0
        %1707 = vmatpush1.bf16.xpose.msra.mxu0 0
        %1708 = vmatprep.subr.bf16.mxu0 0
        %1709 = vmatpush1.bf16.xpose.msra.mxu0 0
        %1710 = vmatprep.mubr.bf16.mxu0 0
        %1711 = vmatmul.mubr.bf16.gmra.mrb[0].mxu0 %v1673
        %v1712 = vpop.f32.mrb[0].mxu0
        %v1713 = vadd.f32 %v757, %v1712
        %v1714 = vpop.f32.mrb[0].mxu0
        %v1715 = vpop.f32.mrb[0].mxu0
        %v1716 = vpop.f32.mrb[0].mxu0
        %1717 = vdwg.mxu0
        %v1718 = vsel %vm887, %v1663, -inf
        %1719 = vmax.xlane.f32.xlu0 %v1718
        %v1720 = vpop.xlane.xlu0 %1719
        %v1721 = vsel %vm887, %v1713, -inf
        %1722 = vmax.xlane.f32.xlu0 %v1721
        %v1723 = vpop.xlane.xlu0 %1722
        %v1724 = vsub.f32 %v1663, %v1720
        %v1725 = vsub.f32 %v1713, %v1723
        %v1726 = vmul.f32 %v1724, 1.442695
        %v1727 = vpow.pop %v1726
        %v1728 = vmul.f32 %v1725, 1.442695
        %v1729 = vpow.pop %v1728
        %v1730 = vsel %vm887, %v1727, 0.0
        %1731 = vadd.xlane.f32.xlu0 %v1730
        %v1732 = vpop.xlane.xlu0 %1731
        %v1733 = vsel %vm887, %v1729, 0.0
        %1734 = vadd.xlane.f32.xlu0 %v1733
        %v1735 = vpop.xlane.xlu0 %1734
        %v1736 = vrcp.pop %v1732
        %v1737 = vrcp.pop %v1735
        %v1738 = vmul.f32 %v1727, %v1736
        %v1739 = vmul.f32 %v1729, %v1737
        %v1740 = vpack.c.bf16 %v1738, %v1738
        %v1741 = vpack.c.bf16 %v1739, %v1739
        %1742 = vrot.lane.b32.xlu0 %v776, 32
        %v1743 = vpop.permute.xlu0 %1742
        %v1745 = vsel %vm887, %v1740, 0
        %v1748 = vsel %vm915, %v1743, 0
        %1750 = vmatprep.subr.bf16.mxu0 0
        %1751 = vmatpush1.bf16.msra.mxu0 %v1748
        %1752 = vmatprep.subr.bf16.mxu0 0
        %1753 = vmatpush1.bf16.msra.mxu0 0
        %1754 = vmatprep.subr.bf16.mxu0 0
        %1755 = vmatpush1.bf16.msra.mxu0 0
        %1756 = vmatprep.subr.bf16.mxu0 0
        %1757 = vmatpush1.bf16.msra.mxu0 0
        %1758 = vmatprep.subr.bf16.mxu0 0
        %1759 = vmatpush1.bf16.msra.mxu0 0
        %1760 = vmatprep.subr.bf16.mxu0 0
        %1761 = vmatpush1.bf16.msra.mxu0 0
        %1762 = vmatprep.subr.bf16.mxu0 0
        %1763 = vmatpush1.bf16.msra.mxu0 0
        %1764 = vmatprep.subr.bf16.mxu0 0
        %1765 = vmatpush1.bf16.msra.mxu0 0
        %1766 = vmatprep.subr.bf16.mxu0 0
        %1767 = vmatpush1.bf16.msra.mxu0 0
        %1768 = vmatprep.subr.bf16.mxu0 0
        %1769 = vmatpush1.bf16.msra.mxu0 0
        %1770 = vmatprep.subr.bf16.mxu0 0
        %1771 = vmatpush1.bf16.msra.mxu0 0
        %1772 = vmatprep.subr.bf16.mxu0 0
        %1773 = vmatpush1.bf16.msra.mxu0 0
        %1774 = vmatprep.subr.bf16.mxu0 0
        %1775 = vmatpush1.bf16.msra.mxu0 0
        %1776 = vmatprep.subr.bf16.mxu0 0
        %1777 = vmatpush1.bf16.msra.mxu0 0
        %1778 = vmatprep.subr.bf16.mxu0 0
        %1779 = vmatpush1.bf16.msra.mxu0 0
        %1780 = vmatprep.subr.bf16.mxu0 0
        %1781 = vmatpush1.bf16.msra.mxu0 0
        %1782 = vmatprep.mubr.bf16.mxu0 0
        %1783 = vmatmul.mubr.bf16.gmra.mrb[0].mxu0 %v1745
        %v1784 = vpop.f32.mrb[0].mxu0
        %v1785 = vadd.f32 0.0, %v1784
        %v1786 = vpop.f32.mrb[0].mxu0
        %v1787 = vpop.f32.mrb[0].mxu0
        %v1788 = vpop.f32.mrb[0].mxu0
        %1789 = vdwg.mxu0
        %1790 = vrot.lane.b32.xlu0 %v777, 32
        %v1791 = vpop.permute.xlu0 %1790
        %v1793 = vsel %vm887, %v1741, 0
        %v1796 = vsel %vm915, %v1791, 0
        %1798 = vmatprep.subr.bf16.mxu0 0
        %1799 = vmatpush1.bf16.msra.mxu0 %v1796
        %1800 = vmatprep.subr.bf16.mxu0 0
        %1801 = vmatpush1.bf16.msra.mxu0 0
        %1802 = vmatprep.subr.bf16.mxu0 0
        %1803 = vmatpush1.bf16.msra.mxu0 0
        %1804 = vmatprep.subr.bf16.mxu0 0
        %1805 = vmatpush1.bf16.msra.mxu0 0
        %1806 = vmatprep.subr.bf16.mxu0 0
        %1807 = vmatpush1.bf16.msra.mxu0 0
        %1808 = vmatprep.subr.bf16.mxu0 0
        %1809 = vmatpush1.bf16.msra.mxu0 0
        %1810 = vmatprep.subr.bf16.mxu0 0
        %1811 = vmatpush1.bf16.msra.mxu0 0
        %1812 = vmatprep.subr.bf16.mxu0 0
        %1813 = vmatpush1.bf16.msra.mxu0 0
        %1814 = vmatprep.subr.bf16.mxu0 0
        %1815 = vmatpush1.bf16.msra.mxu0 0
        %1816 = vmatprep.subr.bf16.mxu0 0
        %1817 = vmatpush1.bf16.msra.mxu0 0
        %1818 = vmatprep.subr.bf16.mxu0 0
        %1819 = vmatpush1.bf16.msra.mxu0 0
        %1820 = vmatprep.subr.bf16.mxu0 0
        %1821 = vmatpush1.bf16.msra.mxu0 0
        %1822 = vmatprep.subr.bf16.mxu0 0
        %1823 = vmatpush1.bf16.msra.mxu0 0
        %1824 = vmatprep.subr.bf16.mxu0 0
        %1825 = vmatpush1.bf16.msra.mxu0 0
        %1826 = vmatprep.subr.bf16.mxu0 0
        %1827 = vmatpush1.bf16.msra.mxu0 0
        %1828 = vmatprep.subr.bf16.mxu0 0
        %1829 = vmatpush1.bf16.msra.mxu0 0
        %1830 = vmatprep.mubr.bf16.mxu0 0
        %1831 = vmatmul.mubr.bf16.gmra.mrb[0].mxu0 %v1793
        %v1832 = vpop.f32.mrb[0].mxu0
        %v1833 = vadd.f32 0.0, %v1832
        %v1834 = vpop.f32.mrb[0].mxu0
        %v1835 = vpop.f32.mrb[0].mxu0
        %v1836 = vpop.f32.mrb[0].mxu0
        %1837 = vdwg.mxu0
        %v1838 = vpack.c.bf16 %v1833, %v1785
        %v1843 = vunpack.c.l.b16 %v790
        %v1844 = vunpack.c.l.b16 %v791
        %v1845 = vunpack.c.l.b16 %v792
        %v1846 = vunpack.c.l.b16 %v793
        %v1847 = vpack.c.b16 %v1844, %v1843
        %v1848 = vpack.c.b16 %v1846, %v1845
        %v1852 = vsel %vm794, %v1838, 0
        %1854 = vmatprep.subr.bf16.mxu0 0
        %1855 = vmatpush1.bf16.msra.mxu0 %v1847
        %1856 = vmatprep.subr.bf16.mxu0 0
        %1857 = vmatpush1.bf16.msra.mxu0 %v1848
        %1858 = vmatprep.subr.bf16.mxu0 0
        %1859 = vmatpush1.bf16.msra.mxu0 0
        %1860 = vmatprep.subr.bf16.mxu0 0
        %1861 = vmatpush1.bf16.msra.mxu0 0
        %1862 = vmatprep.subr.bf16.mxu0 0
        %1863 = vmatpush1.bf16.msra.mxu0 0
        %1864 = vmatprep.subr.bf16.mxu0 0
        %1865 = vmatpush1.bf16.msra.mxu0 0
        %1866 = vmatprep.subr.bf16.mxu0 0
        %1867 = vmatpush1.bf16.msra.mxu0 0
        %1868 = vmatprep.subr.bf16.mxu0 0
        %1869 = vmatpush1.bf16.msra.mxu0 0
        %1870 = vmatprep.subr.bf16.mxu0 0
        %1871 = vmatpush1.bf16.msra.mxu0 0
        %1872 = vmatprep.subr.bf16.mxu0 0
        %1873 = vmatpush1.bf16.msra.mxu0 0
        %1874 = vmatprep.subr.bf16.mxu0 0
        %1875 = vmatpush1.bf16.msra.mxu0 0
        %1876 = vmatprep.subr.bf16.mxu0 0
        %1877 = vmatpush1.bf16.msra.mxu0 0
        %1878 = vmatprep.subr.bf16.mxu0 0
        %1879 = vmatpush1.bf16.msra.mxu0 0
        %1880 = vmatprep.subr.bf16.mxu0 0
        %1881 = vmatpush1.bf16.msra.mxu0 0
        %1882 = vmatprep.subr.bf16.mxu0 0
        %1883 = vmatpush1.bf16.msra.mxu0 0
        %1884 = vmatprep.subr.bf16.mxu0 0
        %1885 = vmatpush1.bf16.msra.mxu0 0
        %1886 = vmatprep.mubr.bf16.mxu0 0
        %1887 = vmatmul.mubr.bf16.gmra.mrb[0].mxu0 %v1852
        %v1888 = vpop.f32.mrb[0].mxu0
        %v1889 = vadd.f32 0.0, %v1888
        %v1890 = vpop.f32.mrb[0].mxu0
        %v1891 = vpop.f32.mrb[0].mxu0
        %v1892 = vadd.f32 0.0, %v1891
        %v1893 = vpop.f32.mrb[0].mxu0
        %1894 = vdwg.mxu0
        %v1895 = vadd.f32 %v1616, %v1889
        %v1896 = vadd.f32 %v1617, %v1892
        %v1897 = vld [vmem:[%s442 + $0x3] sm:$0x1]
        %v1899 = vlaneseq
        %v1900 = vshrl.u32 %v1899, 7
        %v1901 = vsub.s32 0, %v1900
        %v1902 = vrot.slane %v1897, %v1901
        %v1904 = vadd.f32 %v1895, %v1902
        %v1905 = vadd.f32 %v1896, %v1902
        %v1906 = vadd.f32 %v1904, %v457
        %v1907 = vadd.f32 %v1905, %v458
        %1908 = vadd.xlane.f32.xlu0 %v1906
        %v1909 = vpop.xlane.xlu0 %1908
        %1910 = vadd.xlane.f32.xlu0 %v1907
        %v1911 = vpop.xlane.xlu0 %1910
        %v1912 = vmul.f32 %v1909, %v463
        %v1913 = vmul.f32 %v1911, %v463
        %v1914 = vsub.f32 %v1906, %v1912
        %v1915 = vsub.f32 %v1907, %v1913
        %v1916 = vmul.f32 %v1914, %v1914
        %v1917 = vmul.f32 %v1915, %v1915
        %1918 = vadd.xlane.f32.xlu0 %v1916
        %v1919 = vpop.xlane.xlu0 %1918
        %1920 = vadd.xlane.f32.xlu0 %v1917
        %v1921 = vpop.xlane.xlu0 %1920
        %v1922 = vmul.f32 %v1919, %v463
        %v1923 = vmul.f32 %v1921, %v463
        %v1924 = vadd.f32 %v1922, 1e-06
        %v1925 = vadd.f32 %v1923, 1e-06
        %v1926 = vrsqrt.pop %v1924
        %v1927 = vrsqrt.pop %v1925
        %v1928 = vmul.f32 %v1914, %v1926
        %v1929 = vmul.f32 %v1915, %v1927
        %v1930 = vlaneseq
        %v1931 = vshrl.u32 %v1930, 7
        %v1932 = vsub.s32 2, %v1931
        %v1933 = vrot.slane %v456, %v1932
        %v1934 = vmul.f32 %v1928, %v1933
        %v1935 = vmul.f32 %v1929, %v1933
        %v1936 = vlaneseq
        %v1937 = vshrl.u32 %v1936, 7
        %v1938 = vsub.s32 3, %v1937
        %v1939 = vrot.slane %v456, %v1938
        %v1940 = vadd.f32 %v1934, %v1939
        %v1941 = vadd.f32 %v1935, %v1939
        %v1942 = vpack.c.bf16 %v1941, %v1940
        %v1943 = vld [vmem:[%s387 + $0x10] sm:$0xf]
        %v1944 = vld [vmem:[%s387 + $0x48] sm:$0xf]
        %v1945 = vld [vmem:[%s387 + $0x80] sm:$0xf]
        %v1946 = vld [vmem:[%s387 + $0xb8] sm:$0xf]
        %v1947 = vld [vmem:[%s387 + $0xf0] sm:$0xf]
        %v1948 = vld [vmem:[%s387 + $0x128] sm:$0xf]
        %v1949 = vld [vmem:[%s387 + $0x160] sm:$0xf]
        %v1950 = vld [vmem:[%s387 + $0x198] sm:$0xf]
        %v1951 = vld [vmem:[%s387 + $0x1d0] sm:$0xf]
        %v1952 = vld [vmem:[%s387 + $0x208] sm:$0xf]
        %v1953 = vld [vmem:[%s387 + $0x240] sm:$0xf]
        %v1954 = vld [vmem:[%s387 + $0x278] sm:$0xf]
        %v1955 = vld [vmem:[%s387 + $0x2b0] sm:$0xf]
        %v1956 = vld [vmem:[%s387 + $0x2e8] sm:$0xf]
        %v1957 = vld [vmem:[%s387 + $0x320] sm:$0xf]
        %v1958 = vld [vmem:[%s387 + $0x358] sm:$0xf]
        %v1959 = vld [vmem:[%s442 + $0x4] sm:$0x1]
        %v1961 = vlaneseq
        %v1962 = vshrl.u32 %v1961, 7
        %v1963 = vsub.s32 0, %v1962
        %v1964 = vrot.slane %v1959, %v1963
        %v1982 = vunpack.c.l.b16 %v1943
        %v1983 = vunpack.c.l.b16 %v1944
        %v1984 = vunpack.c.l.b16 %v1945
        %v1985 = vunpack.c.l.b16 %v1946
        %v1986 = vunpack.c.l.b16 %v1947
        %v1987 = vunpack.c.l.b16 %v1948
        %v1988 = vunpack.c.l.b16 %v1949
        %v1989 = vunpack.c.l.b16 %v1950
        %v1990 = vunpack.c.l.b16 %v1951
        %v1991 = vunpack.c.l.b16 %v1952
        %v1992 = vunpack.c.l.b16 %v1953
        %v1993 = vunpack.c.l.b16 %v1954
        %v1994 = vunpack.c.l.b16 %v1955
        %v1995 = vunpack.c.l.b16 %v1956
        %v1996 = vunpack.c.l.b16 %v1957
        %v1997 = vunpack.c.l.b16 %v1958
        %v1998 = vpack.c.b16 %v1983, %v1982
        %v1999 = vpack.c.b16 %v1985, %v1984
        %v2000 = vpack.c.b16 %v1987, %v1986
        %v2001 = vpack.c.b16 %v1989, %v1988
        %v2002 = vpack.c.b16 %v1991, %v1990
        %v2003 = vpack.c.b16 %v1993, %v1992
        %v2004 = vpack.c.b16 %v1995, %v1994
        %v2005 = vpack.c.b16 %v1997, %v1996
        %2014 = vmatprep.subr.bf16.mxu0 0
        %2015 = vmatpush1.bf16.msra.mxu0 %v1998
        %2016 = vmatprep.subr.bf16.mxu0 0
        %2017 = vmatpush1.bf16.msra.mxu0 %v1999
        %2018 = vmatprep.subr.bf16.mxu0 0
        %2019 = vmatpush1.bf16.msra.mxu0 %v2000
        %2020 = vmatprep.subr.bf16.mxu0 0
        %2021 = vmatpush1.bf16.msra.mxu0 %v2001
        %2022 = vmatprep.subr.bf16.mxu0 0
        %2023 = vmatpush1.bf16.msra.mxu0 %v2002
        %2024 = vmatprep.subr.bf16.mxu0 0
        %2025 = vmatpush1.bf16.msra.mxu0 %v2003
        %2026 = vmatprep.subr.bf16.mxu0 0
        %2027 = vmatpush1.bf16.msra.mxu0 %v2004
        %2028 = vmatprep.subr.bf16.mxu0 0
        %2029 = vmatpush1.bf16.msra.mxu0 %v2005
        %2030 = vmatprep.subr.bf16.mxu0 0
        %2031 = vmatpush1.bf16.msra.mxu0 0
        %2032 = vmatprep.subr.bf16.mxu0 0
        %2033 = vmatpush1.bf16.msra.mxu0 0
        %2034 = vmatprep.subr.bf16.mxu0 0
        %2035 = vmatpush1.bf16.msra.mxu0 0
        %2036 = vmatprep.subr.bf16.mxu0 0
        %2037 = vmatpush1.bf16.msra.mxu0 0
        %2038 = vmatprep.subr.bf16.mxu0 0
        %2039 = vmatpush1.bf16.msra.mxu0 0
        %2040 = vmatprep.subr.bf16.mxu0 0
        %2041 = vmatpush1.bf16.msra.mxu0 0
        %2042 = vmatprep.subr.bf16.mxu0 0
        %2043 = vmatpush1.bf16.msra.mxu0 0
        %2044 = vmatprep.subr.bf16.mxu0 0
        %2045 = vmatpush1.bf16.msra.mxu0 0
        %2046 = vmatprep.mubr.bf16.mxu0 0
        %2047 = vmatmul.mubr.bf16.gmra.mrb[0].mxu0 %v1942
        %v2048 = vpop.f32.mrb[0].mxu0
        %v2049 = vadd.f32 %v1964, %v2048
        %v2050 = vpop.f32.mrb[0].mxu0
        %v2051 = vpop.f32.mrb[0].mxu0
        %v2052 = vadd.f32 %v1964, %v2051
        %v2053 = vpop.f32.mrb[0].mxu0
        %2054 = vdwg.mxu0
        %v2055 = vld [vmem:[%s1] sm:$0xf]
        %v2056 = vld [vmem:[%s1 + $0x4] sm:$0xf]
        %v2057 = vld [vmem:[%s387 + $0x14] sm:$0xff]
        %v2058 = vld [vmem:[%s387 + $0x4c] sm:$0xff]
        %v2059 = vld [vmem:[%s387 + $0x84] sm:$0xff]
        %v2060 = vld [vmem:[%s387 + $0xbc] sm:$0xff]
        %v2061 = vld [vmem:[%s387 + $0xf4] sm:$0xff]
        %v2062 = vld [vmem:[%s387 + $0x12c] sm:$0xff]
        %v2063 = vld [vmem:[%s387 + $0x164] sm:$0xff]
        %v2064 = vld [vmem:[%s387 + $0x19c] sm:$0xff]
        %v2065 = vld [vmem:[%s387 + $0x1d4] sm:$0xff]
        %v2066 = vld [vmem:[%s387 + $0x20c] sm:$0xff]
        %v2067 = vld [vmem:[%s387 + $0x244] sm:$0xff]
        %v2068 = vld [vmem:[%s387 + $0x27c] sm:$0xff]
        %v2069 = vld [vmem:[%s387 + $0x2b4] sm:$0xff]
        %v2070 = vld [vmem:[%s387 + $0x2ec] sm:$0xff]
        %v2071 = vld [vmem:[%s387 + $0x324] sm:$0xff]
        %v2072 = vld [vmem:[%s387 + $0x35c] sm:$0xff]
        %v2073 = vld [vmem:[%s442 + $0x5] sm:$0x3]
        %v2075 = vlaneseq
        %v2076 = vshrl.u32 %v2075, 7
        %v2077 = vsub.s32 0, %v2076
        %v2078 = vrot.slane %v2073, %v2077
        %v2079 = vlaneseq
        %v2080 = vshrl.u32 %v2079, 7
        %v2081 = vsub.s32 1, %v2080
        %v2082 = vrot.slane %v2073, %v2081
        %v2087 = vunpack.c.l.b16 %v2055
        %v2088 = vunpack.c.l.b16 %v2056
        %v2089 = vpack.c.b16 %v2088, %v2087
        %v2107 = vunpack.c.l.b16 %v2057
        %v2108 = vunpack.c.h.b16 %v2057
        %v2109 = vunpack.c.l.b16 %v2058
        %v2110 = vunpack.c.h.b16 %v2058
        %v2111 = vunpack.c.l.b16 %v2059
        %v2112 = vunpack.c.h.b16 %v2059
        %v2113 = vunpack.c.l.b16 %v2060
        %v2114 = vunpack.c.h.b16 %v2060
        %v2115 = vunpack.c.l.b16 %v2061
        %v2116 = vunpack.c.h.b16 %v2061
        %v2117 = vunpack.c.l.b16 %v2062
        %v2118 = vunpack.c.h.b16 %v2062
        %v2119 = vunpack.c.l.b16 %v2063
        %v2120 = vunpack.c.h.b16 %v2063
        %v2121 = vunpack.c.l.b16 %v2064
        %v2122 = vunpack.c.h.b16 %v2064
        %v2123 = vunpack.c.l.b16 %v2065
        %v2124 = vunpack.c.h.b16 %v2065
        %v2125 = vunpack.c.l.b16 %v2066
        %v2126 = vunpack.c.h.b16 %v2066
        %v2127 = vunpack.c.l.b16 %v2067
        %v2128 = vunpack.c.h.b16 %v2067
        %v2129 = vunpack.c.l.b16 %v2068
        %v2130 = vunpack.c.h.b16 %v2068
        %v2131 = vunpack.c.l.b16 %v2069
        %v2132 = vunpack.c.h.b16 %v2069
        %v2133 = vunpack.c.l.b16 %v2070
        %v2134 = vunpack.c.h.b16 %v2070
        %v2135 = vunpack.c.l.b16 %v2071
        %v2136 = vunpack.c.h.b16 %v2071
        %v2137 = vunpack.c.l.b16 %v2072
        %v2138 = vunpack.c.h.b16 %v2072
        %v2139 = vpack.c.b16 %v2109, %v2107
        %v2140 = vpack.c.b16 %v2110, %v2108
        %v2141 = vpack.c.b16 %v2113, %v2111
        %v2142 = vpack.c.b16 %v2114, %v2112
        %v2143 = vpack.c.b16 %v2117, %v2115
        %v2144 = vpack.c.b16 %v2118, %v2116
        %v2145 = vpack.c.b16 %v2121, %v2119
        %v2146 = vpack.c.b16 %v2122, %v2120
        %v2147 = vpack.c.b16 %v2125, %v2123
        %v2148 = vpack.c.b16 %v2126, %v2124
        %v2149 = vpack.c.b16 %v2129, %v2127
        %v2150 = vpack.c.b16 %v2130, %v2128
        %v2151 = vpack.c.b16 %v2133, %v2131
        %v2152 = vpack.c.b16 %v2134, %v2132
        %v2153 = vpack.c.b16 %v2137, %v2135
        %v2154 = vpack.c.b16 %v2138, %v2136
        %2171 = vmatprep.subr.bf16.mxu0 %v2140
        %2172 = vmatpush1.bf16.msra.mxu0 %v2139
        %2173 = vmatprep.subr.bf16.mxu0 %v2142
        %2174 = vmatpush1.bf16.msra.mxu0 %v2141
        %2175 = vmatprep.subr.bf16.mxu0 %v2144
        %2176 = vmatpush1.bf16.msra.mxu0 %v2143
        %2177 = vmatprep.subr.bf16.mxu0 %v2146
        %2178 = vmatpush1.bf16.msra.mxu0 %v2145
        %2179 = vmatprep.subr.bf16.mxu0 %v2148
        %2180 = vmatpush1.bf16.msra.mxu0 %v2147
        %2181 = vmatprep.subr.bf16.mxu0 %v2150
        %2182 = vmatpush1.bf16.msra.mxu0 %v2149
        %2183 = vmatprep.subr.bf16.mxu0 %v2152
        %2184 = vmatpush1.bf16.msra.mxu0 %v2151
        %2185 = vmatprep.subr.bf16.mxu0 %v2154
        %2186 = vmatpush1.bf16.msra.mxu0 %v2153
        %2187 = vmatprep.subr.bf16.mxu0 0
        %2188 = vmatpush1.bf16.msra.mxu0 0
        %2189 = vmatprep.subr.bf16.mxu0 0
        %2190 = vmatpush1.bf16.msra.mxu0 0
        %2191 = vmatprep.subr.bf16.mxu0 0
        %2192 = vmatpush1.bf16.msra.mxu0 0
        %2193 = vmatprep.subr.bf16.mxu0 0
        %2194 = vmatpush1.bf16.msra.mxu0 0
        %2195 = vmatprep.subr.bf16.mxu0 0
        %2196 = vmatpush1.bf16.msra.mxu0 0
        %2197 = vmatprep.subr.bf16.mxu0 0
        %2198 = vmatpush1.bf16.msra.mxu0 0
        %2199 = vmatprep.subr.bf16.mxu0 0
        %2200 = vmatpush1.bf16.msra.mxu0 0
        %2201 = vmatprep.subr.bf16.mxu0 0
        %2202 = vmatpush1.bf16.msra.mxu0 0
        %2203 = vmatprep.mubr.bf16.mxu0 0
        %2204 = vmatmul.mubr.bf16.gmra.mrb[0].mxu0 %v2089
        %v2205 = vpop.f32.mrb[0].mxu0
        %v2206 = vadd.f32 %v2078, %v2205
        %v2207 = vpop.f32.mrb[0].mxu0
        %v2208 = vadd.f32 %v2082, %v2207
        %v2209 = vpop.f32.mrb[0].mxu0
        %v2210 = vadd.f32 %v2078, %v2209
        %v2211 = vpop.f32.mrb[0].mxu0
        %v2212 = vadd.f32 %v2082, %v2211
        %2213 = vdwg.mxu0
        %v2214 = vld [vmem:[%s4] sm:$0xff]
        %v2215 = vld [vmem:[%s4 + $0x8] sm:$0xff]
        %v2216 = vmul.f32 %v2049, 0.17677669
        %v2217 = vmul.f32 %v2052, 0.17677669
        %v2218 = vpack.c.bf16 %v2217, %v2216
        %v2220 = vunpack.c.l.b16 %v2218
        %v2221 = vunpack.c.h.b16 %v2218
        %v2222 = vpack.c.b16 %v2220, %v2220
        %v2223 = vpack.c.b16 %v2221, %v2221
        %v2224 = vpack.c.bf16 %v2210, %v2206
        %v2226 = vunpack.c.l.b16 %v2224
        %v2227 = vunpack.c.h.b16 %v2224
        %v2228 = vpack.c.b16 %v2226, %v2226
        %v2229 = vpack.c.b16 %v2227, %v2227
        %v2230 = vpack.c.bf16 %v2212, %v2208
        %v2232 = vunpack.c.l.b16 %v2230
        %v2233 = vunpack.c.h.b16 %v2230
        %v2234 = vpack.c.b16 %v2232, %v2232
        %v2235 = vpack.c.b16 %v2233, %v2233
        %v2236 = vld [vmem:[%s387 + $0x1c] sm:$0xf]
        %v2237 = vld [vmem:[%s387 + $0x54] sm:$0xf]
        %v2238 = vld [vmem:[%s387 + $0x8c] sm:$0xf]
        %v2239 = vld [vmem:[%s387 + $0xc4] sm:$0xf]
        %v2240 = vld [vmem:[%s387 + $0xfc] sm:$0xf]
        %v2241 = vld [vmem:[%s387 + $0x134] sm:$0xf]
        %v2242 = vld [vmem:[%s387 + $0x16c] sm:$0xf]
        %v2243 = vld [vmem:[%s387 + $0x1a4] sm:$0xf]
        %v2244 = vld [vmem:[%s387 + $0x1dc] sm:$0xf]
        %v2245 = vld [vmem:[%s387 + $0x214] sm:$0xf]
        %v2246 = vld [vmem:[%s387 + $0x24c] sm:$0xf]
        %v2247 = vld [vmem:[%s387 + $0x284] sm:$0xf]
        %v2248 = vld [vmem:[%s387 + $0x2bc] sm:$0xf]
        %v2249 = vld [vmem:[%s387 + $0x2f4] sm:$0xf]
        %v2250 = vld [vmem:[%s387 + $0x32c] sm:$0xf]
        %v2251 = vld [vmem:[%s387 + $0x364] sm:$0xf]
        %v2253 = vsel %vm794, %v2222, 0
        %v2256 = vsel %vm794, %v2228, 0
        %2258 = vmatprep.subr.bf16.mxu0 0
        %2259 = vmatpush1.bf16.xpose.msra.mxu0 %v2256
        %2260 = vmatprep.subr.bf16.mxu0 0
        %2261 = vmatpush1.bf16.xpose.msra.mxu0 0
        %2262 = vmatprep.subr.bf16.mxu0 0
        %2263 = vmatpush1.bf16.xpose.msra.mxu0 0
        %2264 = vmatprep.subr.bf16.mxu0 0
        %2265 = vmatpush1.bf16.xpose.msra.mxu0 0
        %2266 = vmatprep.subr.bf16.mxu0 0
        %2267 = vmatpush1.bf16.xpose.msra.mxu0 0
        %2268 = vmatprep.subr.bf16.mxu0 0
        %2269 = vmatpush1.bf16.xpose.msra.mxu0 0
        %2270 = vmatprep.subr.bf16.mxu0 0
        %2271 = vmatpush1.bf16.xpose.msra.mxu0 0
        %2272 = vmatprep.subr.bf16.mxu0 0
        %2273 = vmatpush1.bf16.xpose.msra.mxu0 0
        %2274 = vmatprep.subr.bf16.mxu0 0
        %2275 = vmatpush1.bf16.xpose.msra.mxu0 0
        %2276 = vmatprep.subr.bf16.mxu0 0
        %2277 = vmatpush1.bf16.xpose.msra.mxu0 0
        %2278 = vmatprep.subr.bf16.mxu0 0
        %2279 = vmatpush1.bf16.xpose.msra.mxu0 0
        %2280 = vmatprep.subr.bf16.mxu0 0
        %2281 = vmatpush1.bf16.xpose.msra.mxu0 0
        %2282 = vmatprep.subr.bf16.mxu0 0
        %2283 = vmatpush1.bf16.xpose.msra.mxu0 0
        %2284 = vmatprep.subr.bf16.mxu0 0
        %2285 = vmatpush1.bf16.xpose.msra.mxu0 0
        %2286 = vmatprep.subr.bf16.mxu0 0
        %2287 = vmatpush1.bf16.xpose.msra.mxu0 0
        %2288 = vmatprep.subr.bf16.mxu0 0
        %2289 = vmatpush1.bf16.xpose.msra.mxu0 0
        %2290 = vmatprep.mubr.bf16.mxu0 0
        %2291 = vmatmul.mubr.bf16.gmra.mrb[0].mxu0 %v2253
        %v2292 = vpop.f32.mrb[0].mxu0
        %v2293 = vadd.f32 %v2214, %v2292
        %v2294 = vpop.f32.mrb[0].mxu0
        %v2295 = vpop.f32.mrb[0].mxu0
        %v2296 = vpop.f32.mrb[0].mxu0
        %2297 = vdwg.mxu0
        %v2299 = vsel %vm794, %v2223, 0
        %v2302 = vsel %vm794, %v2229, 0
        %2304 = vmatprep.subr.bf16.mxu0 0
        %2305 = vmatpush1.bf16.xpose.msra.mxu0 %v2302
        %2306 = vmatprep.subr.bf16.mxu0 0
        %2307 = vmatpush1.bf16.xpose.msra.mxu0 0
        %2308 = vmatprep.subr.bf16.mxu0 0
        %2309 = vmatpush1.bf16.xpose.msra.mxu0 0
        %2310 = vmatprep.subr.bf16.mxu0 0
        %2311 = vmatpush1.bf16.xpose.msra.mxu0 0
        %2312 = vmatprep.subr.bf16.mxu0 0
        %2313 = vmatpush1.bf16.xpose.msra.mxu0 0
        %2314 = vmatprep.subr.bf16.mxu0 0
        %2315 = vmatpush1.bf16.xpose.msra.mxu0 0
        %2316 = vmatprep.subr.bf16.mxu0 0
        %2317 = vmatpush1.bf16.xpose.msra.mxu0 0
        %2318 = vmatprep.subr.bf16.mxu0 0
        %2319 = vmatpush1.bf16.xpose.msra.mxu0 0
        %2320 = vmatprep.subr.bf16.mxu0 0
        %2321 = vmatpush1.bf16.xpose.msra.mxu0 0
        %2322 = vmatprep.subr.bf16.mxu0 0
        %2323 = vmatpush1.bf16.xpose.msra.mxu0 0
        %2324 = vmatprep.subr.bf16.mxu0 0
        %2325 = vmatpush1.bf16.xpose.msra.mxu0 0
        %2326 = vmatprep.subr.bf16.mxu0 0
        %2327 = vmatpush1.bf16.xpose.msra.mxu0 0
        %2328 = vmatprep.subr.bf16.mxu0 0
        %2329 = vmatpush1.bf16.xpose.msra.mxu0 0
        %2330 = vmatprep.subr.bf16.mxu0 0
        %2331 = vmatpush1.bf16.xpose.msra.mxu0 0
        %2332 = vmatprep.subr.bf16.mxu0 0
        %2333 = vmatpush1.bf16.xpose.msra.mxu0 0
        %2334 = vmatprep.subr.bf16.mxu0 0
        %2335 = vmatpush1.bf16.xpose.msra.mxu0 0
        %2336 = vmatprep.mubr.bf16.mxu0 0
        %2337 = vmatmul.mubr.bf16.gmra.mrb[0].mxu0 %v2299
        %v2338 = vpop.f32.mrb[0].mxu0
        %v2339 = vadd.f32 %v2215, %v2338
        %v2340 = vpop.f32.mrb[0].mxu0
        %v2341 = vpop.f32.mrb[0].mxu0
        %v2342 = vpop.f32.mrb[0].mxu0
        %2343 = vdwg.mxu0
        %v2344 = vsel %vm887, %v2293, -inf
        %2345 = vmax.xlane.f32.xlu0 %v2344
        %v2346 = vpop.xlane.xlu0 %2345
        %v2347 = vsel %vm887, %v2339, -inf
        %2348 = vmax.xlane.f32.xlu0 %v2347
        %v2349 = vpop.xlane.xlu0 %2348
        %v2350 = vsub.f32 %v2293, %v2346
        %v2351 = vsub.f32 %v2339, %v2349
        %v2352 = vmul.f32 %v2350, 1.442695
        %v2353 = vpow.pop %v2352
        %v2354 = vmul.f32 %v2351, 1.442695
        %v2355 = vpow.pop %v2354
        %v2356 = vsel %vm887, %v2353, 0.0
        %2357 = vadd.xlane.f32.xlu0 %v2356
        %v2358 = vpop.xlane.xlu0 %2357
        %v2359 = vsel %vm887, %v2355, 0.0
        %2360 = vadd.xlane.f32.xlu0 %v2359
        %v2361 = vpop.xlane.xlu0 %2360
        %v2362 = vrcp.pop %v2358
        %v2363 = vrcp.pop %v2361
        %v2364 = vmul.f32 %v2353, %v2362
        %v2365 = vmul.f32 %v2355, %v2363
        %v2366 = vpack.c.bf16 %v2364, %v2364
        %v2367 = vpack.c.bf16 %v2365, %v2365
        %v2369 = vsel %vm887, %v2366, 0
        %v2372 = vsel %vm915, %v2234, 0
        %2374 = vmatprep.subr.bf16.mxu0 0
        %2375 = vmatpush1.bf16.msra.mxu0 %v2372
        %2376 = vmatprep.subr.bf16.mxu0 0
        %2377 = vmatpush1.bf16.msra.mxu0 0
        %2378 = vmatprep.subr.bf16.mxu0 0
        %2379 = vmatpush1.bf16.msra.mxu0 0
        %2380 = vmatprep.subr.bf16.mxu0 0
        %2381 = vmatpush1.bf16.msra.mxu0 0
        %2382 = vmatprep.subr.bf16.mxu0 0
        %2383 = vmatpush1.bf16.msra.mxu0 0
        %2384 = vmatprep.subr.bf16.mxu0 0
        %2385 = vmatpush1.bf16.msra.mxu0 0
        %2386 = vmatprep.subr.bf16.mxu0 0
        %2387 = vmatpush1.bf16.msra.mxu0 0
        %2388 = vmatprep.subr.bf16.mxu0 0
        %2389 = vmatpush1.bf16.msra.mxu0 0
        %2390 = vmatprep.subr.bf16.mxu0 0
        %2391 = vmatpush1.bf16.msra.mxu0 0
        %2392 = vmatprep.subr.bf16.mxu0 0
        %2393 = vmatpush1.bf16.msra.mxu0 0
        %2394 = vmatprep.subr.bf16.mxu0 0
        %2395 = vmatpush1.bf16.msra.mxu0 0
        %2396 = vmatprep.subr.bf16.mxu0 0
        %2397 = vmatpush1.bf16.msra.mxu0 0
        %2398 = vmatprep.subr.bf16.mxu0 0
        %2399 = vmatpush1.bf16.msra.mxu0 0
        %2400 = vmatprep.subr.bf16.mxu0 0
        %2401 = vmatpush1.bf16.msra.mxu0 0
        %2402 = vmatprep.subr.bf16.mxu0 0
        %2403 = vmatpush1.bf16.msra.mxu0 0
        %2404 = vmatprep.subr.bf16.mxu0 0
        %2405 = vmatpush1.bf16.msra.mxu0 0
        %2406 = vmatprep.mubr.bf16.mxu0 0
        %2407 = vmatmul.mubr.bf16.gmra.mrb[0].mxu0 %v2369
        %v2408 = vpop.f32.mrb[0].mxu0
        %v2409 = vadd.f32 0.0, %v2408
        %v2410 = vpop.f32.mrb[0].mxu0
        %v2411 = vpop.f32.mrb[0].mxu0
        %v2412 = vpop.f32.mrb[0].mxu0
        %2413 = vdwg.mxu0
        %v2415 = vsel %vm887, %v2367, 0
        %v2418 = vsel %vm915, %v2235, 0
        %2420 = vmatprep.subr.bf16.mxu0 0
        %2421 = vmatpush1.bf16.msra.mxu0 %v2418
        %2422 = vmatprep.subr.bf16.mxu0 0
        %2423 = vmatpush1.bf16.msra.mxu0 0
        %2424 = vmatprep.subr.bf16.mxu0 0
        %2425 = vmatpush1.bf16.msra.mxu0 0
        %2426 = vmatprep.subr.bf16.mxu0 0
        %2427 = vmatpush1.bf16.msra.mxu0 0
        %2428 = vmatprep.subr.bf16.mxu0 0
        %2429 = vmatpush1.bf16.msra.mxu0 0
        %2430 = vmatprep.subr.bf16.mxu0 0
        %2431 = vmatpush1.bf16.msra.mxu0 0
        %2432 = vmatprep.subr.bf16.mxu0 0
        %2433 = vmatpush1.bf16.msra.mxu0 0
        %2434 = vmatprep.subr.bf16.mxu0 0
        %2435 = vmatpush1.bf16.msra.mxu0 0
        %2436 = vmatprep.subr.bf16.mxu0 0
        %2437 = vmatpush1.bf16.msra.mxu0 0
        %2438 = vmatprep.subr.bf16.mxu0 0
        %2439 = vmatpush1.bf16.msra.mxu0 0
        %2440 = vmatprep.subr.bf16.mxu0 0
        %2441 = vmatpush1.bf16.msra.mxu0 0
        %2442 = vmatprep.subr.bf16.mxu0 0
        %2443 = vmatpush1.bf16.msra.mxu0 0
        %2444 = vmatprep.subr.bf16.mxu0 0
        %2445 = vmatpush1.bf16.msra.mxu0 0
        %2446 = vmatprep.subr.bf16.mxu0 0
        %2447 = vmatpush1.bf16.msra.mxu0 0
        %2448 = vmatprep.subr.bf16.mxu0 0
        %2449 = vmatpush1.bf16.msra.mxu0 0
        %2450 = vmatprep.subr.bf16.mxu0 0
        %2451 = vmatpush1.bf16.msra.mxu0 0
        %2452 = vmatprep.mubr.bf16.mxu0 0
        %2453 = vmatmul.mubr.bf16.gmra.mrb[0].mxu0 %v2415
        %v2454 = vpop.f32.mrb[0].mxu0
        %v2455 = vadd.f32 0.0, %v2454
        %v2456 = vpop.f32.mrb[0].mxu0
        %v2457 = vpop.f32.mrb[0].mxu0
        %v2458 = vpop.f32.mrb[0].mxu0
        %2459 = vdwg.mxu0
        %v2460 = vpack.c.bf16 %v2455, %v2409
        %2461 = vrot.lane.b32.xlu0 %v2222, 96
        %v2462 = vpop.permute.xlu0 %2461
        %2463 = vrot.lane.b32.xlu0 %v2228, 96
        %v2464 = vpop.permute.xlu0 %2463
        %v2466 = vsel %vm794, %v2462, 0
        %v2469 = vsel %vm794, %v2464, 0
        %2471 = vmatprep.subr.bf16.mxu0 0
        %2472 = vmatpush1.bf16.xpose.msra.mxu0 %v2469
        %2473 = vmatprep.subr.bf16.mxu0 0
        %2474 = vmatpush1.bf16.xpose.msra.mxu0 0
        %2475 = vmatprep.subr.bf16.mxu0 0
        %2476 = vmatpush1.bf16.xpose.msra.mxu0 0
        %2477 = vmatprep.subr.bf16.mxu0 0
        %2478 = vmatpush1.bf16.xpose.msra.mxu0 0
        %2479 = vmatprep.subr.bf16.mxu0 0
        %2480 = vmatpush1.bf16.xpose.msra.mxu0 0
        %2481 = vmatprep.subr.bf16.mxu0 0
        %2482 = vmatpush1.bf16.xpose.msra.mxu0 0
        %2483 = vmatprep.subr.bf16.mxu0 0
        %2484 = vmatpush1.bf16.xpose.msra.mxu0 0
        %2485 = vmatprep.subr.bf16.mxu0 0
        %2486 = vmatpush1.bf16.xpose.msra.mxu0 0
        %2487 = vmatprep.subr.bf16.mxu0 0
        %2488 = vmatpush1.bf16.xpose.msra.mxu0 0
        %2489 = vmatprep.subr.bf16.mxu0 0
        %2490 = vmatpush1.bf16.xpose.msra.mxu0 0
        %2491 = vmatprep.subr.bf16.mxu0 0
        %2492 = vmatpush1.bf16.xpose.msra.mxu0 0
        %2493 = vmatprep.subr.bf16.mxu0 0
        %2494 = vmatpush1.bf16.xpose.msra.mxu0 0
        %2495 = vmatprep.subr.bf16.mxu0 0
        %2496 = vmatpush1.bf16.xpose.msra.mxu0 0
        %2497 = vmatprep.subr.bf16.mxu0 0
        %2498 = vmatpush1.bf16.xpose.msra.mxu0 0
        %2499 = vmatprep.subr.bf16.mxu0 0
        %2500 = vmatpush1.bf16.xpose.msra.mxu0 0
        %2501 = vmatprep.subr.bf16.mxu0 0
        %2502 = vmatpush1.bf16.xpose.msra.mxu0 0
        %2503 = vmatprep.mubr.bf16.mxu0 0
        %2504 = vmatmul.mubr.bf16.gmra.mrb[0].mxu0 %v2466
        %v2505 = vpop.f32.mrb[0].mxu0
        %v2506 = vadd.f32 %v2214, %v2505
        %v2507 = vpop.f32.mrb[0].mxu0
        %v2508 = vpop.f32.mrb[0].mxu0
        %v2509 = vpop.f32.mrb[0].mxu0
        %2510 = vdwg.mxu0
        %2511 = vrot.lane.b32.xlu0 %v2223, 96
        %v2512 = vpop.permute.xlu0 %2511
        %2513 = vrot.lane.b32.xlu0 %v2229, 96
        %v2514 = vpop.permute.xlu0 %2513
        %v2516 = vsel %vm794, %v2512, 0
        %v2519 = vsel %vm794, %v2514, 0
        %2521 = vmatprep.subr.bf16.mxu0 0
        %2522 = vmatpush1.bf16.xpose.msra.mxu0 %v2519
        %2523 = vmatprep.subr.bf16.mxu0 0
        %2524 = vmatpush1.bf16.xpose.msra.mxu0 0
        %2525 = vmatprep.subr.bf16.mxu0 0
        %2526 = vmatpush1.bf16.xpose.msra.mxu0 0
        %2527 = vmatprep.subr.bf16.mxu0 0
        %2528 = vmatpush1.bf16.xpose.msra.mxu0 0
        %2529 = vmatprep.subr.bf16.mxu0 0
        %2530 = vmatpush1.bf16.xpose.msra.mxu0 0
        %2531 = vmatprep.subr.bf16.mxu0 0
        %2532 = vmatpush1.bf16.xpose.msra.mxu0 0
        %2533 = vmatprep.subr.bf16.mxu0 0
        %2534 = vmatpush1.bf16.xpose.msra.mxu0 0
        %2535 = vmatprep.subr.bf16.mxu0 0
        %2536 = vmatpush1.bf16.xpose.msra.mxu0 0
        %2537 = vmatprep.subr.bf16.mxu0 0
        %2538 = vmatpush1.bf16.xpose.msra.mxu0 0
        %2539 = vmatprep.subr.bf16.mxu0 0
        %2540 = vmatpush1.bf16.xpose.msra.mxu0 0
        %2541 = vmatprep.subr.bf16.mxu0 0
        %2542 = vmatpush1.bf16.xpose.msra.mxu0 0
        %2543 = vmatprep.subr.bf16.mxu0 0
        %2544 = vmatpush1.bf16.xpose.msra.mxu0 0
        %2545 = vmatprep.subr.bf16.mxu0 0
        %2546 = vmatpush1.bf16.xpose.msra.mxu0 0
        %2547 = vmatprep.subr.bf16.mxu0 0
        %2548 = vmatpush1.bf16.xpose.msra.mxu0 0
        %2549 = vmatprep.subr.bf16.mxu0 0
        %2550 = vmatpush1.bf16.xpose.msra.mxu0 0
        %2551 = vmatprep.subr.bf16.mxu0 0
        %2552 = vmatpush1.bf16.xpose.msra.mxu0 0
        %2553 = vmatprep.mubr.bf16.mxu0 0
        %2554 = vmatmul.mubr.bf16.gmra.mrb[0].mxu0 %v2516
        %v2555 = vpop.f32.mrb[0].mxu0
        %v2556 = vadd.f32 %v2215, %v2555
        %v2557 = vpop.f32.mrb[0].mxu0
        %v2558 = vpop.f32.mrb[0].mxu0
        %v2559 = vpop.f32.mrb[0].mxu0
        %2560 = vdwg.mxu0
        %v2561 = vsel %vm887, %v2506, -inf
        %2562 = vmax.xlane.f32.xlu0 %v2561
        %v2563 = vpop.xlane.xlu0 %2562
        %v2564 = vsel %vm887, %v2556, -inf
        %2565 = vmax.xlane.f32.xlu0 %v2564
        %v2566 = vpop.xlane.xlu0 %2565
        %v2567 = vsub.f32 %v2506, %v2563
        %v2568 = vsub.f32 %v2556, %v2566
        %v2569 = vmul.f32 %v2567, 1.442695
        %v2570 = vpow.pop %v2569
        %v2571 = vmul.f32 %v2568, 1.442695
        %v2572 = vpow.pop %v2571
        %v2573 = vsel %vm887, %v2570, 0.0
        %2574 = vadd.xlane.f32.xlu0 %v2573
        %v2575 = vpop.xlane.xlu0 %2574
        %v2576 = vsel %vm887, %v2572, 0.0
        %2577 = vadd.xlane.f32.xlu0 %v2576
        %v2578 = vpop.xlane.xlu0 %2577
        %v2579 = vrcp.pop %v2575
        %v2580 = vrcp.pop %v2578
        %v2581 = vmul.f32 %v2570, %v2579
        %v2582 = vmul.f32 %v2572, %v2580
        %v2583 = vpack.c.bf16 %v2581, %v2581
        %v2584 = vpack.c.bf16 %v2582, %v2582
        %2585 = vrot.lane.b32.xlu0 %v2234, 96
        %v2586 = vpop.permute.xlu0 %2585
        %v2588 = vsel %vm887, %v2583, 0
        %v2591 = vsel %vm915, %v2586, 0
        %2593 = vmatprep.subr.bf16.mxu0 0
        %2594 = vmatpush1.bf16.msra.mxu0 %v2591
        %2595 = vmatprep.subr.bf16.mxu0 0
        %2596 = vmatpush1.bf16.msra.mxu0 0
        %2597 = vmatprep.subr.bf16.mxu0 0
        %2598 = vmatpush1.bf16.msra.mxu0 0
        %2599 = vmatprep.subr.bf16.mxu0 0
        %2600 = vmatpush1.bf16.msra.mxu0 0
        %2601 = vmatprep.subr.bf16.mxu0 0
        %2602 = vmatpush1.bf16.msra.mxu0 0
        %2603 = vmatprep.subr.bf16.mxu0 0
        %2604 = vmatpush1.bf16.msra.mxu0 0
        %2605 = vmatprep.subr.bf16.mxu0 0
        %2606 = vmatpush1.bf16.msra.mxu0 0
        %2607 = vmatprep.subr.bf16.mxu0 0
        %2608 = vmatpush1.bf16.msra.mxu0 0
        %2609 = vmatprep.subr.bf16.mxu0 0
        %2610 = vmatpush1.bf16.msra.mxu0 0
        %2611 = vmatprep.subr.bf16.mxu0 0
        %2612 = vmatpush1.bf16.msra.mxu0 0
        %2613 = vmatprep.subr.bf16.mxu0 0
        %2614 = vmatpush1.bf16.msra.mxu0 0
        %2615 = vmatprep.subr.bf16.mxu0 0
        %2616 = vmatpush1.bf16.msra.mxu0 0
        %2617 = vmatprep.subr.bf16.mxu0 0
        %2618 = vmatpush1.bf16.msra.mxu0 0
        %2619 = vmatprep.subr.bf16.mxu0 0
        %2620 = vmatpush1.bf16.msra.mxu0 0
        %2621 = vmatprep.subr.bf16.mxu0 0
        %2622 = vmatpush1.bf16.msra.mxu0 0
        %2623 = vmatprep.subr.bf16.mxu0 0
        %2624 = vmatpush1.bf16.msra.mxu0 0
        %2625 = vmatprep.mubr.bf16.mxu0 0
        %2626 = vmatmul.mubr.bf16.gmra.mrb[0].mxu0 %v2588
        %v2627 = vpop.f32.mrb[0].mxu0
        %v2628 = vadd.f32 0.0, %v2627
        %v2629 = vpop.f32.mrb[0].mxu0
        %v2630 = vpop.f32.mrb[0].mxu0
        %v2631 = vpop.f32.mrb[0].mxu0
        %2632 = vdwg.mxu0
        %2633 = vrot.lane.b32.xlu0 %v2235, 96
        %v2634 = vpop.permute.xlu0 %2633
        %v2636 = vsel %vm887, %v2584, 0
        %v2639 = vsel %vm915, %v2634, 0
        %2641 = vmatprep.subr.bf16.mxu0 0
        %2642 = vmatpush1.bf16.msra.mxu0 %v2639
        %2643 = vmatprep.subr.bf16.mxu0 0
        %2644 = vmatpush1.bf16.msra.mxu0 0
        %2645 = vmatprep.subr.bf16.mxu0 0
        %2646 = vmatpush1.bf16.msra.mxu0 0
        %2647 = vmatprep.subr.bf16.mxu0 0
        %2648 = vmatpush1.bf16.msra.mxu0 0
        %2649 = vmatprep.subr.bf16.mxu0 0
        %2650 = vmatpush1.bf16.msra.mxu0 0
        %2651 = vmatprep.subr.bf16.mxu0 0
        %2652 = vmatpush1.bf16.msra.mxu0 0
        %2653 = vmatprep.subr.bf16.mxu0 0
        %2654 = vmatpush1.bf16.msra.mxu0 0
        %2655 = vmatprep.subr.bf16.mxu0 0
        %2656 = vmatpush1.bf16.msra.mxu0 0
        %2657 = vmatprep.subr.bf16.mxu0 0
        %2658 = vmatpush1.bf16.msra.mxu0 0
        %2659 = vmatprep.subr.bf16.mxu0 0
        %2660 = vmatpush1.bf16.msra.mxu0 0
        %2661 = vmatprep.subr.bf16.mxu0 0
        %2662 = vmatpush1.bf16.msra.mxu0 0
        %2663 = vmatprep.subr.bf16.mxu0 0
        %2664 = vmatpush1.bf16.msra.mxu0 0
        %2665 = vmatprep.subr.bf16.mxu0 0
        %2666 = vmatpush1.bf16.msra.mxu0 0
        %2667 = vmatprep.subr.bf16.mxu0 0
        %2668 = vmatpush1.bf16.msra.mxu0 0
        %2669 = vmatprep.subr.bf16.mxu0 0
        %2670 = vmatpush1.bf16.msra.mxu0 0
        %2671 = vmatprep.subr.bf16.mxu0 0
        %2672 = vmatpush1.bf16.msra.mxu0 0
        %2673 = vmatprep.mubr.bf16.mxu0 0
        %2674 = vmatmul.mubr.bf16.gmra.mrb[0].mxu0 %v2636
        %v2675 = vpop.f32.mrb[0].mxu0
        %v2676 = vadd.f32 0.0, %v2675
        %v2677 = vpop.f32.mrb[0].mxu0
        %v2678 = vpop.f32.mrb[0].mxu0
        %v2679 = vpop.f32.mrb[0].mxu0
        %2680 = vdwg.mxu0
        %v2681 = vpack.c.bf16 %v2676, %v2628
        %v2686 = vunpack.c.l.b16 %v2240
        %v2687 = vunpack.c.l.b16 %v2241
        %v2688 = vunpack.c.l.b16 %v2242
        %v2689 = vunpack.c.l.b16 %v2243
        %v2690 = vpack.c.b16 %v2687, %v2686
        %v2691 = vpack.c.b16 %v2689, %v2688
        %v2695 = vsel %vm794, %v2681, 0
        %2697 = vmatprep.subr.bf16.mxu0 0
        %2698 = vmatpush1.bf16.msra.mxu0 %v2690
        %2699 = vmatprep.subr.bf16.mxu0 0
        %2700 = vmatpush1.bf16.msra.mxu0 %v2691
        %2701 = vmatprep.subr.bf16.mxu0 0
        %2702 = vmatpush1.bf16.msra.mxu0 0
        %2703 = vmatprep.subr.bf16.mxu0 0
        %2704 = vmatpush1.bf16.msra.mxu0 0
        %2705 = vmatprep.subr.bf16.mxu0 0
        %2706 = vmatpush1.bf16.msra.mxu0 0
        %2707 = vmatprep.subr.bf16.mxu0 0
        %2708 = vmatpush1.bf16.msra.mxu0 0
        %2709 = vmatprep.subr.bf16.mxu0 0
        %2710 = vmatpush1.bf16.msra.mxu0 0
        %2711 = vmatprep.subr.bf16.mxu0 0
        %2712 = vmatpush1.bf16.msra.mxu0 0
        %2713 = vmatprep.subr.bf16.mxu0 0
        %2714 = vmatpush1.bf16.msra.mxu0 0
        %2715 = vmatprep.subr.bf16.mxu0 0
        %2716 = vmatpush1.bf16.msra.mxu0 0
        %2717 = vmatprep.subr.bf16.mxu0 0
        %2718 = vmatpush1.bf16.msra.mxu0 0
        %2719 = vmatprep.subr.bf16.mxu0 0
        %2720 = vmatpush1.bf16.msra.mxu0 0
        %2721 = vmatprep.subr.bf16.mxu0 0
        %2722 = vmatpush1.bf16.msra.mxu0 0
        %2723 = vmatprep.subr.bf16.mxu0 0
        %2724 = vmatpush1.bf16.msra.mxu0 0
        %2725 = vmatprep.subr.bf16.mxu0 0
        %2726 = vmatpush1.bf16.msra.mxu0 0
        %2727 = vmatprep.subr.bf16.mxu0 0
        %2728 = vmatpush1.bf16.msra.mxu0 0
        %2729 = vmatprep.mubr.bf16.mxu0 0
        %2730 = vmatmul.mubr.bf16.gmra.mrb[0].mxu0 %v2695
        %v2731 = vpop.f32.mrb[0].mxu0
        %v2732 = vadd.f32 0.0, %v2731
        %v2733 = vpop.f32.mrb[0].mxu0
        %v2734 = vpop.f32.mrb[0].mxu0
        %v2735 = vadd.f32 0.0, %v2734
        %v2736 = vpop.f32.mrb[0].mxu0
        %2737 = vdwg.mxu0
        %v2742 = vunpack.c.l.b16 %v2236
        %v2743 = vunpack.c.l.b16 %v2237
        %v2744 = vunpack.c.l.b16 %v2238
        %v2745 = vunpack.c.l.b16 %v2239
        %v2746 = vpack.c.b16 %v2743, %v2742
        %v2747 = vpack.c.b16 %v2745, %v2744
        %v2751 = vsel %vm794, %v2460, 0
        %2753 = vmatprep.subr.bf16.mxu0 0
        %2754 = vmatpush1.bf16.msra.mxu0 %v2746
        %2755 = vmatprep.subr.bf16.mxu0 0
        %2756 = vmatpush1.bf16.msra.mxu0 %v2747
        %2757 = vmatprep.subr.bf16.mxu0 0
        %2758 = vmatpush1.bf16.msra.mxu0 0
        %2759 = vmatprep.subr.bf16.mxu0 0
        %2760 = vmatpush1.bf16.msra.mxu0 0
        %2761 = vmatprep.subr.bf16.mxu0 0
        %2762 = vmatpush1.bf16.msra.mxu0 0
        %2763 = vmatprep.subr.bf16.mxu0 0
        %2764 = vmatpush1.bf16.msra.mxu0 0
        %2765 = vmatprep.subr.bf16.mxu0 0
        %2766 = vmatpush1.bf16.msra.mxu0 0
        %2767 = vmatprep.subr.bf16.mxu0 0
        %2768 = vmatpush1.bf16.msra.mxu0 0
        %2769 = vmatprep.subr.bf16.mxu0 0
        %2770 = vmatpush1.bf16.msra.mxu0 0
        %2771 = vmatprep.subr.bf16.mxu0 0
        %2772 = vmatpush1.bf16.msra.mxu0 0
        %2773 = vmatprep.subr.bf16.mxu0 0
        %2774 = vmatpush1.bf16.msra.mxu0 0
        %2775 = vmatprep.subr.bf16.mxu0 0
        %2776 = vmatpush1.bf16.msra.mxu0 0
        %2777 = vmatprep.subr.bf16.mxu0 0
        %2778 = vmatpush1.bf16.msra.mxu0 0
        %2779 = vmatprep.subr.bf16.mxu0 0
        %2780 = vmatpush1.bf16.msra.mxu0 0
        %2781 = vmatprep.subr.bf16.mxu0 0
        %2782 = vmatpush1.bf16.msra.mxu0 0
        %2783 = vmatprep.subr.bf16.mxu0 0
        %2784 = vmatpush1.bf16.msra.mxu0 0
        %2785 = vmatprep.mubr.bf16.mxu0 0
        %2786 = vmatmul.mubr.bf16.gmra.mrb[0].mxu0 %v2751
        %v2787 = vpop.f32.mrb[0].mxu0
        %v2788 = vadd.f32 %v2732, %v2787
        %v2789 = vpop.f32.mrb[0].mxu0
        %v2790 = vpop.f32.mrb[0].mxu0
        %v2791 = vadd.f32 %v2735, %v2790
        %v2792 = vpop.f32.mrb[0].mxu0
        %2793 = vdwg.mxu0
        %2794 = vrot.lane.b32.xlu0 %v2222, 64
        %v2795 = vpop.permute.xlu0 %2794
        %2796 = vrot.lane.b32.xlu0 %v2228, 64
        %v2797 = vpop.permute.xlu0 %2796
        %v2799 = vsel %vm794, %v2795, 0
        %v2802 = vsel %vm794, %v2797, 0
        %2804 = vmatprep.subr.bf16.mxu0 0
        %2805 = vmatpush1.bf16.xpose.msra.mxu0 %v2802
        %2806 = vmatprep.subr.bf16.mxu0 0
        %2807 = vmatpush1.bf16.xpose.msra.mxu0 0
        %2808 = vmatprep.subr.bf16.mxu0 0
        %2809 = vmatpush1.bf16.xpose.msra.mxu0 0
        %2810 = vmatprep.subr.bf16.mxu0 0
        %2811 = vmatpush1.bf16.xpose.msra.mxu0 0
        %2812 = vmatprep.subr.bf16.mxu0 0
        %2813 = vmatpush1.bf16.xpose.msra.mxu0 0
        %2814 = vmatprep.subr.bf16.mxu0 0
        %2815 = vmatpush1.bf16.xpose.msra.mxu0 0
        %2816 = vmatprep.subr.bf16.mxu0 0
        %2817 = vmatpush1.bf16.xpose.msra.mxu0 0
        %2818 = vmatprep.subr.bf16.mxu0 0
        %2819 = vmatpush1.bf16.xpose.msra.mxu0 0
        %2820 = vmatprep.subr.bf16.mxu0 0
        %2821 = vmatpush1.bf16.xpose.msra.mxu0 0
        %2822 = vmatprep.subr.bf16.mxu0 0
        %2823 = vmatpush1.bf16.xpose.msra.mxu0 0
        %2824 = vmatprep.subr.bf16.mxu0 0
        %2825 = vmatpush1.bf16.xpose.msra.mxu0 0
        %2826 = vmatprep.subr.bf16.mxu0 0
        %2827 = vmatpush1.bf16.xpose.msra.mxu0 0
        %2828 = vmatprep.subr.bf16.mxu0 0
        %2829 = vmatpush1.bf16.xpose.msra.mxu0 0
        %2830 = vmatprep.subr.bf16.mxu0 0
        %2831 = vmatpush1.bf16.xpose.msra.mxu0 0
        %2832 = vmatprep.subr.bf16.mxu0 0
        %2833 = vmatpush1.bf16.xpose.msra.mxu0 0
        %2834 = vmatprep.subr.bf16.mxu0 0
        %2835 = vmatpush1.bf16.xpose.msra.mxu0 0
        %2836 = vmatprep.mubr.bf16.mxu0 0
        %2837 = vmatmul.mubr.bf16.gmra.mrb[0].mxu0 %v2799
        %v2838 = vpop.f32.mrb[0].mxu0
        %v2839 = vadd.f32 %v2214, %v2838
        %v2840 = vpop.f32.mrb[0].mxu0
        %v2841 = vpop.f32.mrb[0].mxu0
        %v2842 = vpop.f32.mrb[0].mxu0
        %2843 = vdwg.mxu0
        %2844 = vrot.lane.b32.xlu0 %v2223, 64
        %v2845 = vpop.permute.xlu0 %2844
        %2846 = vrot.lane.b32.xlu0 %v2229, 64
        %v2847 = vpop.permute.xlu0 %2846
        %v2849 = vsel %vm794, %v2845, 0
        %v2852 = vsel %vm794, %v2847, 0
        %2854 = vmatprep.subr.bf16.mxu0 0
        %2855 = vmatpush1.bf16.xpose.msra.mxu0 %v2852
        %2856 = vmatprep.subr.bf16.mxu0 0
        %2857 = vmatpush1.bf16.xpose.msra.mxu0 0
        %2858 = vmatprep.subr.bf16.mxu0 0
        %2859 = vmatpush1.bf16.xpose.msra.mxu0 0
        %2860 = vmatprep.subr.bf16.mxu0 0
        %2861 = vmatpush1.bf16.xpose.msra.mxu0 0
        %2862 = vmatprep.subr.bf16.mxu0 0
        %2863 = vmatpush1.bf16.xpose.msra.mxu0 0
        %2864 = vmatprep.subr.bf16.mxu0 0
        %2865 = vmatpush1.bf16.xpose.msra.mxu0 0
        %2866 = vmatprep.subr.bf16.mxu0 0
        %2867 = vmatpush1.bf16.xpose.msra.mxu0 0
        %2868 = vmatprep.subr.bf16.mxu0 0
        %2869 = vmatpush1.bf16.xpose.msra.mxu0 0
        %2870 = vmatprep.subr.bf16.mxu0 0
        %2871 = vmatpush1.bf16.xpose.msra.mxu0 0
        %2872 = vmatprep.subr.bf16.mxu0 0
        %2873 = vmatpush1.bf16.xpose.msra.mxu0 0
        %2874 = vmatprep.subr.bf16.mxu0 0
        %2875 = vmatpush1.bf16.xpose.msra.mxu0 0
        %2876 = vmatprep.subr.bf16.mxu0 0
        %2877 = vmatpush1.bf16.xpose.msra.mxu0 0
        %2878 = vmatprep.subr.bf16.mxu0 0
        %2879 = vmatpush1.bf16.xpose.msra.mxu0 0
        %2880 = vmatprep.subr.bf16.mxu0 0
        %2881 = vmatpush1.bf16.xpose.msra.mxu0 0
        %2882 = vmatprep.subr.bf16.mxu0 0
        %2883 = vmatpush1.bf16.xpose.msra.mxu0 0
        %2884 = vmatprep.subr.bf16.mxu0 0
        %2885 = vmatpush1.bf16.xpose.msra.mxu0 0
        %2886 = vmatprep.mubr.bf16.mxu0 0
        %2887 = vmatmul.mubr.bf16.gmra.mrb[0].mxu0 %v2849
        %v2888 = vpop.f32.mrb[0].mxu0
        %v2889 = vadd.f32 %v2215, %v2888
        %v2890 = vpop.f32.mrb[0].mxu0
        %v2891 = vpop.f32.mrb[0].mxu0
        %v2892 = vpop.f32.mrb[0].mxu0
        %2893 = vdwg.mxu0
        %v2894 = vsel %vm887, %v2839, -inf
        %2895 = vmax.xlane.f32.xlu0 %v2894
        %v2896 = vpop.xlane.xlu0 %2895
        %v2897 = vsel %vm887, %v2889, -inf
        %2898 = vmax.xlane.f32.xlu0 %v2897
        %v2899 = vpop.xlane.xlu0 %2898
        %v2900 = vsub.f32 %v2839, %v2896
        %v2901 = vsub.f32 %v2889, %v2899
        %v2902 = vmul.f32 %v2900, 1.442695
        %v2903 = vpow.pop %v2902
        %v2904 = vmul.f32 %v2901, 1.442695
        %v2905 = vpow.pop %v2904
        %v2906 = vsel %vm887, %v2903, 0.0
        %2907 = vadd.xlane.f32.xlu0 %v2906
        %v2908 = vpop.xlane.xlu0 %2907
        %v2909 = vsel %vm887, %v2905, 0.0
        %2910 = vadd.xlane.f32.xlu0 %v2909
        %v2911 = vpop.xlane.xlu0 %2910
        %v2912 = vrcp.pop %v2908
        %v2913 = vrcp.pop %v2911
        %v2914 = vmul.f32 %v2903, %v2912
        %v2915 = vmul.f32 %v2905, %v2913
        %v2916 = vpack.c.bf16 %v2914, %v2914
        %v2917 = vpack.c.bf16 %v2915, %v2915
        %2918 = vrot.lane.b32.xlu0 %v2234, 64
        %v2919 = vpop.permute.xlu0 %2918
        %v2921 = vsel %vm887, %v2916, 0
        %v2924 = vsel %vm915, %v2919, 0
        %2926 = vmatprep.subr.bf16.mxu0 0
        %2927 = vmatpush1.bf16.msra.mxu0 %v2924
        %2928 = vmatprep.subr.bf16.mxu0 0
        %2929 = vmatpush1.bf16.msra.mxu0 0
        %2930 = vmatprep.subr.bf16.mxu0 0
        %2931 = vmatpush1.bf16.msra.mxu0 0
        %2932 = vmatprep.subr.bf16.mxu0 0
        %2933 = vmatpush1.bf16.msra.mxu0 0
        %2934 = vmatprep.subr.bf16.mxu0 0
        %2935 = vmatpush1.bf16.msra.mxu0 0
        %2936 = vmatprep.subr.bf16.mxu0 0
        %2937 = vmatpush1.bf16.msra.mxu0 0
        %2938 = vmatprep.subr.bf16.mxu0 0
        %2939 = vmatpush1.bf16.msra.mxu0 0
        %2940 = vmatprep.subr.bf16.mxu0 0
        %2941 = vmatpush1.bf16.msra.mxu0 0
        %2942 = vmatprep.subr.bf16.mxu0 0
        %2943 = vmatpush1.bf16.msra.mxu0 0
        %2944 = vmatprep.subr.bf16.mxu0 0
        %2945 = vmatpush1.bf16.msra.mxu0 0
        %2946 = vmatprep.subr.bf16.mxu0 0
        %2947 = vmatpush1.bf16.msra.mxu0 0
        %2948 = vmatprep.subr.bf16.mxu0 0
        %2949 = vmatpush1.bf16.msra.mxu0 0
        %2950 = vmatprep.subr.bf16.mxu0 0
        %2951 = vmatpush1.bf16.msra.mxu0 0
        %2952 = vmatprep.subr.bf16.mxu0 0
        %2953 = vmatpush1.bf16.msra.mxu0 0
        %2954 = vmatprep.subr.bf16.mxu0 0
        %2955 = vmatpush1.bf16.msra.mxu0 0
        %2956 = vmatprep.subr.bf16.mxu0 0
        %2957 = vmatpush1.bf16.msra.mxu0 0
        %2958 = vmatprep.mubr.bf16.mxu0 0
        %2959 = vmatmul.mubr.bf16.gmra.mrb[0].mxu0 %v2921
        %v2960 = vpop.f32.mrb[0].mxu0
        %v2961 = vadd.f32 0.0, %v2960
        %v2962 = vpop.f32.mrb[0].mxu0
        %v2963 = vpop.f32.mrb[0].mxu0
        %v2964 = vpop.f32.mrb[0].mxu0
        %2965 = vdwg.mxu0
        %2966 = vrot.lane.b32.xlu0 %v2235, 64
        %v2967 = vpop.permute.xlu0 %2966
        %v2969 = vsel %vm887, %v2917, 0
        %v2972 = vsel %vm915, %v2967, 0
        %2974 = vmatprep.subr.bf16.mxu0 0
        %2975 = vmatpush1.bf16.msra.mxu0 %v2972
        %2976 = vmatprep.subr.bf16.mxu0 0
        %2977 = vmatpush1.bf16.msra.mxu0 0
        %2978 = vmatprep.subr.bf16.mxu0 0
        %2979 = vmatpush1.bf16.msra.mxu0 0
        %2980 = vmatprep.subr.bf16.mxu0 0
        %2981 = vmatpush1.bf16.msra.mxu0 0
        %2982 = vmatprep.subr.bf16.mxu0 0
        %2983 = vmatpush1.bf16.msra.mxu0 0
        %2984 = vmatprep.subr.bf16.mxu0 0
        %2985 = vmatpush1.bf16.msra.mxu0 0
        %2986 = vmatprep.subr.bf16.mxu0 0
        %2987 = vmatpush1.bf16.msra.mxu0 0
        %2988 = vmatprep.subr.bf16.mxu0 0
        %2989 = vmatpush1.bf16.msra.mxu0 0
        %2990 = vmatprep.subr.bf16.mxu0 0
        %2991 = vmatpush1.bf16.msra.mxu0 0
        %2992 = vmatprep.subr.bf16.mxu0 0
        %2993 = vmatpush1.bf16.msra.mxu0 0
        %2994 = vmatprep.subr.bf16.mxu0 0
        %2995 = vmatpush1.bf16.msra.mxu0 0
        %2996 = vmatprep.subr.bf16.mxu0 0
        %2997 = vmatpush1.bf16.msra.mxu0 0
        %2998 = vmatprep.subr.bf16.mxu0 0
        %2999 = vmatpush1.bf16.msra.mxu0 0
        %3000 = vmatprep.subr.bf16.mxu0 0
        %3001 = vmatpush1.bf16.msra.mxu0 0
        %3002 = vmatprep.subr.bf16.mxu0 0
        %3003 = vmatpush1.bf16.msra.mxu0 0
        %3004 = vmatprep.subr.bf16.mxu0 0
        %3005 = vmatpush1.bf16.msra.mxu0 0
        %3006 = vmatprep.mubr.bf16.mxu0 0
        %3007 = vmatmul.mubr.bf16.gmra.mrb[0].mxu0 %v2969
        %v3008 = vpop.f32.mrb[0].mxu0
        %v3009 = vadd.f32 0.0, %v3008
        %v3010 = vpop.f32.mrb[0].mxu0
        %v3011 = vpop.f32.mrb[0].mxu0
        %v3012 = vpop.f32.mrb[0].mxu0
        %3013 = vdwg.mxu0
        %v3014 = vpack.c.bf16 %v3009, %v2961
        %v3019 = vunpack.c.l.b16 %v2244
        %v3020 = vunpack.c.l.b16 %v2245
        %v3021 = vunpack.c.l.b16 %v2246
        %v3022 = vunpack.c.l.b16 %v2247
        %v3023 = vpack.c.b16 %v3020, %v3019
        %v3024 = vpack.c.b16 %v3022, %v3021
        %v3028 = vsel %vm794, %v3014, 0
        %3030 = vmatprep.subr.bf16.mxu0 0
        %3031 = vmatpush1.bf16.msra.mxu0 %v3023
        %3032 = vmatprep.subr.bf16.mxu0 0
        %3033 = vmatpush1.bf16.msra.mxu0 %v3024
        %3034 = vmatprep.subr.bf16.mxu0 0
        %3035 = vmatpush1.bf16.msra.mxu0 0
        %3036 = vmatprep.subr.bf16.mxu0 0
        %3037 = vmatpush1.bf16.msra.mxu0 0
        %3038 = vmatprep.subr.bf16.mxu0 0
        %3039 = vmatpush1.bf16.msra.mxu0 0
        %3040 = vmatprep.subr.bf16.mxu0 0
        %3041 = vmatpush1.bf16.msra.mxu0 0
        %3042 = vmatprep.subr.bf16.mxu0 0
        %3043 = vmatpush1.bf16.msra.mxu0 0
        %3044 = vmatprep.subr.bf16.mxu0 0
        %3045 = vmatpush1.bf16.msra.mxu0 0
        %3046 = vmatprep.subr.bf16.mxu0 0
        %3047 = vmatpush1.bf16.msra.mxu0 0
        %3048 = vmatprep.subr.bf16.mxu0 0
        %3049 = vmatpush1.bf16.msra.mxu0 0
        %3050 = vmatprep.subr.bf16.mxu0 0
        %3051 = vmatpush1.bf16.msra.mxu0 0
        %3052 = vmatprep.subr.bf16.mxu0 0
        %3053 = vmatpush1.bf16.msra.mxu0 0
        %3054 = vmatprep.subr.bf16.mxu0 0
        %3055 = vmatpush1.bf16.msra.mxu0 0
        %3056 = vmatprep.subr.bf16.mxu0 0
        %3057 = vmatpush1.bf16.msra.mxu0 0
        %3058 = vmatprep.subr.bf16.mxu0 0
        %3059 = vmatpush1.bf16.msra.mxu0 0
        %3060 = vmatprep.subr.bf16.mxu0 0
        %3061 = vmatpush1.bf16.msra.mxu0 0
        %3062 = vmatprep.mubr.bf16.mxu0 0
        %3063 = vmatmul.mubr.bf16.gmra.mrb[0].mxu0 %v3028
        %v3064 = vpop.f32.mrb[0].mxu0
        %v3065 = vadd.f32 0.0, %v3064
        %v3066 = vpop.f32.mrb[0].mxu0
        %v3067 = vpop.f32.mrb[0].mxu0
        %v3068 = vadd.f32 0.0, %v3067
        %v3069 = vpop.f32.mrb[0].mxu0
        %3070 = vdwg.mxu0
        %v3071 = vadd.f32 %v2788, %v3065
        %v3072 = vadd.f32 %v2791, %v3068
        %3073 = vrot.lane.b32.xlu0 %v2222, 32
        %v3074 = vpop.permute.xlu0 %3073
        %3075 = vrot.lane.b32.xlu0 %v2228, 32
        %v3076 = vpop.permute.xlu0 %3075
        %v3078 = vsel %vm794, %v3074, 0
        %v3081 = vsel %vm794, %v3076, 0
        %3083 = vmatprep.subr.bf16.mxu0 0
        %3084 = vmatpush1.bf16.xpose.msra.mxu0 %v3081
        %3085 = vmatprep.subr.bf16.mxu0 0
        %3086 = vmatpush1.bf16.xpose.msra.mxu0 0
        %3087 = vmatprep.subr.bf16.mxu0 0
        %3088 = vmatpush1.bf16.xpose.msra.mxu0 0
        %3089 = vmatprep.subr.bf16.mxu0 0
        %3090 = vmatpush1.bf16.xpose.msra.mxu0 0
        %3091 = vmatprep.subr.bf16.mxu0 0
        %3092 = vmatpush1.bf16.xpose.msra.mxu0 0
        %3093 = vmatprep.subr.bf16.mxu0 0
        %3094 = vmatpush1.bf16.xpose.msra.mxu0 0
        %3095 = vmatprep.subr.bf16.mxu0 0
        %3096 = vmatpush1.bf16.xpose.msra.mxu0 0
        %3097 = vmatprep.subr.bf16.mxu0 0
        %3098 = vmatpush1.bf16.xpose.msra.mxu0 0
        %3099 = vmatprep.subr.bf16.mxu0 0
        %3100 = vmatpush1.bf16.xpose.msra.mxu0 0
        %3101 = vmatprep.subr.bf16.mxu0 0
        %3102 = vmatpush1.bf16.xpose.msra.mxu0 0
        %3103 = vmatprep.subr.bf16.mxu0 0
        %3104 = vmatpush1.bf16.xpose.msra.mxu0 0
        %3105 = vmatprep.subr.bf16.mxu0 0
        %3106 = vmatpush1.bf16.xpose.msra.mxu0 0
        %3107 = vmatprep.subr.bf16.mxu0 0
        %3108 = vmatpush1.bf16.xpose.msra.mxu0 0
        %3109 = vmatprep.subr.bf16.mxu0 0
        %3110 = vmatpush1.bf16.xpose.msra.mxu0 0
        %3111 = vmatprep.subr.bf16.mxu0 0
        %3112 = vmatpush1.bf16.xpose.msra.mxu0 0
        %3113 = vmatprep.subr.bf16.mxu0 0
        %3114 = vmatpush1.bf16.xpose.msra.mxu0 0
        %3115 = vmatprep.mubr.bf16.mxu0 0
        %3116 = vmatmul.mubr.bf16.gmra.mrb[0].mxu0 %v3078
        %v3117 = vpop.f32.mrb[0].mxu0
        %v3118 = vadd.f32 %v2214, %v3117
        %v3119 = vpop.f32.mrb[0].mxu0
        %v3120 = vpop.f32.mrb[0].mxu0
        %v3121 = vpop.f32.mrb[0].mxu0
        %3122 = vdwg.mxu0
        %3123 = vrot.lane.b32.xlu0 %v2223, 32
        %v3124 = vpop.permute.xlu0 %3123
        %3125 = vrot.lane.b32.xlu0 %v2229, 32
        %v3126 = vpop.permute.xlu0 %3125
        %v3128 = vsel %vm794, %v3124, 0
        %v3131 = vsel %vm794, %v3126, 0
        %3133 = vmatprep.subr.bf16.mxu0 0
        %3134 = vmatpush1.bf16.xpose.msra.mxu0 %v3131
        %3135 = vmatprep.subr.bf16.mxu0 0
        %3136 = vmatpush1.bf16.xpose.msra.mxu0 0
        %3137 = vmatprep.subr.bf16.mxu0 0
        %3138 = vmatpush1.bf16.xpose.msra.mxu0 0
        %3139 = vmatprep.subr.bf16.mxu0 0
        %3140 = vmatpush1.bf16.xpose.msra.mxu0 0
        %3141 = vmatprep.subr.bf16.mxu0 0
        %3142 = vmatpush1.bf16.xpose.msra.mxu0 0
        %3143 = vmatprep.subr.bf16.mxu0 0
        %3144 = vmatpush1.bf16.xpose.msra.mxu0 0
        %3145 = vmatprep.subr.bf16.mxu0 0
        %3146 = vmatpush1.bf16.xpose.msra.mxu0 0
        %3147 = vmatprep.subr.bf16.mxu0 0
        %3148 = vmatpush1.bf16.xpose.msra.mxu0 0
        %3149 = vmatprep.subr.bf16.mxu0 0
        %3150 = vmatpush1.bf16.xpose.msra.mxu0 0
        %3151 = vmatprep.subr.bf16.mxu0 0
        %3152 = vmatpush1.bf16.xpose.msra.mxu0 0
        %3153 = vmatprep.subr.bf16.mxu0 0
        %3154 = vmatpush1.bf16.xpose.msra.mxu0 0
        %3155 = vmatprep.subr.bf16.mxu0 0
        %3156 = vmatpush1.bf16.xpose.msra.mxu0 0
        %3157 = vmatprep.subr.bf16.mxu0 0
        %3158 = vmatpush1.bf16.xpose.msra.mxu0 0
        %3159 = vmatprep.subr.bf16.mxu0 0
        %3160 = vmatpush1.bf16.xpose.msra.mxu0 0
        %3161 = vmatprep.subr.bf16.mxu0 0
        %3162 = vmatpush1.bf16.xpose.msra.mxu0 0
        %3163 = vmatprep.subr.bf16.mxu0 0
        %3164 = vmatpush1.bf16.xpose.msra.mxu0 0
        %3165 = vmatprep.mubr.bf16.mxu0 0
        %3166 = vmatmul.mubr.bf16.gmra.mrb[0].mxu0 %v3128
        %v3167 = vpop.f32.mrb[0].mxu0
        %v3168 = vadd.f32 %v2215, %v3167
        %v3169 = vpop.f32.mrb[0].mxu0
        %v3170 = vpop.f32.mrb[0].mxu0
        %v3171 = vpop.f32.mrb[0].mxu0
        %3172 = vdwg.mxu0
        %v3173 = vsel %vm887, %v3118, -inf
        %3174 = vmax.xlane.f32.xlu0 %v3173
        %v3175 = vpop.xlane.xlu0 %3174
        %v3176 = vsel %vm887, %v3168, -inf
        %3177 = vmax.xlane.f32.xlu0 %v3176
        %v3178 = vpop.xlane.xlu0 %3177
        %v3179 = vsub.f32 %v3118, %v3175
        %v3180 = vsub.f32 %v3168, %v3178
        %v3181 = vmul.f32 %v3179, 1.442695
        %v3182 = vpow.pop %v3181
        %v3183 = vmul.f32 %v3180, 1.442695
        %v3184 = vpow.pop %v3183
        %v3185 = vsel %vm887, %v3182, 0.0
        %3186 = vadd.xlane.f32.xlu0 %v3185
        %v3187 = vpop.xlane.xlu0 %3186
        %v3188 = vsel %vm887, %v3184, 0.0
        %3189 = vadd.xlane.f32.xlu0 %v3188
        %v3190 = vpop.xlane.xlu0 %3189
        %v3191 = vrcp.pop %v3187
        %v3192 = vrcp.pop %v3190
        %v3193 = vmul.f32 %v3182, %v3191
        %v3194 = vmul.f32 %v3184, %v3192
        %v3195 = vpack.c.bf16 %v3193, %v3193
        %v3196 = vpack.c.bf16 %v3194, %v3194
        %3197 = vrot.lane.b32.xlu0 %v2234, 32
        %v3198 = vpop.permute.xlu0 %3197
        %v3200 = vsel %vm887, %v3195, 0
        %v3203 = vsel %vm915, %v3198, 0
        %3205 = vmatprep.subr.bf16.mxu0 0
        %3206 = vmatpush1.bf16.msra.mxu0 %v3203
        %3207 = vmatprep.subr.bf16.mxu0 0
        %3208 = vmatpush1.bf16.msra.mxu0 0
        %3209 = vmatprep.subr.bf16.mxu0 0
        %3210 = vmatpush1.bf16.msra.mxu0 0
        %3211 = vmatprep.subr.bf16.mxu0 0
        %3212 = vmatpush1.bf16.msra.mxu0 0
        %3213 = vmatprep.subr.bf16.mxu0 0
        %3214 = vmatpush1.bf16.msra.mxu0 0
        %3215 = vmatprep.subr.bf16.mxu0 0
        %3216 = vmatpush1.bf16.msra.mxu0 0
        %3217 = vmatprep.subr.bf16.mxu0 0
        %3218 = vmatpush1.bf16.msra.mxu0 0
        %3219 = vmatprep.subr.bf16.mxu0 0
        %3220 = vmatpush1.bf16.msra.mxu0 0
        %3221 = vmatprep.subr.bf16.mxu0 0
        %3222 = vmatpush1.bf16.msra.mxu0 0
        %3223 = vmatprep.subr.bf16.mxu0 0
        %3224 = vmatpush1.bf16.msra.mxu0 0
        %3225 = vmatprep.subr.bf16.mxu0 0
        %3226 = vmatpush1.bf16.msra.mxu0 0
        %3227 = vmatprep.subr.bf16.mxu0 0
        %3228 = vmatpush1.bf16.msra.mxu0 0
        %3229 = vmatprep.subr.bf16.mxu0 0
        %3230 = vmatpush1.bf16.msra.mxu0 0
        %3231 = vmatprep.subr.bf16.mxu0 0
        %3232 = vmatpush1.bf16.msra.mxu0 0
        %3233 = vmatprep.subr.bf16.mxu0 0
        %3234 = vmatpush1.bf16.msra.mxu0 0
        %3235 = vmatprep.subr.bf16.mxu0 0
        %3236 = vmatpush1.bf16.msra.mxu0 0
        %3237 = vmatprep.mubr.bf16.mxu0 0
        %3238 = vmatmul.mubr.bf16.gmra.mrb[0].mxu0 %v3200
        %v3239 = vpop.f32.mrb[0].mxu0
        %v3240 = vadd.f32 0.0, %v3239
        %v3241 = vpop.f32.mrb[0].mxu0
        %v3242 = vpop.f32.mrb[0].mxu0
        %v3243 = vpop.f32.mrb[0].mxu0
        %3244 = vdwg.mxu0
        %3245 = vrot.lane.b32.xlu0 %v2235, 32
        %v3246 = vpop.permute.xlu0 %3245
        %v3248 = vsel %vm887, %v3196, 0
        %v3251 = vsel %vm915, %v3246, 0
        %3253 = vmatprep.subr.bf16.mxu0 0
        %3254 = vmatpush1.bf16.msra.mxu0 %v3251
        %3255 = vmatprep.subr.bf16.mxu0 0
        %3256 = vmatpush1.bf16.msra.mxu0 0
        %3257 = vmatprep.subr.bf16.mxu0 0
        %3258 = vmatpush1.bf16.msra.mxu0 0
        %3259 = vmatprep.subr.bf16.mxu0 0
        %3260 = vmatpush1.bf16.msra.mxu0 0
        %3261 = vmatprep.subr.bf16.mxu0 0
        %3262 = vmatpush1.bf16.msra.mxu0 0
        %3263 = vmatprep.subr.bf16.mxu0 0
        %3264 = vmatpush1.bf16.msra.mxu0 0
        %3265 = vmatprep.subr.bf16.mxu0 0
        %3266 = vmatpush1.bf16.msra.mxu0 0
        %3267 = vmatprep.subr.bf16.mxu0 0
        %3268 = vmatpush1.bf16.msra.mxu0 0
        %3269 = vmatprep.subr.bf16.mxu0 0
        %3270 = vmatpush1.bf16.msra.mxu0 0
        %3271 = vmatprep.subr.bf16.mxu0 0
        %3272 = vmatpush1.bf16.msra.mxu0 0
        %3273 = vmatprep.subr.bf16.mxu0 0
        %3274 = vmatpush1.bf16.msra.mxu0 0
        %3275 = vmatprep.subr.bf16.mxu0 0
        %3276 = vmatpush1.bf16.msra.mxu0 0
        %3277 = vmatprep.subr.bf16.mxu0 0
        %3278 = vmatpush1.bf16.msra.mxu0 0
        %3279 = vmatprep.subr.bf16.mxu0 0
        %3280 = vmatpush1.bf16.msra.mxu0 0
        %3281 = vmatprep.subr.bf16.mxu0 0
        %3282 = vmatpush1.bf16.msra.mxu0 0
        %3283 = vmatprep.subr.bf16.mxu0 0
        %3284 = vmatpush1.bf16.msra.mxu0 0
        %3285 = vmatprep.mubr.bf16.mxu0 0
        %3286 = vmatmul.mubr.bf16.gmra.mrb[0].mxu0 %v3248
        %v3287 = vpop.f32.mrb[0].mxu0
        %v3288 = vadd.f32 0.0, %v3287
        %v3289 = vpop.f32.mrb[0].mxu0
        %v3290 = vpop.f32.mrb[0].mxu0
        %v3291 = vpop.f32.mrb[0].mxu0
        %3292 = vdwg.mxu0
        %v3293 = vpack.c.bf16 %v3288, %v3240
        %v3298 = vunpack.c.l.b16 %v2248
        %v3299 = vunpack.c.l.b16 %v2249
        %v3300 = vunpack.c.l.b16 %v2250
        %v3301 = vunpack.c.l.b16 %v2251
        %v3302 = vpack.c.b16 %v3299, %v3298
        %v3303 = vpack.c.b16 %v3301, %v3300
        %v3307 = vsel %vm794, %v3293, 0
        %3309 = vmatprep.subr.bf16.mxu0 0
        %3310 = vmatpush1.bf16.msra.mxu0 %v3302
        %3311 = vmatprep.subr.bf16.mxu0 0
        %3312 = vmatpush1.bf16.msra.mxu0 %v3303
        %3313 = vmatprep.subr.bf16.mxu0 0
        %3314 = vmatpush1.bf16.msra.mxu0 0
        %3315 = vmatprep.subr.bf16.mxu0 0
        %3316 = vmatpush1.bf16.msra.mxu0 0
        %3317 = vmatprep.subr.bf16.mxu0 0
        %3318 = vmatpush1.bf16.msra.mxu0 0
        %3319 = vmatprep.subr.bf16.mxu0 0
        %3320 = vmatpush1.bf16.msra.mxu0 0
        %3321 = vmatprep.subr.bf16.mxu0 0
        %3322 = vmatpush1.bf16.msra.mxu0 0
        %3323 = vmatprep.subr.bf16.mxu0 0
        %3324 = vmatpush1.bf16.msra.mxu0 0
        %3325 = vmatprep.subr.bf16.mxu0 0
        %3326 = vmatpush1.bf16.msra.mxu0 0
        %3327 = vmatprep.subr.bf16.mxu0 0
        %3328 = vmatpush1.bf16.msra.mxu0 0
        %3329 = vmatprep.subr.bf16.mxu0 0
        %3330 = vmatpush1.bf16.msra.mxu0 0
        %3331 = vmatprep.subr.bf16.mxu0 0
        %3332 = vmatpush1.bf16.msra.mxu0 0
        %3333 = vmatprep.subr.bf16.mxu0 0
        %3334 = vmatpush1.bf16.msra.mxu0 0
        %3335 = vmatprep.subr.bf16.mxu0 0
        %3336 = vmatpush1.bf16.msra.mxu0 0
        %3337 = vmatprep.subr.bf16.mxu0 0
        %3338 = vmatpush1.bf16.msra.mxu0 0
        %3339 = vmatprep.subr.bf16.mxu0 0
        %3340 = vmatpush1.bf16.msra.mxu0 0
        %3341 = vmatprep.mubr.bf16.mxu0 0
        %3342 = vmatmul.mubr.bf16.gmra.mrb[0].mxu0 %v3307
        %v3343 = vpop.f32.mrb[0].mxu0
        %v3344 = vadd.f32 0.0, %v3343
        %v3345 = vpop.f32.mrb[0].mxu0
        %v3346 = vpop.f32.mrb[0].mxu0
        %v3347 = vadd.f32 0.0, %v3346
        %v3348 = vpop.f32.mrb[0].mxu0
        %3349 = vdwg.mxu0
        %v3350 = vadd.f32 %v3071, %v3344
        %v3351 = vadd.f32 %v3072, %v3347
        %v3352 = vld [vmem:[%s442 + $0x7] sm:$0x1]
        %v3354 = vlaneseq
        %v3355 = vshrl.u32 %v3354, 7
        %v3356 = vsub.s32 0, %v3355
        %v3357 = vrot.slane %v3352, %v3356
        %v3359 = vadd.f32 %v3350, %v3357
        %v3360 = vadd.f32 %v3351, %v3357
        %v3361 = vadd.f32 %v3359, %v1906
        %v3362 = vadd.f32 %v3360, %v1907
        %3363 = vadd.xlane.f32.xlu0 %v3361
        %v3364 = vpop.xlane.xlu0 %3363
        %3365 = vadd.xlane.f32.xlu0 %v3362
        %v3366 = vpop.xlane.xlu0 %3365
        %v3367 = vmul.f32 %v3364, %v463
        %v3368 = vmul.f32 %v3366, %v463
        %v3369 = vsub.f32 %v3361, %v3367
        %v3370 = vsub.f32 %v3362, %v3368
        %v3371 = vmul.f32 %v3369, %v3369
        %v3372 = vmul.f32 %v3370, %v3370
        %3373 = vadd.xlane.f32.xlu0 %v3371
        %v3374 = vpop.xlane.xlu0 %3373
        %3375 = vadd.xlane.f32.xlu0 %v3372
        %v3376 = vpop.xlane.xlu0 %3375
        %v3377 = vmul.f32 %v3374, %v463
        %v3378 = vmul.f32 %v3376, %v463
        %v3379 = vadd.f32 %v3377, 1e-06
        %v3380 = vadd.f32 %v3378, 1e-06
        %v3381 = vrsqrt.pop %v3379
        %v3382 = vrsqrt.pop %v3380
        %v3383 = vmul.f32 %v3369, %v3381
        %v3384 = vmul.f32 %v3370, %v3382
        %v3385 = vlaneseq
        %v3386 = vshrl.u32 %v3385, 7
        %v3387 = vsub.s32 4, %v3386
        %v3388 = vrot.slane %v456, %v3387
        %v3389 = vmul.f32 %v3383, %v3388
        %v3390 = vmul.f32 %v3384, %v3388
        %v3391 = vlaneseq
        %v3392 = vshrl.u32 %v3391, 7
        %v3393 = vsub.s32 5, %v3392
        %v3394 = vrot.slane %v456, %v3393
        %v3395 = vadd.f32 %v3389, %v3394
        %v3396 = vadd.f32 %v3390, %v3394
        %v3397 = vpack.c.bf16 %v3396, %v3395
        %v3398 = vld [vmem:[%s387 + $0x20] sm:$0xf]
        %v3399 = vld [vmem:[%s387 + $0x58] sm:$0xf]
        %v3400 = vld [vmem:[%s387 + $0x90] sm:$0xf]
        %v3401 = vld [vmem:[%s387 + $0xc8] sm:$0xf]
        %v3402 = vld [vmem:[%s387 + $0x100] sm:$0xf]
        %v3403 = vld [vmem:[%s387 + $0x138] sm:$0xf]
        %v3404 = vld [vmem:[%s387 + $0x170] sm:$0xf]
        %v3405 = vld [vmem:[%s387 + $0x1a8] sm:$0xf]
        %v3406 = vld [vmem:[%s387 + $0x1e0] sm:$0xf]
        %v3407 = vld [vmem:[%s387 + $0x218] sm:$0xf]
        %v3408 = vld [vmem:[%s387 + $0x250] sm:$0xf]
        %v3409 = vld [vmem:[%s387 + $0x288] sm:$0xf]
        %v3410 = vld [vmem:[%s387 + $0x2c0] sm:$0xf]
        %v3411 = vld [vmem:[%s387 + $0x2f8] sm:$0xf]
        %v3412 = vld [vmem:[%s387 + $0x330] sm:$0xf]
        %v3413 = vld [vmem:[%s387 + $0x368] sm:$0xf]
        %v3414 = vld [vmem:[%s442 + $0x8] sm:$0x1]
        %v3416 = vlaneseq
        %v3417 = vshrl.u32 %v3416, 7
        %v3418 = vsub.s32 0, %v3417
        %v3419 = vrot.slane %v3414, %v3418
        %v3437 = vunpack.c.l.b16 %v3398
        %v3438 = vunpack.c.l.b16 %v3399
        %v3439 = vunpack.c.l.b16 %v3400
        %v3440 = vunpack.c.l.b16 %v3401
        %v3441 = vunpack.c.l.b16 %v3402
        %v3442 = vunpack.c.l.b16 %v3403
        %v3443 = vunpack.c.l.b16 %v3404
        %v3444 = vunpack.c.l.b16 %v3405
        %v3445 = vunpack.c.l.b16 %v3406
        %v3446 = vunpack.c.l.b16 %v3407
        %v3447 = vunpack.c.l.b16 %v3408
        %v3448 = vunpack.c.l.b16 %v3409
        %v3449 = vunpack.c.l.b16 %v3410
        %v3450 = vunpack.c.l.b16 %v3411
        %v3451 = vunpack.c.l.b16 %v3412
        %v3452 = vunpack.c.l.b16 %v3413
        %v3453 = vpack.c.b16 %v3438, %v3437
        %v3454 = vpack.c.b16 %v3440, %v3439
        %v3455 = vpack.c.b16 %v3442, %v3441
        %v3456 = vpack.c.b16 %v3444, %v3443
        %v3457 = vpack.c.b16 %v3446, %v3445
        %v3458 = vpack.c.b16 %v3448, %v3447
        %v3459 = vpack.c.b16 %v3450, %v3449
        %v3460 = vpack.c.b16 %v3452, %v3451
        %3469 = vmatprep.subr.bf16.mxu0 0
        %3470 = vmatpush1.bf16.msra.mxu0 %v3453
        %3471 = vmatprep.subr.bf16.mxu0 0
        %3472 = vmatpush1.bf16.msra.mxu0 %v3454
        %3473 = vmatprep.subr.bf16.mxu0 0
        %3474 = vmatpush1.bf16.msra.mxu0 %v3455
        %3475 = vmatprep.subr.bf16.mxu0 0
        %3476 = vmatpush1.bf16.msra.mxu0 %v3456
        %3477 = vmatprep.subr.bf16.mxu0 0
        %3478 = vmatpush1.bf16.msra.mxu0 %v3457
        %3479 = vmatprep.subr.bf16.mxu0 0
        %3480 = vmatpush1.bf16.msra.mxu0 %v3458
        %3481 = vmatprep.subr.bf16.mxu0 0
        %3482 = vmatpush1.bf16.msra.mxu0 %v3459
        %3483 = vmatprep.subr.bf16.mxu0 0
        %3484 = vmatpush1.bf16.msra.mxu0 %v3460
        %3485 = vmatprep.subr.bf16.mxu0 0
        %3486 = vmatpush1.bf16.msra.mxu0 0
        %3487 = vmatprep.subr.bf16.mxu0 0
        %3488 = vmatpush1.bf16.msra.mxu0 0
        %3489 = vmatprep.subr.bf16.mxu0 0
        %3490 = vmatpush1.bf16.msra.mxu0 0
        %3491 = vmatprep.subr.bf16.mxu0 0
        %3492 = vmatpush1.bf16.msra.mxu0 0
        %3493 = vmatprep.subr.bf16.mxu0 0
        %3494 = vmatpush1.bf16.msra.mxu0 0
        %3495 = vmatprep.subr.bf16.mxu0 0
        %3496 = vmatpush1.bf16.msra.mxu0 0
        %3497 = vmatprep.subr.bf16.mxu0 0
        %3498 = vmatpush1.bf16.msra.mxu0 0
        %3499 = vmatprep.subr.bf16.mxu0 0
        %3500 = vmatpush1.bf16.msra.mxu0 0
        %3501 = vmatprep.mubr.bf16.mxu0 0
        %3502 = vmatmul.mubr.bf16.gmra.mrb[0].mxu0 %v3397
        %v3503 = vpop.f32.mrb[0].mxu0
        %v3504 = vadd.f32 %v3419, %v3503
        %v3505 = vpop.f32.mrb[0].mxu0
        %v3506 = vpop.f32.mrb[0].mxu0
        %v3507 = vadd.f32 %v3419, %v3506
        %v3508 = vpop.f32.mrb[0].mxu0
        %3509 = vdwg.mxu0
        %v3510 = vld [vmem:[%s2] sm:$0xf]
        %v3511 = vld [vmem:[%s2 + $0x4] sm:$0xf]
        %v3512 = vld [vmem:[%s2 + $0x8] sm:$0xf]
        %v3513 = vld [vmem:[%s2 + $0xc] sm:$0xf]
        %v3514 = vld [vmem:[%s2 + $0x10] sm:$0xf]
        %v3515 = vld [vmem:[%s2 + $0x14] sm:$0xf]
        %v3516 = vld [vmem:[%s387 + $0x24] sm:$0xff]
        %v3517 = vld [vmem:[%s387 + $0x5c] sm:$0xff]
        %v3518 = vld [vmem:[%s387 + $0x94] sm:$0xff]
        %v3519 = vld [vmem:[%s387 + $0xcc] sm:$0xff]
        %v3520 = vld [vmem:[%s387 + $0x104] sm:$0xff]
        %v3521 = vld [vmem:[%s387 + $0x13c] sm:$0xff]
        %v3522 = vld [vmem:[%s387 + $0x174] sm:$0xff]
        %v3523 = vld [vmem:[%s387 + $0x1ac] sm:$0xff]
        %v3524 = vld [vmem:[%s387 + $0x1e4] sm:$0xff]
        %v3525 = vld [vmem:[%s387 + $0x21c] sm:$0xff]
        %v3526 = vld [vmem:[%s387 + $0x254] sm:$0xff]
        %v3527 = vld [vmem:[%s387 + $0x28c] sm:$0xff]
        %v3528 = vld [vmem:[%s387 + $0x2c4] sm:$0xff]
        %v3529 = vld [vmem:[%s387 + $0x2fc] sm:$0xff]
        %v3530 = vld [vmem:[%s387 + $0x334] sm:$0xff]
        %v3531 = vld [vmem:[%s387 + $0x36c] sm:$0xff]
        %v3532 = vld [vmem:[%s442 + $0x9] sm:$0x3]
        %v3534 = vlaneseq
        %v3535 = vshrl.u32 %v3534, 7
        %v3536 = vsub.s32 0, %v3535
        %v3537 = vrot.slane %v3532, %v3536
        %v3538 = vlaneseq
        %v3539 = vshrl.u32 %v3538, 7
        %v3540 = vsub.s32 1, %v3539
        %v3541 = vrot.slane %v3532, %v3540
        %v3550 = vunpack.c.l.b16 %v3510
        %v3551 = vunpack.c.l.b16 %v3511
        %v3552 = vunpack.c.l.b16 %v3512
        %v3553 = vunpack.c.l.b16 %v3513
        %v3554 = vunpack.c.l.b16 %v3514
        %v3555 = vunpack.c.l.b16 %v3515
        %v3556 = vpack.c.b16 %v3551, %v3550
        %v3557 = vpack.c.b16 %v3553, %v3552
        %v3558 = vpack.c.b16 %v3555, %v3554
        %v3578 = vunpack.c.l.b16 %v3516
        %v3579 = vunpack.c.h.b16 %v3516
        %v3580 = vunpack.c.l.b16 %v3517
        %v3581 = vunpack.c.h.b16 %v3517
        %v3582 = vunpack.c.l.b16 %v3518
        %v3583 = vunpack.c.h.b16 %v3518
        %v3584 = vunpack.c.l.b16 %v3519
        %v3585 = vunpack.c.h.b16 %v3519
        %v3586 = vunpack.c.l.b16 %v3520
        %v3587 = vunpack.c.h.b16 %v3520
        %v3588 = vunpack.c.l.b16 %v3521
        %v3589 = vunpack.c.h.b16 %v3521
        %v3590 = vunpack.c.l.b16 %v3522
        %v3591 = vunpack.c.h.b16 %v3522
        %v3592 = vunpack.c.l.b16 %v3523
        %v3593 = vunpack.c.h.b16 %v3523
        %v3594 = vunpack.c.l.b16 %v3524
        %v3595 = vunpack.c.h.b16 %v3524
        %v3596 = vunpack.c.l.b16 %v3525
        %v3597 = vunpack.c.h.b16 %v3525
        %v3598 = vunpack.c.l.b16 %v3526
        %v3599 = vunpack.c.h.b16 %v3526
        %v3600 = vunpack.c.l.b16 %v3527
        %v3601 = vunpack.c.h.b16 %v3527
        %v3602 = vunpack.c.l.b16 %v3528
        %v3603 = vunpack.c.h.b16 %v3528
        %v3604 = vunpack.c.l.b16 %v3529
        %v3605 = vunpack.c.h.b16 %v3529
        %v3606 = vunpack.c.l.b16 %v3530
        %v3607 = vunpack.c.h.b16 %v3530
        %v3608 = vunpack.c.l.b16 %v3531
        %v3609 = vunpack.c.h.b16 %v3531
        %v3610 = vpack.c.b16 %v3580, %v3578
        %v3611 = vpack.c.b16 %v3581, %v3579
        %v3612 = vpack.c.b16 %v3584, %v3582
        %v3613 = vpack.c.b16 %v3585, %v3583
        %v3614 = vpack.c.b16 %v3588, %v3586
        %v3615 = vpack.c.b16 %v3589, %v3587
        %v3616 = vpack.c.b16 %v3592, %v3590
        %v3617 = vpack.c.b16 %v3593, %v3591
        %v3618 = vpack.c.b16 %v3596, %v3594
        %v3619 = vpack.c.b16 %v3597, %v3595
        %v3620 = vpack.c.b16 %v3600, %v3598
        %v3621 = vpack.c.b16 %v3601, %v3599
        %v3622 = vpack.c.b16 %v3604, %v3602
        %v3623 = vpack.c.b16 %v3605, %v3603
        %v3624 = vpack.c.b16 %v3608, %v3606
        %v3625 = vpack.c.b16 %v3609, %v3607
        %3642 = vmatprep.subr.bf16.mxu0 %v3611
        %3643 = vmatpush1.bf16.msra.mxu0 %v3610
        %3644 = vmatprep.subr.bf16.mxu0 %v3613
        %3645 = vmatpush1.bf16.msra.mxu0 %v3612
        %3646 = vmatprep.subr.bf16.mxu0 %v3615
        %3647 = vmatpush1.bf16.msra.mxu0 %v3614
        %3648 = vmatprep.subr.bf16.mxu0 %v3617
        %3649 = vmatpush1.bf16.msra.mxu0 %v3616
        %3650 = vmatprep.subr.bf16.mxu0 %v3619
        %3651 = vmatpush1.bf16.msra.mxu0 %v3618
        %3652 = vmatprep.subr.bf16.mxu0 %v3621
        %3653 = vmatpush1.bf16.msra.mxu0 %v3620
        %3654 = vmatprep.subr.bf16.mxu0 %v3623
        %3655 = vmatpush1.bf16.msra.mxu0 %v3622
        %3656 = vmatprep.subr.bf16.mxu0 %v3625
        %3657 = vmatpush1.bf16.msra.mxu0 %v3624
        %3658 = vmatprep.subr.bf16.mxu0 0
        %3659 = vmatpush1.bf16.msra.mxu0 0
        %3660 = vmatprep.subr.bf16.mxu0 0
        %3661 = vmatpush1.bf16.msra.mxu0 0
        %3662 = vmatprep.subr.bf16.mxu0 0
        %3663 = vmatpush1.bf16.msra.mxu0 0
        %3664 = vmatprep.subr.bf16.mxu0 0
        %3665 = vmatpush1.bf16.msra.mxu0 0
        %3666 = vmatprep.subr.bf16.mxu0 0
        %3667 = vmatpush1.bf16.msra.mxu0 0
        %3668 = vmatprep.subr.bf16.mxu0 0
        %3669 = vmatpush1.bf16.msra.mxu0 0
        %3670 = vmatprep.subr.bf16.mxu0 0
        %3671 = vmatpush1.bf16.msra.mxu0 0
        %3672 = vmatprep.subr.bf16.mxu0 0
        %3673 = vmatpush1.bf16.msra.mxu0 0
        %3674 = vmatprep.mubr.bf16.mxu0 0
        %3675 = vmatmul.mubr.bf16.gmra.mrb[0].mxu0 %v3556
        %v3676 = vpop.f32.mrb[0].mxu0
        %v3677 = vadd.f32 %v3537, %v3676
        %v3678 = vpop.f32.mrb[0].mxu0
        %v3679 = vadd.f32 %v3541, %v3678
        %v3680 = vpop.f32.mrb[0].mxu0
        %v3681 = vadd.f32 %v3537, %v3680
        %v3682 = vpop.f32.mrb[0].mxu0
        %v3683 = vadd.f32 %v3541, %v3682
        %3684 = vmatprep.mubr.bf16.mxu0 0
        %3685 = vmatmul.mubr.bf16.gmra.mrb[0].mxu0 %v3557
        %v3686 = vpop.f32.mrb[0].mxu0
        %v3687 = vadd.f32 %v3537, %v3686
        %v3688 = vpop.f32.mrb[0].mxu0
        %v3689 = vadd.f32 %v3541, %v3688
        %v3690 = vpop.f32.mrb[0].mxu0
        %v3691 = vadd.f32 %v3537, %v3690
        %v3692 = vpop.f32.mrb[0].mxu0
        %v3693 = vadd.f32 %v3541, %v3692
        %3694 = vmatprep.mubr.bf16.mxu0 0
        %3695 = vmatmul.mubr.bf16.gmra.mrb[0].mxu0 %v3558
        %v3696 = vpop.f32.mrb[0].mxu0
        %v3697 = vadd.f32 %v3537, %v3696
        %v3698 = vpop.f32.mrb[0].mxu0
        %v3699 = vadd.f32 %v3541, %v3698
        %v3700 = vpop.f32.mrb[0].mxu0
        %v3701 = vadd.f32 %v3537, %v3700
        %v3702 = vpop.f32.mrb[0].mxu0
        %v3703 = vadd.f32 %v3541, %v3702
        %3704 = vdwg.mxu0
        %v3705 = vld [vmem:[%s5] sm:$0xff]
        %v3706 = vld [vmem:[%s5 + $0x8] sm:$0xff]
        %v3707 = vmul.f32 %v3504, 0.17677669
        %v3708 = vmul.f32 %v3507, 0.17677669
        %v3709 = vpack.c.bf16 %v3708, %v3707
        %v3711 = vunpack.c.l.b16 %v3709
        %v3712 = vunpack.c.h.b16 %v3709
        %v3713 = vpack.c.b16 %v3711, %v3711
        %v3714 = vpack.c.b16 %v3712, %v3712
        %v3715 = vpack.c.bf16 %v3681, %v3677
        %v3716 = vpack.c.bf16 %v3691, %v3687
        %v3717 = vpack.c.bf16 %v3701, %v3697
        %v3721 = vunpack.c.l.b16 %v3715
        %v3722 = vunpack.c.h.b16 %v3715
        %v3723 = vunpack.c.l.b16 %v3716
        %v3724 = vunpack.c.h.b16 %v3716
        %v3725 = vunpack.c.l.b16 %v3717
        %v3726 = vunpack.c.h.b16 %v3717
        %v3727 = vpack.c.bf16 %v3683, %v3679
        %v3728 = vpack.c.bf16 %v3693, %v3689
        %v3729 = vpack.c.bf16 %v3703, %v3699
        %v3733 = vunpack.c.l.b16 %v3727
        %v3734 = vunpack.c.h.b16 %v3727
        %v3735 = vunpack.c.l.b16 %v3728
        %v3736 = vunpack.c.h.b16 %v3728
        %v3737 = vunpack.c.l.b16 %v3729
        %v3738 = vunpack.c.h.b16 %v3729
        %v3739 = vld [vmem:[%s387 + $0x2c] sm:$0xf]
        %v3740 = vld [vmem:[%s387 + $0x64] sm:$0xf]
        %v3741 = vld [vmem:[%s387 + $0x9c] sm:$0xf]
        %v3742 = vld [vmem:[%s387 + $0xd4] sm:$0xf]
        %v3743 = vld [vmem:[%s387 + $0x10c] sm:$0xf]
        %v3744 = vld [vmem:[%s387 + $0x144] sm:$0xf]
        %v3745 = vld [vmem:[%s387 + $0x17c] sm:$0xf]
        %v3746 = vld [vmem:[%s387 + $0x1b4] sm:$0xf]
        %v3747 = vld [vmem:[%s387 + $0x1ec] sm:$0xf]
        %v3748 = vld [vmem:[%s387 + $0x224] sm:$0xf]
        %v3749 = vld [vmem:[%s387 + $0x25c] sm:$0xf]
        %v3750 = vld [vmem:[%s387 + $0x294] sm:$0xf]
        %v3751 = vld [vmem:[%s387 + $0x2cc] sm:$0xf]
        %v3752 = vld [vmem:[%s387 + $0x304] sm:$0xf]
        %v3753 = vld [vmem:[%s387 + $0x33c] sm:$0xf]
        %v3754 = vld [vmem:[%s387 + $0x374] sm:$0xf]
        %v3755 = vpack.c.b16 %v3722, %v3721
        %v3756 = vpack.c.b16 %v3723, %v3723
        %v3758 = vsel %vm794, %v3713, 0
        %v3761 = vsel %vm794, %v3755, 0
        %v3764 = vsel %vm794, %v3756, 0
        %3766 = vmatprep.subr.bf16.mxu0 0
        %3767 = vmatpush1.bf16.xpose.msra.mxu0 %v3761
        %3768 = vmatprep.subr.bf16.mxu0 0
        %3769 = vmatpush1.bf16.xpose.msra.mxu0 %v3764
        %3770 = vmatprep.subr.bf16.mxu0 0
        %3771 = vmatpush1.bf16.xpose.msra.mxu0 0
        %3772 = vmatprep.subr.bf16.mxu0 0
        %3773 = vmatpush1.bf16.xpose.msra.mxu0 0
        %3774 = vmatprep.subr.bf16.mxu0 0
        %3775 = vmatpush1.bf16.xpose.msra.mxu0 0
        %3776 = vmatprep.subr.bf16.mxu0 0
        %3777 = vmatpush1.bf16.xpose.msra.mxu0 0
        %3778 = vmatprep.subr.bf16.mxu0 0
        %3779 = vmatpush1.bf16.xpose.msra.mxu0 0
        %3780 = vmatprep.subr.bf16.mxu0 0
        %3781 = vmatpush1.bf16.xpose.msra.mxu0 0
        %3782 = vmatprep.subr.bf16.mxu0 0
        %3783 = vmatpush1.bf16.xpose.msra.mxu0 0
        %3784 = vmatprep.subr.bf16.mxu0 0
        %3785 = vmatpush1.bf16.xpose.msra.mxu0 0
        %3786 = vmatprep.subr.bf16.mxu0 0
        %3787 = vmatpush1.bf16.xpose.msra.mxu0 0
        %3788 = vmatprep.subr.bf16.mxu0 0
        %3789 = vmatpush1.bf16.xpose.msra.mxu0 0
        %3790 = vmatprep.subr.bf16.mxu0 0
        %3791 = vmatpush1.bf16.xpose.msra.mxu0 0
        %3792 = vmatprep.subr.bf16.mxu0 0
        %3793 = vmatpush1.bf16.xpose.msra.mxu0 0
        %3794 = vmatprep.subr.bf16.mxu0 0
        %3795 = vmatpush1.bf16.xpose.msra.mxu0 0
        %3796 = vmatprep.subr.bf16.mxu0 0
        %3797 = vmatpush1.bf16.xpose.msra.mxu0 0
        %3798 = vmatprep.mubr.bf16.mxu0 0
        %3799 = vmatmul.mubr.bf16.gmra.mrb[0].mxu0 %v3758
        %v3800 = vpop.f32.mrb[0].mxu0
        %v3801 = vadd.f32 %v3705, %v3800
        %v3802 = vpop.f32.mrb[0].mxu0
        %v3803 = vpop.f32.mrb[0].mxu0
        %v3804 = vpop.f32.mrb[0].mxu0
        %3805 = vdwg.mxu0
        %v3806 = vpack.c.b16 %v3725, %v3724
        %v3807 = vpack.c.b16 %v3726, %v3726
        %v3809 = vsel %vm794, %v3714, 0
        %v3812 = vsel %vm794, %v3806, 0
        %v3815 = vsel %vm794, %v3807, 0
        %3817 = vmatprep.subr.bf16.mxu0 0
        %3818 = vmatpush1.bf16.xpose.msra.mxu0 %v3812
        %3819 = vmatprep.subr.bf16.mxu0 0
        %3820 = vmatpush1.bf16.xpose.msra.mxu0 %v3815
        %3821 = vmatprep.subr.bf16.mxu0 0
        %3822 = vmatpush1.bf16.xpose.msra.mxu0 0
        %3823 = vmatprep.subr.bf16.mxu0 0
        %3824 = vmatpush1.bf16.xpose.msra.mxu0 0
        %3825 = vmatprep.subr.bf16.mxu0 0
        %3826 = vmatpush1.bf16.xpose.msra.mxu0 0
        %3827 = vmatprep.subr.bf16.mxu0 0
        %3828 = vmatpush1.bf16.xpose.msra.mxu0 0
        %3829 = vmatprep.subr.bf16.mxu0 0
        %3830 = vmatpush1.bf16.xpose.msra.mxu0 0
        %3831 = vmatprep.subr.bf16.mxu0 0
        %3832 = vmatpush1.bf16.xpose.msra.mxu0 0
        %3833 = vmatprep.subr.bf16.mxu0 0
        %3834 = vmatpush1.bf16.xpose.msra.mxu0 0
        %3835 = vmatprep.subr.bf16.mxu0 0
        %3836 = vmatpush1.bf16.xpose.msra.mxu0 0
        %3837 = vmatprep.subr.bf16.mxu0 0
        %3838 = vmatpush1.bf16.xpose.msra.mxu0 0
        %3839 = vmatprep.subr.bf16.mxu0 0
        %3840 = vmatpush1.bf16.xpose.msra.mxu0 0
        %3841 = vmatprep.subr.bf16.mxu0 0
        %3842 = vmatpush1.bf16.xpose.msra.mxu0 0
        %3843 = vmatprep.subr.bf16.mxu0 0
        %3844 = vmatpush1.bf16.xpose.msra.mxu0 0
        %3845 = vmatprep.subr.bf16.mxu0 0
        %3846 = vmatpush1.bf16.xpose.msra.mxu0 0
        %3847 = vmatprep.subr.bf16.mxu0 0
        %3848 = vmatpush1.bf16.xpose.msra.mxu0 0
        %3849 = vmatprep.mubr.bf16.mxu0 0
        %3850 = vmatmul.mubr.bf16.gmra.mrb[0].mxu0 %v3809
        %v3851 = vpop.f32.mrb[0].mxu0
        %v3852 = vadd.f32 %v3706, %v3851
        %v3853 = vpop.f32.mrb[0].mxu0
        %v3854 = vpop.f32.mrb[0].mxu0
        %v3855 = vpop.f32.mrb[0].mxu0
        %3856 = vdwg.mxu0
        %vm3857 = vcmask 195584
        %v3858 = vsel %vm3857, %v3801, -inf
        %3859 = vmax.xlane.f32.xlu0 %v3858
        %v3860 = vpop.xlane.xlu0 %3859
        %v3861 = vsel %vm3857, %v3852, -inf
        %3862 = vmax.xlane.f32.xlu0 %v3861
        %v3863 = vpop.xlane.xlu0 %3862
        %v3864 = vsub.f32 %v3801, %v3860
        %v3865 = vsub.f32 %v3852, %v3863
        %v3866 = vmul.f32 %v3864, 1.442695
        %v3867 = vpow.pop %v3866
        %v3868 = vmul.f32 %v3865, 1.442695
        %v3869 = vpow.pop %v3868
        %v3870 = vsel %vm3857, %v3867, 0.0
        %3871 = vadd.xlane.f32.xlu0 %v3870
        %v3872 = vpop.xlane.xlu0 %3871
        %v3873 = vsel %vm3857, %v3869, 0.0
        %3874 = vadd.xlane.f32.xlu0 %v3873
        %v3875 = vpop.xlane.xlu0 %3874
        %v3876 = vrcp.pop %v3872
        %v3877 = vrcp.pop %v3875
        %v3878 = vmul.f32 %v3867, %v3876
        %v3879 = vmul.f32 %v3869, %v3877
        %v3880 = vpack.c.bf16 %v3878, %v3878
        %v3881 = vpack.c.bf16 %v3879, %v3879
        %v3882 = vpack.c.b16 %v3734, %v3733
        %v3883 = vpack.c.b16 %v3735, %v3735
        %v3886 = vsel %vm3857, %v3880, 0
        %v3889 = vsel %vm915, %v3883, 0
        %3891 = vmatprep.subr.bf16.mxu0 0
        %3892 = vmatpush1.bf16.msra.mxu0 %v3882
        %3893 = vmatprep.subr.bf16.mxu0 0
        %3894 = vmatpush1.bf16.msra.mxu0 %v3889
        %3895 = vmatprep.subr.bf16.mxu0 0
        %3896 = vmatpush1.bf16.msra.mxu0 0
        %3897 = vmatprep.subr.bf16.mxu0 0
        %3898 = vmatpush1.bf16.msra.mxu0 0
        %3899 = vmatprep.subr.bf16.mxu0 0
        %3900 = vmatpush1.bf16.msra.mxu0 0
        %3901 = vmatprep.subr.bf16.mxu0 0
        %3902 = vmatpush1.bf16.msra.mxu0 0
        %3903 = vmatprep.subr.bf16.mxu0 0
        %3904 = vmatpush1.bf16.msra.mxu0 0
        %3905 = vmatprep.subr.bf16.mxu0 0
        %3906 = vmatpush1.bf16.msra.mxu0 0
        %3907 = vmatprep.subr.bf16.mxu0 0
        %3908 = vmatpush1.bf16.msra.mxu0 0
        %3909 = vmatprep.subr.bf16.mxu0 0
        %3910 = vmatpush1.bf16.msra.mxu0 0
        %3911 = vmatprep.subr.bf16.mxu0 0
        %3912 = vmatpush1.bf16.msra.mxu0 0
        %3913 = vmatprep.subr.bf16.mxu0 0
        %3914 = vmatpush1.bf16.msra.mxu0 0
        %3915 = vmatprep.subr.bf16.mxu0 0
        %3916 = vmatpush1.bf16.msra.mxu0 0
        %3917 = vmatprep.subr.bf16.mxu0 0
        %3918 = vmatpush1.bf16.msra.mxu0 0
        %3919 = vmatprep.subr.bf16.mxu0 0
        %3920 = vmatpush1.bf16.msra.mxu0 0
        %3921 = vmatprep.subr.bf16.mxu0 0
        %3922 = vmatpush1.bf16.msra.mxu0 0
        %3923 = vmatprep.mubr.bf16.mxu0 0
        %3924 = vmatmul.mubr.bf16.gmra.mrb[0].mxu0 %v3886
        %v3925 = vpop.f32.mrb[0].mxu0
        %v3926 = vadd.f32 0.0, %v3925
        %v3927 = vpop.f32.mrb[0].mxu0
        %v3928 = vpop.f32.mrb[0].mxu0
        %v3929 = vpop.f32.mrb[0].mxu0
        %3930 = vdwg.mxu0
        %v3931 = vpack.c.b16 %v3737, %v3736
        %v3932 = vpack.c.b16 %v3738, %v3738
        %v3935 = vsel %vm3857, %v3881, 0
        %v3938 = vsel %vm915, %v3932, 0
        %3940 = vmatprep.subr.bf16.mxu0 0
        %3941 = vmatpush1.bf16.msra.mxu0 %v3931
        %3942 = vmatprep.subr.bf16.mxu0 0
        %3943 = vmatpush1.bf16.msra.mxu0 %v3938
        %3944 = vmatprep.subr.bf16.mxu0 0
        %3945 = vmatpush1.bf16.msra.mxu0 0
        %3946 = vmatprep.subr.bf16.mxu0 0
        %3947 = vmatpush1.bf16.msra.mxu0 0
        %3948 = vmatprep.subr.bf16.mxu0 0
        %3949 = vmatpush1.bf16.msra.mxu0 0
        %3950 = vmatprep.subr.bf16.mxu0 0
        %3951 = vmatpush1.bf16.msra.mxu0 0
        %3952 = vmatprep.subr.bf16.mxu0 0
        %3953 = vmatpush1.bf16.msra.mxu0 0
        %3954 = vmatprep.subr.bf16.mxu0 0
        %3955 = vmatpush1.bf16.msra.mxu0 0
        %3956 = vmatprep.subr.bf16.mxu0 0
        %3957 = vmatpush1.bf16.msra.mxu0 0
        %3958 = vmatprep.subr.bf16.mxu0 0
        %3959 = vmatpush1.bf16.msra.mxu0 0
        %3960 = vmatprep.subr.bf16.mxu0 0
        %3961 = vmatpush1.bf16.msra.mxu0 0
        %3962 = vmatprep.subr.bf16.mxu0 0
        %3963 = vmatpush1.bf16.msra.mxu0 0
        %3964 = vmatprep.subr.bf16.mxu0 0
        %3965 = vmatpush1.bf16.msra.mxu0 0
        %3966 = vmatprep.subr.bf16.mxu0 0
        %3967 = vmatpush1.bf16.msra.mxu0 0
        %3968 = vmatprep.subr.bf16.mxu0 0
        %3969 = vmatpush1.bf16.msra.mxu0 0
        %3970 = vmatprep.subr.bf16.mxu0 0
        %3971 = vmatpush1.bf16.msra.mxu0 0
        %3972 = vmatprep.mubr.bf16.mxu0 0
        %3973 = vmatmul.mubr.bf16.gmra.mrb[0].mxu0 %v3935
        %v3974 = vpop.f32.mrb[0].mxu0
        %v3975 = vadd.f32 0.0, %v3974
        %v3976 = vpop.f32.mrb[0].mxu0
        %v3977 = vpop.f32.mrb[0].mxu0
        %v3978 = vpop.f32.mrb[0].mxu0
        %3979 = vdwg.mxu0
        %v3980 = vpack.c.bf16 %v3975, %v3926
        %3981 = vrot.lane.b32.xlu0 %v3713, 96
        %v3982 = vpop.permute.xlu0 %3981
        %3983 = vrot.lane.b32.xlu0 %v3755, 96
        %v3984 = vpop.permute.xlu0 %3983
        %3985 = vrot.lane.b32.xlu0 %v3756, 96
        %v3986 = vpop.permute.xlu0 %3985
        %v3988 = vsel %vm794, %v3982, 0
        %v3991 = vsel %vm794, %v3984, 0
        %v3994 = vsel %vm794, %v3986, 0
        %3996 = vmatprep.subr.bf16.mxu0 0
        %3997 = vmatpush1.bf16.xpose.msra.mxu0 %v3991
        %3998 = vmatprep.subr.bf16.mxu0 0
        %3999 = vmatpush1.bf16.xpose.msra.mxu0 %v3994
        %4000 = vmatprep.subr.bf16.mxu0 0
        %4001 = vmatpush1.bf16.xpose.msra.mxu0 0
        %4002 = vmatprep.subr.bf16.mxu0 0
        %4003 = vmatpush1.bf16.xpose.msra.mxu0 0
        %4004 = vmatprep.subr.bf16.mxu0 0
        %4005 = vmatpush1.bf16.xpose.msra.mxu0 0
        %4006 = vmatprep.subr.bf16.mxu0 0
        %4007 = vmatpush1.bf16.xpose.msra.mxu0 0
        %4008 = vmatprep.subr.bf16.mxu0 0
        %4009 = vmatpush1.bf16.xpose.msra.mxu0 0
        %4010 = vmatprep.subr.bf16.mxu0 0
        %4011 = vmatpush1.bf16.xpose.msra.mxu0 0
        %4012 = vmatprep.subr.bf16.mxu0 0
        %4013 = vmatpush1.bf16.xpose.msra.mxu0 0
        %4014 = vmatprep.subr.bf16.mxu0 0
        %4015 = vmatpush1.bf16.xpose.msra.mxu0 0
        %4016 = vmatprep.subr.bf16.mxu0 0
        %4017 = vmatpush1.bf16.xpose.msra.mxu0 0
        %4018 = vmatprep.subr.bf16.mxu0 0
        %4019 = vmatpush1.bf16.xpose.msra.mxu0 0
        %4020 = vmatprep.subr.bf16.mxu0 0
        %4021 = vmatpush1.bf16.xpose.msra.mxu0 0
        %4022 = vmatprep.subr.bf16.mxu0 0
        %4023 = vmatpush1.bf16.xpose.msra.mxu0 0
        %4024 = vmatprep.subr.bf16.mxu0 0
        %4025 = vmatpush1.bf16.xpose.msra.mxu0 0
        %4026 = vmatprep.subr.bf16.mxu0 0
        %4027 = vmatpush1.bf16.xpose.msra.mxu0 0
        %4028 = vmatprep.mubr.bf16.mxu0 0
        %4029 = vmatmul.mubr.bf16.gmra.mrb[0].mxu0 %v3988
        %v4030 = vpop.f32.mrb[0].mxu0
        %v4031 = vadd.f32 %v3705, %v4030
        %v4032 = vpop.f32.mrb[0].mxu0
        %v4033 = vpop.f32.mrb[0].mxu0
        %v4034 = vpop.f32.mrb[0].mxu0
        %4035 = vdwg.mxu0
        %4036 = vrot.lane.b32.xlu0 %v3714, 96
        %v4037 = vpop.permute.xlu0 %4036
        %4038 = vrot.lane.b32.xlu0 %v3806, 96
        %v4039 = vpop.permute.xlu0 %4038
        %4040 = vrot.lane.b32.xlu0 %v3807, 96
        %v4041 = vpop.permute.xlu0 %4040
        %v4043 = vsel %vm794, %v4037, 0
        %v4046 = vsel %vm794, %v4039, 0
        %v4049 = vsel %vm794, %v4041, 0
        %4051 = vmatprep.subr.bf16.mxu0 0
        %4052 = vmatpush1.bf16.xpose.msra.mxu0 %v4046
        %4053 = vmatprep.subr.bf16.mxu0 0
        %4054 = vmatpush1.bf16.xpose.msra.mxu0 %v4049
        %4055 = vmatprep.subr.bf16.mxu0 0
        %4056 = vmatpush1.bf16.xpose.msra.mxu0 0
        %4057 = vmatprep.subr.bf16.mxu0 0
        %4058 = vmatpush1.bf16.xpose.msra.mxu0 0
        %4059 = vmatprep.subr.bf16.mxu0 0
        %4060 = vmatpush1.bf16.xpose.msra.mxu0 0
        %4061 = vmatprep.subr.bf16.mxu0 0
        %4062 = vmatpush1.bf16.xpose.msra.mxu0 0
        %4063 = vmatprep.subr.bf16.mxu0 0
        %4064 = vmatpush1.bf16.xpose.msra.mxu0 0
        %4065 = vmatprep.subr.bf16.mxu0 0
        %4066 = vmatpush1.bf16.xpose.msra.mxu0 0
        %4067 = vmatprep.subr.bf16.mxu0 0
        %4068 = vmatpush1.bf16.xpose.msra.mxu0 0
        %4069 = vmatprep.subr.bf16.mxu0 0
        %4070 = vmatpush1.bf16.xpose.msra.mxu0 0
        %4071 = vmatprep.subr.bf16.mxu0 0
        %4072 = vmatpush1.bf16.xpose.msra.mxu0 0
        %4073 = vmatprep.subr.bf16.mxu0 0
        %4074 = vmatpush1.bf16.xpose.msra.mxu0 0
        %4075 = vmatprep.subr.bf16.mxu0 0
        %4076 = vmatpush1.bf16.xpose.msra.mxu0 0
        %4077 = vmatprep.subr.bf16.mxu0 0
        %4078 = vmatpush1.bf16.xpose.msra.mxu0 0
        %4079 = vmatprep.subr.bf16.mxu0 0
        %4080 = vmatpush1.bf16.xpose.msra.mxu0 0
        %4081 = vmatprep.subr.bf16.mxu0 0
        %4082 = vmatpush1.bf16.xpose.msra.mxu0 0
        %4083 = vmatprep.mubr.bf16.mxu0 0
        %4084 = vmatmul.mubr.bf16.gmra.mrb[0].mxu0 %v4043
        %v4085 = vpop.f32.mrb[0].mxu0
        %v4086 = vadd.f32 %v3706, %v4085
        %v4087 = vpop.f32.mrb[0].mxu0
        %v4088 = vpop.f32.mrb[0].mxu0
        %v4089 = vpop.f32.mrb[0].mxu0
        %4090 = vdwg.mxu0
        %v4091 = vsel %vm3857, %v4031, -inf
        %4092 = vmax.xlane.f32.xlu0 %v4091
        %v4093 = vpop.xlane.xlu0 %4092
        %v4094 = vsel %vm3857, %v4086, -inf
        %4095 = vmax.xlane.f32.xlu0 %v4094
        %v4096 = vpop.xlane.xlu0 %4095
        %v4097 = vsub.f32 %v4031, %v4093
        %v4098 = vsub.f32 %v4086, %v4096
        %v4099 = vmul.f32 %v4097, 1.442695
        %v4100 = vpow.pop %v4099
        %v4101 = vmul.f32 %v4098, 1.442695
        %v4102 = vpow.pop %v4101
        %v4103 = vsel %vm3857, %v4100, 0.0
        %4104 = vadd.xlane.f32.xlu0 %v4103
        %v4105 = vpop.xlane.xlu0 %4104
        %v4106 = vsel %vm3857, %v4102, 0.0
        %4107 = vadd.xlane.f32.xlu0 %v4106
        %v4108 = vpop.xlane.xlu0 %4107
        %v4109 = vrcp.pop %v4105
        %v4110 = vrcp.pop %v4108
        %v4111 = vmul.f32 %v4100, %v4109
        %v4112 = vmul.f32 %v4102, %v4110
        %v4113 = vpack.c.bf16 %v4111, %v4111
        %v4114 = vpack.c.bf16 %v4112, %v4112
        %4115 = vrot.lane.b32.xlu0 %v3882, 96
        %v4116 = vpop.permute.xlu0 %4115
        %4117 = vrot.lane.b32.xlu0 %v3883, 96
        %v4118 = vpop.permute.xlu0 %4117
        %v4121 = vsel %vm3857, %v4113, 0
        %v4124 = vsel %vm915, %v4118, 0
        %4126 = vmatprep.subr.bf16.mxu0 0
        %4127 = vmatpush1.bf16.msra.mxu0 %v4116
        %4128 = vmatprep.subr.bf16.mxu0 0
        %4129 = vmatpush1.bf16.msra.mxu0 %v4124
        %4130 = vmatprep.subr.bf16.mxu0 0
        %4131 = vmatpush1.bf16.msra.mxu0 0
        %4132 = vmatprep.subr.bf16.mxu0 0
        %4133 = vmatpush1.bf16.msra.mxu0 0
        %4134 = vmatprep.subr.bf16.mxu0 0
        %4135 = vmatpush1.bf16.msra.mxu0 0
        %4136 = vmatprep.subr.bf16.mxu0 0
        %4137 = vmatpush1.bf16.msra.mxu0 0
        %4138 = vmatprep.subr.bf16.mxu0 0
        %4139 = vmatpush1.bf16.msra.mxu0 0
        %4140 = vmatprep.subr.bf16.mxu0 0
        %4141 = vmatpush1.bf16.msra.mxu0 0
        %4142 = vmatprep.subr.bf16.mxu0 0
        %4143 = vmatpush1.bf16.msra.mxu0 0
        %4144 = vmatprep.subr.bf16.mxu0 0
        %4145 = vmatpush1.bf16.msra.mxu0 0
        %4146 = vmatprep.subr.bf16.mxu0 0
        %4147 = vmatpush1.bf16.msra.mxu0 0
        %4148 = vmatprep.subr.bf16.mxu0 0
        %4149 = vmatpush1.bf16.msra.mxu0 0
        %4150 = vmatprep.subr.bf16.mxu0 0
        %4151 = vmatpush1.bf16.msra.mxu0 0
        %4152 = vmatprep.subr.bf16.mxu0 0
        %4153 = vmatpush1.bf16.msra.mxu0 0
        %4154 = vmatprep.subr.bf16.mxu0 0
        %4155 = vmatpush1.bf16.msra.mxu0 0
        %4156 = vmatprep.subr.bf16.mxu0 0
        %4157 = vmatpush1.bf16.msra.mxu0 0
        %4158 = vmatprep.mubr.bf16.mxu0 0
        %4159 = vmatmul.mubr.bf16.gmra.mrb[0].mxu0 %v4121
        %v4160 = vpop.f32.mrb[0].mxu0
        %v4161 = vadd.f32 0.0, %v4160
        %v4162 = vpop.f32.mrb[0].mxu0
        %v4163 = vpop.f32.mrb[0].mxu0
        %v4164 = vpop.f32.mrb[0].mxu0
        %4165 = vdwg.mxu0
        %4166 = vrot.lane.b32.xlu0 %v3931, 96
        %v4167 = vpop.permute.xlu0 %4166
        %4168 = vrot.lane.b32.xlu0 %v3932, 96
        %v4169 = vpop.permute.xlu0 %4168
        %v4172 = vsel %vm3857, %v4114, 0
        %v4175 = vsel %vm915, %v4169, 0
        %4177 = vmatprep.subr.bf16.mxu0 0
        %4178 = vmatpush1.bf16.msra.mxu0 %v4167
        %4179 = vmatprep.subr.bf16.mxu0 0
        %4180 = vmatpush1.bf16.msra.mxu0 %v4175
        %4181 = vmatprep.subr.bf16.mxu0 0
        %4182 = vmatpush1.bf16.msra.mxu0 0
        %4183 = vmatprep.subr.bf16.mxu0 0
        %4184 = vmatpush1.bf16.msra.mxu0 0
        %4185 = vmatprep.subr.bf16.mxu0 0
        %4186 = vmatpush1.bf16.msra.mxu0 0
        %4187 = vmatprep.subr.bf16.mxu0 0
        %4188 = vmatpush1.bf16.msra.mxu0 0
        %4189 = vmatprep.subr.bf16.mxu0 0
        %4190 = vmatpush1.bf16.msra.mxu0 0
        %4191 = vmatprep.subr.bf16.mxu0 0
        %4192 = vmatpush1.bf16.msra.mxu0 0
        %4193 = vmatprep.subr.bf16.mxu0 0
        %4194 = vmatpush1.bf16.msra.mxu0 0
        %4195 = vmatprep.subr.bf16.mxu0 0
        %4196 = vmatpush1.bf16.msra.mxu0 0
        %4197 = vmatprep.subr.bf16.mxu0 0
        %4198 = vmatpush1.bf16.msra.mxu0 0
        %4199 = vmatprep.subr.bf16.mxu0 0
        %4200 = vmatpush1.bf16.msra.mxu0 0
        %4201 = vmatprep.subr.bf16.mxu0 0
        %4202 = vmatpush1.bf16.msra.mxu0 0
        %4203 = vmatprep.subr.bf16.mxu0 0
        %4204 = vmatpush1.bf16.msra.mxu0 0
        %4205 = vmatprep.subr.bf16.mxu0 0
        %4206 = vmatpush1.bf16.msra.mxu0 0
        %4207 = vmatprep.subr.bf16.mxu0 0
        %4208 = vmatpush1.bf16.msra.mxu0 0
        %4209 = vmatprep.mubr.bf16.mxu0 0
        %4210 = vmatmul.mubr.bf16.gmra.mrb[0].mxu0 %v4172
        %v4211 = vpop.f32.mrb[0].mxu0
        %v4212 = vadd.f32 0.0, %v4211
        %v4213 = vpop.f32.mrb[0].mxu0
        %v4214 = vpop.f32.mrb[0].mxu0
        %v4215 = vpop.f32.mrb[0].mxu0
        %4216 = vdwg.mxu0
        %v4217 = vpack.c.bf16 %v4212, %v4161
        %v4222 = vunpack.c.l.b16 %v3743
        %v4223 = vunpack.c.l.b16 %v3744
        %v4224 = vunpack.c.l.b16 %v3745
        %v4225 = vunpack.c.l.b16 %v3746
        %v4226 = vpack.c.b16 %v4223, %v4222
        %v4227 = vpack.c.b16 %v4225, %v4224
        %v4231 = vsel %vm794, %v4217, 0
        %4233 = vmatprep.subr.bf16.mxu0 0
        %4234 = vmatpush1.bf16.msra.mxu0 %v4226
        %4235 = vmatprep.subr.bf16.mxu0 0
        %4236 = vmatpush1.bf16.msra.mxu0 %v4227
        %4237 = vmatprep.subr.bf16.mxu0 0
        %4238 = vmatpush1.bf16.msra.mxu0 0
        %4239 = vmatprep.subr.bf16.mxu0 0
        %4240 = vmatpush1.bf16.msra.mxu0 0
        %4241 = vmatprep.subr.bf16.mxu0 0
        %4242 = vmatpush1.bf16.msra.mxu0 0
        %4243 = vmatprep.subr.bf16.mxu0 0
        %4244 = vmatpush1.bf16.msra.mxu0 0
        %4245 = vmatprep.subr.bf16.mxu0 0
        %4246 = vmatpush1.bf16.msra.mxu0 0
        %4247 = vmatprep.subr.bf16.mxu0 0
        %4248 = vmatpush1.bf16.msra.mxu0 0
        %4249 = vmatprep.subr.bf16.mxu0 0
        %4250 = vmatpush1.bf16.msra.mxu0 0
        %4251 = vmatprep.subr.bf16.mxu0 0
        %4252 = vmatpush1.bf16.msra.mxu0 0
        %4253 = vmatprep.subr.bf16.mxu0 0
        %4254 = vmatpush1.bf16.msra.mxu0 0
        %4255 = vmatprep.subr.bf16.mxu0 0
        %4256 = vmatpush1.bf16.msra.mxu0 0
        %4257 = vmatprep.subr.bf16.mxu0 0
        %4258 = vmatpush1.bf16.msra.mxu0 0
        %4259 = vmatprep.subr.bf16.mxu0 0
        %4260 = vmatpush1.bf16.msra.mxu0 0
        %4261 = vmatprep.subr.bf16.mxu0 0
        %4262 = vmatpush1.bf16.msra.mxu0 0
        %4263 = vmatprep.subr.bf16.mxu0 0
        %4264 = vmatpush1.bf16.msra.mxu0 0
        %4265 = vmatprep.mubr.bf16.mxu0 0
        %4266 = vmatmul.mubr.bf16.gmra.mrb[0].mxu0 %v4231
        %v4267 = vpop.f32.mrb[0].mxu0
        %v4268 = vadd.f32 0.0, %v4267
        %v4269 = vpop.f32.mrb[0].mxu0
        %v4270 = vpop.f32.mrb[0].mxu0
        %v4271 = vadd.f32 0.0, %v4270
        %v4272 = vpop.f32.mrb[0].mxu0
        %4273 = vdwg.mxu0
        %v4278 = vunpack.c.l.b16 %v3739
        %v4279 = vunpack.c.l.b16 %v3740
        %v4280 = vunpack.c.l.b16 %v3741
        %v4281 = vunpack.c.l.b16 %v3742
        %v4282 = vpack.c.b16 %v4279, %v4278
        %v4283 = vpack.c.b16 %v4281, %v4280
        %v4287 = vsel %vm794, %v3980, 0
        %4289 = vmatprep.subr.bf16.mxu0 0
        %4290 = vmatpush1.bf16.msra.mxu0 %v4282
        %4291 = vmatprep.subr.bf16.mxu0 0
        %4292 = vmatpush1.bf16.msra.mxu0 %v4283
        %4293 = vmatprep.subr.bf16.mxu0 0
        %4294 = vmatpush1.bf16.msra.mxu0 0
        %4295 = vmatprep.subr.bf16.mxu0 0
        %4296 = vmatpush1.bf16.msra.mxu0 0
        %4297 = vmatprep.subr.bf16.mxu0 0
        %4298 = vmatpush1.bf16.msra.mxu0 0
        %4299 = vmatprep.subr.bf16.mxu0 0
        %4300 = vmatpush1.bf16.msra.mxu0 0
        %4301 = vmatprep.subr.bf16.mxu0 0
        %4302 = vmatpush1.bf16.msra.mxu0 0
        %4303 = vmatprep.subr.bf16.mxu0 0
        %4304 = vmatpush1.bf16.msra.mxu0 0
        %4305 = vmatprep.subr.bf16.mxu0 0
        %4306 = vmatpush1.bf16.msra.mxu0 0
        %4307 = vmatprep.subr.bf16.mxu0 0
        %4308 = vmatpush1.bf16.msra.mxu0 0
        %4309 = vmatprep.subr.bf16.mxu0 0
        %4310 = vmatpush1.bf16.msra.mxu0 0
        %4311 = vmatprep.subr.bf16.mxu0 0
        %4312 = vmatpush1.bf16.msra.mxu0 0
        %4313 = vmatprep.subr.bf16.mxu0 0
        %4314 = vmatpush1.bf16.msra.mxu0 0
        %4315 = vmatprep.subr.bf16.mxu0 0
        %4316 = vmatpush1.bf16.msra.mxu0 0
        %4317 = vmatprep.subr.bf16.mxu0 0
        %4318 = vmatpush1.bf16.msra.mxu0 0
        %4319 = vmatprep.subr.bf16.mxu0 0
        %4320 = vmatpush1.bf16.msra.mxu0 0
        %4321 = vmatprep.mubr.bf16.mxu0 0
        %4322 = vmatmul.mubr.bf16.gmra.mrb[0].mxu0 %v4287
        %v4323 = vpop.f32.mrb[0].mxu0
        %v4324 = vadd.f32 %v4268, %v4323
        %v4325 = vpop.f32.mrb[0].mxu0
        %v4326 = vpop.f32.mrb[0].mxu0
        %v4327 = vadd.f32 %v4271, %v4326
        %v4328 = vpop.f32.mrb[0].mxu0
        %4329 = vdwg.mxu0
        %4330 = vrot.lane.b32.xlu0 %v3713, 64
        %v4331 = vpop.permute.xlu0 %4330
        %4332 = vrot.lane.b32.xlu0 %v3755, 64
        %v4333 = vpop.permute.xlu0 %4332
        %4334 = vrot.lane.b32.xlu0 %v3756, 64
        %v4335 = vpop.permute.xlu0 %4334
        %v4337 = vsel %vm794, %v4331, 0
        %v4340 = vsel %vm794, %v4333, 0
        %v4343 = vsel %vm794, %v4335, 0
        %4345 = vmatprep.subr.bf16.mxu0 0
        %4346 = vmatpush1.bf16.xpose.msra.mxu0 %v4340
        %4347 = vmatprep.subr.bf16.mxu0 0
        %4348 = vmatpush1.bf16.xpose.msra.mxu0 %v4343
        %4349 = vmatprep.subr.bf16.mxu0 0
        %4350 = vmatpush1.bf16.xpose.msra.mxu0 0
        %4351 = vmatprep.subr.bf16.mxu0 0
        %4352 = vmatpush1.bf16.xpose.msra.mxu0 0
        %4353 = vmatprep.subr.bf16.mxu0 0
        %4354 = vmatpush1.bf16.xpose.msra.mxu0 0
        %4355 = vmatprep.subr.bf16.mxu0 0
        %4356 = vmatpush1.bf16.xpose.msra.mxu0 0
        %4357 = vmatprep.subr.bf16.mxu0 0
        %4358 = vmatpush1.bf16.xpose.msra.mxu0 0
        %4359 = vmatprep.subr.bf16.mxu0 0
        %4360 = vmatpush1.bf16.xpose.msra.mxu0 0
        %4361 = vmatprep.subr.bf16.mxu0 0
        %4362 = vmatpush1.bf16.xpose.msra.mxu0 0
        %4363 = vmatprep.subr.bf16.mxu0 0
        %4364 = vmatpush1.bf16.xpose.msra.mxu0 0
        %4365 = vmatprep.subr.bf16.mxu0 0
        %4366 = vmatpush1.bf16.xpose.msra.mxu0 0
        %4367 = vmatprep.subr.bf16.mxu0 0
        %4368 = vmatpush1.bf16.xpose.msra.mxu0 0
        %4369 = vmatprep.subr.bf16.mxu0 0
        %4370 = vmatpush1.bf16.xpose.msra.mxu0 0
        %4371 = vmatprep.subr.bf16.mxu0 0
        %4372 = vmatpush1.bf16.xpose.msra.mxu0 0
        %4373 = vmatprep.subr.bf16.mxu0 0
        %4374 = vmatpush1.bf16.xpose.msra.mxu0 0
        %4375 = vmatprep.subr.bf16.mxu0 0
        %4376 = vmatpush1.bf16.xpose.msra.mxu0 0
        %4377 = vmatprep.mubr.bf16.mxu0 0
        %4378 = vmatmul.mubr.bf16.gmra.mrb[0].mxu0 %v4337
        %v4379 = vpop.f32.mrb[0].mxu0
        %v4380 = vadd.f32 %v3705, %v4379
        %v4381 = vpop.f32.mrb[0].mxu0
        %v4382 = vpop.f32.mrb[0].mxu0
        %v4383 = vpop.f32.mrb[0].mxu0
        %4384 = vdwg.mxu0
        %4385 = vrot.lane.b32.xlu0 %v3714, 64
        %v4386 = vpop.permute.xlu0 %4385
        %4387 = vrot.lane.b32.xlu0 %v3806, 64
        %v4388 = vpop.permute.xlu0 %4387
        %4389 = vrot.lane.b32.xlu0 %v3807, 64
        %v4390 = vpop.permute.xlu0 %4389
        %v4392 = vsel %vm794, %v4386, 0
        %v4395 = vsel %vm794, %v4388, 0
        %v4398 = vsel %vm794, %v4390, 0
        %4400 = vmatprep.subr.bf16.mxu0 0
        %4401 = vmatpush1.bf16.xpose.msra.mxu0 %v4395
        %4402 = vmatprep.subr.bf16.mxu0 0
        %4403 = vmatpush1.bf16.xpose.msra.mxu0 %v4398
        %4404 = vmatprep.subr.bf16.mxu0 0
        %4405 = vmatpush1.bf16.xpose.msra.mxu0 0
        %4406 = vmatprep.subr.bf16.mxu0 0
        %4407 = vmatpush1.bf16.xpose.msra.mxu0 0
        %4408 = vmatprep.subr.bf16.mxu0 0
        %4409 = vmatpush1.bf16.xpose.msra.mxu0 0
        %4410 = vmatprep.subr.bf16.mxu0 0
        %4411 = vmatpush1.bf16.xpose.msra.mxu0 0
        %4412 = vmatprep.subr.bf16.mxu0 0
        %4413 = vmatpush1.bf16.xpose.msra.mxu0 0
        %4414 = vmatprep.subr.bf16.mxu0 0
        %4415 = vmatpush1.bf16.xpose.msra.mxu0 0
        %4416 = vmatprep.subr.bf16.mxu0 0
        %4417 = vmatpush1.bf16.xpose.msra.mxu0 0
        %4418 = vmatprep.subr.bf16.mxu0 0
        %4419 = vmatpush1.bf16.xpose.msra.mxu0 0
        %4420 = vmatprep.subr.bf16.mxu0 0
        %4421 = vmatpush1.bf16.xpose.msra.mxu0 0
        %4422 = vmatprep.subr.bf16.mxu0 0
        %4423 = vmatpush1.bf16.xpose.msra.mxu0 0
        %4424 = vmatprep.subr.bf16.mxu0 0
        %4425 = vmatpush1.bf16.xpose.msra.mxu0 0
        %4426 = vmatprep.subr.bf16.mxu0 0
        %4427 = vmatpush1.bf16.xpose.msra.mxu0 0
        %4428 = vmatprep.subr.bf16.mxu0 0
        %4429 = vmatpush1.bf16.xpose.msra.mxu0 0
        %4430 = vmatprep.subr.bf16.mxu0 0
        %4431 = vmatpush1.bf16.xpose.msra.mxu0 0
        %4432 = vmatprep.mubr.bf16.mxu0 0
        %4433 = vmatmul.mubr.bf16.gmra.mrb[0].mxu0 %v4392
        %v4434 = vpop.f32.mrb[0].mxu0
        %v4435 = vadd.f32 %v3706, %v4434
        %v4436 = vpop.f32.mrb[0].mxu0
        %v4437 = vpop.f32.mrb[0].mxu0
        %v4438 = vpop.f32.mrb[0].mxu0
        %4439 = vdwg.mxu0
        %v4440 = vsel %vm3857, %v4380, -inf
        %4441 = vmax.xlane.f32.xlu0 %v4440
        %v4442 = vpop.xlane.xlu0 %4441
        %v4443 = vsel %vm3857, %v4435, -inf
        %4444 = vmax.xlane.f32.xlu0 %v4443
        %v4445 = vpop.xlane.xlu0 %4444
        %v4446 = vsub.f32 %v4380, %v4442
        %v4447 = vsub.f32 %v4435, %v4445
        %v4448 = vmul.f32 %v4446, 1.442695
        %v4449 = vpow.pop %v4448
        %v4450 = vmul.f32 %v4447, 1.442695
        %v4451 = vpow.pop %v4450
        %v4452 = vsel %vm3857, %v4449, 0.0
        %4453 = vadd.xlane.f32.xlu0 %v4452
        %v4454 = vpop.xlane.xlu0 %4453
        %v4455 = vsel %vm3857, %v4451, 0.0
        %4456 = vadd.xlane.f32.xlu0 %v4455
        %v4457 = vpop.xlane.xlu0 %4456
        %v4458 = vrcp.pop %v4454
        %v4459 = vrcp.pop %v4457
        %v4460 = vmul.f32 %v4449, %v4458
        %v4461 = vmul.f32 %v4451, %v4459
        %v4462 = vpack.c.bf16 %v4460, %v4460
        %v4463 = vpack.c.bf16 %v4461, %v4461
        %4464 = vrot.lane.b32.xlu0 %v3882, 64
        %v4465 = vpop.permute.xlu0 %4464
        %4466 = vrot.lane.b32.xlu0 %v3883, 64
        %v4467 = vpop.permute.xlu0 %4466
        %v4470 = vsel %vm3857, %v4462, 0
        %v4473 = vsel %vm915, %v4467, 0
        %4475 = vmatprep.subr.bf16.mxu0 0
        %4476 = vmatpush1.bf16.msra.mxu0 %v4465
        %4477 = vmatprep.subr.bf16.mxu0 0
        %4478 = vmatpush1.bf16.msra.mxu0 %v4473
        %4479 = vmatprep.subr.bf16.mxu0 0
        %4480 = vmatpush1.bf16.msra.mxu0 0
        %4481 = vmatprep.subr.bf16.mxu0 0
        %4482 = vmatpush1.bf16.msra.mxu0 0
        %4483 = vmatprep.subr.bf16.mxu0 0
        %4484 = vmatpush1.bf16.msra.mxu0 0
        %4485 = vmatprep.subr.bf16.mxu0 0
        %4486 = vmatpush1.bf16.msra.mxu0 0
        %4487 = vmatprep.subr.bf16.mxu0 0
        %4488 = vmatpush1.bf16.msra.mxu0 0
        %4489 = vmatprep.subr.bf16.mxu0 0
        %4490 = vmatpush1.bf16.msra.mxu0 0
        %4491 = vmatprep.subr.bf16.mxu0 0
        %4492 = vmatpush1.bf16.msra.mxu0 0
        %4493 = vmatprep.subr.bf16.mxu0 0
        %4494 = vmatpush1.bf16.msra.mxu0 0
        %4495 = vmatprep.subr.bf16.mxu0 0
        %4496 = vmatpush1.bf16.msra.mxu0 0
        %4497 = vmatprep.subr.bf16.mxu0 0
        %4498 = vmatpush1.bf16.msra.mxu0 0
        %4499 = vmatprep.subr.bf16.mxu0 0
        %4500 = vmatpush1.bf16.msra.mxu0 0
        %4501 = vmatprep.subr.bf16.mxu0 0
        %4502 = vmatpush1.bf16.msra.mxu0 0
        %4503 = vmatprep.subr.bf16.mxu0 0
        %4504 = vmatpush1.bf16.msra.mxu0 0
        %4505 = vmatprep.subr.bf16.mxu0 0
        %4506 = vmatpush1.bf16.msra.mxu0 0
        %4507 = vmatprep.mubr.bf16.mxu0 0
        %4508 = vmatmul.mubr.bf16.gmra.mrb[0].mxu0 %v4470
        %v4509 = vpop.f32.mrb[0].mxu0
        %v4510 = vadd.f32 0.0, %v4509
        %v4511 = vpop.f32.mrb[0].mxu0
        %v4512 = vpop.f32.mrb[0].mxu0
        %v4513 = vpop.f32.mrb[0].mxu0
        %4514 = vdwg.mxu0
        %4515 = vrot.lane.b32.xlu0 %v3931, 64
        %v4516 = vpop.permute.xlu0 %4515
        %4517 = vrot.lane.b32.xlu0 %v3932, 64
        %v4518 = vpop.permute.xlu0 %4517
        %v4521 = vsel %vm3857, %v4463, 0
        %v4524 = vsel %vm915, %v4518, 0
        %4526 = vmatprep.subr.bf16.mxu0 0
        %4527 = vmatpush1.bf16.msra.mxu0 %v4516
        %4528 = vmatprep.subr.bf16.mxu0 0
        %4529 = vmatpush1.bf16.msra.mxu0 %v4524
        %4530 = vmatprep.subr.bf16.mxu0 0
        %4531 = vmatpush1.bf16.msra.mxu0 0
        %4532 = vmatprep.subr.bf16.mxu0 0
        %4533 = vmatpush1.bf16.msra.mxu0 0
        %4534 = vmatprep.subr.bf16.mxu0 0
        %4535 = vmatpush1.bf16.msra.mxu0 0
        %4536 = vmatprep.subr.bf16.mxu0 0
        %4537 = vmatpush1.bf16.msra.mxu0 0
        %4538 = vmatprep.subr.bf16.mxu0 0
        %4539 = vmatpush1.bf16.msra.mxu0 0
        %4540 = vmatprep.subr.bf16.mxu0 0
        %4541 = vmatpush1.bf16.msra.mxu0 0
        %4542 = vmatprep.subr.bf16.mxu0 0
        %4543 = vmatpush1.bf16.msra.mxu0 0
        %4544 = vmatprep.subr.bf16.mxu0 0
        %4545 = vmatpush1.bf16.msra.mxu0 0
        %4546 = vmatprep.subr.bf16.mxu0 0
        %4547 = vmatpush1.bf16.msra.mxu0 0
        %4548 = vmatprep.subr.bf16.mxu0 0
        %4549 = vmatpush1.bf16.msra.mxu0 0
        %4550 = vmatprep.subr.bf16.mxu0 0
        %4551 = vmatpush1.bf16.msra.mxu0 0
        %4552 = vmatprep.subr.bf16.mxu0 0
        %4553 = vmatpush1.bf16.msra.mxu0 0
        %4554 = vmatprep.subr.bf16.mxu0 0
        %4555 = vmatpush1.bf16.msra.mxu0 0
        %4556 = vmatprep.subr.bf16.mxu0 0
        %4557 = vmatpush1.bf16.msra.mxu0 0
        %4558 = vmatprep.mubr.bf16.mxu0 0
        %4559 = vmatmul.mubr.bf16.gmra.mrb[0].mxu0 %v4521
        %v4560 = vpop.f32.mrb[0].mxu0
        %v4561 = vadd.f32 0.0, %v4560
        %v4562 = vpop.f32.mrb[0].mxu0
        %v4563 = vpop.f32.mrb[0].mxu0
        %v4564 = vpop.f32.mrb[0].mxu0
        %4565 = vdwg.mxu0
        %v4566 = vpack.c.bf16 %v4561, %v4510
        %v4571 = vunpack.c.l.b16 %v3747
        %v4572 = vunpack.c.l.b16 %v3748
        %v4573 = vunpack.c.l.b16 %v3749
        %v4574 = vunpack.c.l.b16 %v3750
        %v4575 = vpack.c.b16 %v4572, %v4571
        %v4576 = vpack.c.b16 %v4574, %v4573
        %v4580 = vsel %vm794, %v4566, 0
        %4582 = vmatprep.subr.bf16.mxu0 0
        %4583 = vmatpush1.bf16.msra.mxu0 %v4575
        %4584 = vmatprep.subr.bf16.mxu0 0
        %4585 = vmatpush1.bf16.msra.mxu0 %v4576
        %4586 = vmatprep.subr.bf16.mxu0 0
        %4587 = vmatpush1.bf16.msra.mxu0 0
        %4588 = vmatprep.subr.bf16.mxu0 0
        %4589 = vmatpush1.bf16.msra.mxu0 0
        %4590 = vmatprep.subr.bf16.mxu0 0
        %4591 = vmatpush1.bf16.msra.mxu0 0
        %4592 = vmatprep.subr.bf16.mxu0 0
        %4593 = vmatpush1.bf16.msra.mxu0 0
        %4594 = vmatprep.subr.bf16.mxu0 0
        %4595 = vmatpush1.bf16.msra.mxu0 0
        %4596 = vmatprep.subr.bf16.mxu0 0
        %4597 = vmatpush1.bf16.msra.mxu0 0
        %4598 = vmatprep.subr.bf16.mxu0 0
        %4599 = vmatpush1.bf16.msra.mxu0 0
        %4600 = vmatprep.subr.bf16.mxu0 0
        %4601 = vmatpush1.bf16.msra.mxu0 0
        %4602 = vmatprep.subr.bf16.mxu0 0
        %4603 = vmatpush1.bf16.msra.mxu0 0
        %4604 = vmatprep.subr.bf16.mxu0 0
        %4605 = vmatpush1.bf16.msra.mxu0 0
        %4606 = vmatprep.subr.bf16.mxu0 0
        %4607 = vmatpush1.bf16.msra.mxu0 0
        %4608 = vmatprep.subr.bf16.mxu0 0
        %4609 = vmatpush1.bf16.msra.mxu0 0
        %4610 = vmatprep.subr.bf16.mxu0 0
        %4611 = vmatpush1.bf16.msra.mxu0 0
        %4612 = vmatprep.subr.bf16.mxu0 0
        %4613 = vmatpush1.bf16.msra.mxu0 0
        %4614 = vmatprep.mubr.bf16.mxu0 0
        %4615 = vmatmul.mubr.bf16.gmra.mrb[0].mxu0 %v4580
        %v4616 = vpop.f32.mrb[0].mxu0
        %v4617 = vadd.f32 0.0, %v4616
        %v4618 = vpop.f32.mrb[0].mxu0
        %v4619 = vpop.f32.mrb[0].mxu0
        %v4620 = vadd.f32 0.0, %v4619
        %v4621 = vpop.f32.mrb[0].mxu0
        %4622 = vdwg.mxu0
        %v4623 = vadd.f32 %v4324, %v4617
        %v4624 = vadd.f32 %v4327, %v4620
        %4625 = vrot.lane.b32.xlu0 %v3713, 32
        %v4626 = vpop.permute.xlu0 %4625
        %4627 = vrot.lane.b32.xlu0 %v3755, 32
        %v4628 = vpop.permute.xlu0 %4627
        %4629 = vrot.lane.b32.xlu0 %v3756, 32
        %v4630 = vpop.permute.xlu0 %4629
        %v4632 = vsel %vm794, %v4626, 0
        %v4635 = vsel %vm794, %v4628, 0
        %v4638 = vsel %vm794, %v4630, 0
        %4640 = vmatprep.subr.bf16.mxu0 0
        %4641 = vmatpush1.bf16.xpose.msra.mxu0 %v4635
        %4642 = vmatprep.subr.bf16.mxu0 0
        %4643 = vmatpush1.bf16.xpose.msra.mxu0 %v4638
        %4644 = vmatprep.subr.bf16.mxu0 0
        %4645 = vmatpush1.bf16.xpose.msra.mxu0 0
        %4646 = vmatprep.subr.bf16.mxu0 0
        %4647 = vmatpush1.bf16.xpose.msra.mxu0 0
        %4648 = vmatprep.subr.bf16.mxu0 0
        %4649 = vmatpush1.bf16.xpose.msra.mxu0 0
        %4650 = vmatprep.subr.bf16.mxu0 0
        %4651 = vmatpush1.bf16.xpose.msra.mxu0 0
        %4652 = vmatprep.subr.bf16.mxu0 0
        %4653 = vmatpush1.bf16.xpose.msra.mxu0 0
        %4654 = vmatprep.subr.bf16.mxu0 0
        %4655 = vmatpush1.bf16.xpose.msra.mxu0 0
        %4656 = vmatprep.subr.bf16.mxu0 0
        %4657 = vmatpush1.bf16.xpose.msra.mxu0 0
        %4658 = vmatprep.subr.bf16.mxu0 0
        %4659 = vmatpush1.bf16.xpose.msra.mxu0 0
        %4660 = vmatprep.subr.bf16.mxu0 0
        %4661 = vmatpush1.bf16.xpose.msra.mxu0 0
        %4662 = vmatprep.subr.bf16.mxu0 0
        %4663 = vmatpush1.bf16.xpose.msra.mxu0 0
        %4664 = vmatprep.subr.bf16.mxu0 0
        %4665 = vmatpush1.bf16.xpose.msra.mxu0 0
        %4666 = vmatprep.subr.bf16.mxu0 0
        %4667 = vmatpush1.bf16.xpose.msra.mxu0 0
        %4668 = vmatprep.subr.bf16.mxu0 0
        %4669 = vmatpush1.bf16.xpose.msra.mxu0 0
        %4670 = vmatprep.subr.bf16.mxu0 0
        %4671 = vmatpush1.bf16.xpose.msra.mxu0 0
        %4672 = vmatprep.mubr.bf16.mxu0 0
        %4673 = vmatmul.mubr.bf16.gmra.mrb[0].mxu0 %v4632
        %v4674 = vpop.f32.mrb[0].mxu0
        %v4675 = vadd.f32 %v3705, %v4674
        %v4676 = vpop.f32.mrb[0].mxu0
        %v4677 = vpop.f32.mrb[0].mxu0
        %v4678 = vpop.f32.mrb[0].mxu0
        %4679 = vdwg.mxu0
        %4680 = vrot.lane.b32.xlu0 %v3714, 32
        %v4681 = vpop.permute.xlu0 %4680
        %4682 = vrot.lane.b32.xlu0 %v3806, 32
        %v4683 = vpop.permute.xlu0 %4682
        %4684 = vrot.lane.b32.xlu0 %v3807, 32
        %v4685 = vpop.permute.xlu0 %4684
        %v4687 = vsel %vm794, %v4681, 0
        %v4690 = vsel %vm794, %v4683, 0
        %v4693 = vsel %vm794, %v4685, 0
        %4695 = vmatprep.subr.bf16.mxu0 0
        %4696 = vmatpush1.bf16.xpose.msra.mxu0 %v4690
        %4697 = vmatprep.subr.bf16.mxu0 0
        %4698 = vmatpush1.bf16.xpose.msra.mxu0 %v4693
        %4699 = vmatprep.subr.bf16.mxu0 0
        %4700 = vmatpush1.bf16.xpose.msra.mxu0 0
        %4701 = vmatprep.subr.bf16.mxu0 0
        %4702 = vmatpush1.bf16.xpose.msra.mxu0 0
        %4703 = vmatprep.subr.bf16.mxu0 0
        %4704 = vmatpush1.bf16.xpose.msra.mxu0 0
        %4705 = vmatprep.subr.bf16.mxu0 0
        %4706 = vmatpush1.bf16.xpose.msra.mxu0 0
        %4707 = vmatprep.subr.bf16.mxu0 0
        %4708 = vmatpush1.bf16.xpose.msra.mxu0 0
        %4709 = vmatprep.subr.bf16.mxu0 0
        %4710 = vmatpush1.bf16.xpose.msra.mxu0 0
        %4711 = vmatprep.subr.bf16.mxu0 0
        %4712 = vmatpush1.bf16.xpose.msra.mxu0 0
        %4713 = vmatprep.subr.bf16.mxu0 0
        %4714 = vmatpush1.bf16.xpose.msra.mxu0 0
        %4715 = vmatprep.subr.bf16.mxu0 0
        %4716 = vmatpush1.bf16.xpose.msra.mxu0 0
        %4717 = vmatprep.subr.bf16.mxu0 0
        %4718 = vmatpush1.bf16.xpose.msra.mxu0 0
        %4719 = vmatprep.subr.bf16.mxu0 0
        %4720 = vmatpush1.bf16.xpose.msra.mxu0 0
        %4721 = vmatprep.subr.bf16.mxu0 0
        %4722 = vmatpush1.bf16.xpose.msra.mxu0 0
        %4723 = vmatprep.subr.bf16.mxu0 0
        %4724 = vmatpush1.bf16.xpose.msra.mxu0 0
        %4725 = vmatprep.subr.bf16.mxu0 0
        %4726 = vmatpush1.bf16.xpose.msra.mxu0 0
        %4727 = vmatprep.mubr.bf16.mxu0 0
        %4728 = vmatmul.mubr.bf16.gmra.mrb[0].mxu0 %v4687
        %v4729 = vpop.f32.mrb[0].mxu0
        %v4730 = vadd.f32 %v3706, %v4729
        %v4731 = vpop.f32.mrb[0].mxu0
        %v4732 = vpop.f32.mrb[0].mxu0
        %v4733 = vpop.f32.mrb[0].mxu0
        %4734 = vdwg.mxu0
        %v4735 = vsel %vm3857, %v4675, -inf
        %4736 = vmax.xlane.f32.xlu0 %v4735
        %v4737 = vpop.xlane.xlu0 %4736
        %v4738 = vsel %vm3857, %v4730, -inf
        %4739 = vmax.xlane.f32.xlu0 %v4738
        %v4740 = vpop.xlane.xlu0 %4739
        %v4741 = vsub.f32 %v4675, %v4737
        %v4742 = vsub.f32 %v4730, %v4740
        %v4743 = vmul.f32 %v4741, 1.442695
        %v4744 = vpow.pop %v4743
        %v4745 = vmul.f32 %v4742, 1.442695
        %v4746 = vpow.pop %v4745
        %v4747 = vsel %vm3857, %v4744, 0.0
        %4748 = vadd.xlane.f32.xlu0 %v4747
        %v4749 = vpop.xlane.xlu0 %4748
        %v4750 = vsel %vm3857, %v4746, 0.0
        %4751 = vadd.xlane.f32.xlu0 %v4750
        %v4752 = vpop.xlane.xlu0 %4751
        %v4753 = vrcp.pop %v4749
        %v4754 = vrcp.pop %v4752
        %v4755 = vmul.f32 %v4744, %v4753
        %v4756 = vmul.f32 %v4746, %v4754
        %v4757 = vpack.c.bf16 %v4755, %v4755
        %v4758 = vpack.c.bf16 %v4756, %v4756
        %4759 = vrot.lane.b32.xlu0 %v3882, 32
        %v4760 = vpop.permute.xlu0 %4759
        %4761 = vrot.lane.b32.xlu0 %v3883, 32
        %v4762 = vpop.permute.xlu0 %4761
        %v4765 = vsel %vm3857, %v4757, 0
        %v4768 = vsel %vm915, %v4762, 0
        %4770 = vmatprep.subr.bf16.mxu0 0
        %4771 = vmatpush1.bf16.msra.mxu0 %v4760
        %4772 = vmatprep.subr.bf16.mxu0 0
        %4773 = vmatpush1.bf16.msra.mxu0 %v4768
        %4774 = vmatprep.subr.bf16.mxu0 0
        %4775 = vmatpush1.bf16.msra.mxu0 0
        %4776 = vmatprep.subr.bf16.mxu0 0
        %4777 = vmatpush1.bf16.msra.mxu0 0
        %4778 = vmatprep.subr.bf16.mxu0 0
        %4779 = vmatpush1.bf16.msra.mxu0 0
        %4780 = vmatprep.subr.bf16.mxu0 0
        %4781 = vmatpush1.bf16.msra.mxu0 0
        %4782 = vmatprep.subr.bf16.mxu0 0
        %4783 = vmatpush1.bf16.msra.mxu0 0
        %4784 = vmatprep.subr.bf16.mxu0 0
        %4785 = vmatpush1.bf16.msra.mxu0 0
        %4786 = vmatprep.subr.bf16.mxu0 0
        %4787 = vmatpush1.bf16.msra.mxu0 0
        %4788 = vmatprep.subr.bf16.mxu0 0
        %4789 = vmatpush1.bf16.msra.mxu0 0
        %4790 = vmatprep.subr.bf16.mxu0 0
        %4791 = vmatpush1.bf16.msra.mxu0 0
        %4792 = vmatprep.subr.bf16.mxu0 0
        %4793 = vmatpush1.bf16.msra.mxu0 0
        %4794 = vmatprep.subr.bf16.mxu0 0
        %4795 = vmatpush1.bf16.msra.mxu0 0
        %4796 = vmatprep.subr.bf16.mxu0 0
        %4797 = vmatpush1.bf16.msra.mxu0 0
        %4798 = vmatprep.subr.bf16.mxu0 0
        %4799 = vmatpush1.bf16.msra.mxu0 0
        %4800 = vmatprep.subr.bf16.mxu0 0
        %4801 = vmatpush1.bf16.msra.mxu0 0
        %4802 = vmatprep.mubr.bf16.mxu0 0
        %4803 = vmatmul.mubr.bf16.gmra.mrb[0].mxu0 %v4765
        %v4804 = vpop.f32.mrb[0].mxu0
        %v4805 = vadd.f32 0.0, %v4804
        %v4806 = vpop.f32.mrb[0].mxu0
        %v4807 = vpop.f32.mrb[0].mxu0
        %v4808 = vpop.f32.mrb[0].mxu0
        %4809 = vdwg.mxu0
        %4810 = vrot.lane.b32.xlu0 %v3931, 32
        %v4811 = vpop.permute.xlu0 %4810
        %4812 = vrot.lane.b32.xlu0 %v3932, 32
        %v4813 = vpop.permute.xlu0 %4812
        %v4816 = vsel %vm3857, %v4758, 0
        %v4819 = vsel %vm915, %v4813, 0
        %4821 = vmatprep.subr.bf16.mxu0 0
        %4822 = vmatpush1.bf16.msra.mxu0 %v4811
        %4823 = vmatprep.subr.bf16.mxu0 0
        %4824 = vmatpush1.bf16.msra.mxu0 %v4819
        %4825 = vmatprep.subr.bf16.mxu0 0
        %4826 = vmatpush1.bf16.msra.mxu0 0
        %4827 = vmatprep.subr.bf16.mxu0 0
        %4828 = vmatpush1.bf16.msra.mxu0 0
        %4829 = vmatprep.subr.bf16.mxu0 0
        %4830 = vmatpush1.bf16.msra.mxu0 0
        %4831 = vmatprep.subr.bf16.mxu0 0
        %4832 = vmatpush1.bf16.msra.mxu0 0
        %4833 = vmatprep.subr.bf16.mxu0 0
        %4834 = vmatpush1.bf16.msra.mxu0 0
        %4835 = vmatprep.subr.bf16.mxu0 0
        %4836 = vmatpush1.bf16.msra.mxu0 0
        %4837 = vmatprep.subr.bf16.mxu0 0
        %4838 = vmatpush1.bf16.msra.mxu0 0
        %4839 = vmatprep.subr.bf16.mxu0 0
        %4840 = vmatpush1.bf16.msra.mxu0 0
        %4841 = vmatprep.subr.bf16.mxu0 0
        %4842 = vmatpush1.bf16.msra.mxu0 0
        %4843 = vmatprep.subr.bf16.mxu0 0
        %4844 = vmatpush1.bf16.msra.mxu0 0
        %4845 = vmatprep.subr.bf16.mxu0 0
        %4846 = vmatpush1.bf16.msra.mxu0 0
        %4847 = vmatprep.subr.bf16.mxu0 0
        %4848 = vmatpush1.bf16.msra.mxu0 0
        %4849 = vmatprep.subr.bf16.mxu0 0
        %4850 = vmatpush1.bf16.msra.mxu0 0
        %4851 = vmatprep.subr.bf16.mxu0 0
        %4852 = vmatpush1.bf16.msra.mxu0 0
        %4853 = vmatprep.mubr.bf16.mxu0 0
        %4854 = vmatmul.mubr.bf16.gmra.mrb[0].mxu0 %v4816
        %v4855 = vpop.f32.mrb[0].mxu0
        %v4856 = vadd.f32 0.0, %v4855
        %v4857 = vpop.f32.mrb[0].mxu0
        %v4858 = vpop.f32.mrb[0].mxu0
        %v4859 = vpop.f32.mrb[0].mxu0
        %4860 = vdwg.mxu0
        %v4861 = vpack.c.bf16 %v4856, %v4805
        %v4866 = vunpack.c.l.b16 %v3751
        %v4867 = vunpack.c.l.b16 %v3752
        %v4868 = vunpack.c.l.b16 %v3753
        %v4869 = vunpack.c.l.b16 %v3754
        %v4870 = vpack.c.b16 %v4867, %v4866
        %v4871 = vpack.c.b16 %v4869, %v4868
        %v4875 = vsel %vm794, %v4861, 0
        %4877 = vmatprep.subr.bf16.mxu0 0
        %4878 = vmatpush1.bf16.msra.mxu0 %v4870
        %4879 = vmatprep.subr.bf16.mxu0 0
        %4880 = vmatpush1.bf16.msra.mxu0 %v4871
        %4881 = vmatprep.subr.bf16.mxu0 0
        %4882 = vmatpush1.bf16.msra.mxu0 0
        %4883 = vmatprep.subr.bf16.mxu0 0
        %4884 = vmatpush1.bf16.msra.mxu0 0
        %4885 = vmatprep.subr.bf16.mxu0 0
        %4886 = vmatpush1.bf16.msra.mxu0 0
        %4887 = vmatprep.subr.bf16.mxu0 0
        %4888 = vmatpush1.bf16.msra.mxu0 0
        %4889 = vmatprep.subr.bf16.mxu0 0
        %4890 = vmatpush1.bf16.msra.mxu0 0
        %4891 = vmatprep.subr.bf16.mxu0 0
        %4892 = vmatpush1.bf16.msra.mxu0 0
        %4893 = vmatprep.subr.bf16.mxu0 0
        %4894 = vmatpush1.bf16.msra.mxu0 0
        %4895 = vmatprep.subr.bf16.mxu0 0
        %4896 = vmatpush1.bf16.msra.mxu0 0
        %4897 = vmatprep.subr.bf16.mxu0 0
        %4898 = vmatpush1.bf16.msra.mxu0 0
        %4899 = vmatprep.subr.bf16.mxu0 0
        %4900 = vmatpush1.bf16.msra.mxu0 0
        %4901 = vmatprep.subr.bf16.mxu0 0
        %4902 = vmatpush1.bf16.msra.mxu0 0
        %4903 = vmatprep.subr.bf16.mxu0 0
        %4904 = vmatpush1.bf16.msra.mxu0 0
        %4905 = vmatprep.subr.bf16.mxu0 0
        %4906 = vmatpush1.bf16.msra.mxu0 0
        %4907 = vmatprep.subr.bf16.mxu0 0
        %4908 = vmatpush1.bf16.msra.mxu0 0
        %4909 = vmatprep.mubr.bf16.mxu0 0
        %4910 = vmatmul.mubr.bf16.gmra.mrb[0].mxu0 %v4875
        %v4911 = vpop.f32.mrb[0].mxu0
        %v4912 = vadd.f32 0.0, %v4911
        %v4913 = vpop.f32.mrb[0].mxu0
        %v4914 = vpop.f32.mrb[0].mxu0
        %v4915 = vadd.f32 0.0, %v4914
        %v4916 = vpop.f32.mrb[0].mxu0
        %4917 = vdwg.mxu0
        %v4918 = vadd.f32 %v4623, %v4912
        %v4919 = vadd.f32 %v4624, %v4915
        %v4920 = vld [vmem:[%s442 + $0xb] sm:$0x1]
        %v4922 = vlaneseq
        %v4923 = vshrl.u32 %v4922, 7
        %v4924 = vsub.s32 0, %v4923
        %v4925 = vrot.slane %v4920, %v4924
        %v4927 = vadd.f32 %v4918, %v4925
        %v4928 = vadd.f32 %v4919, %v4925
        %v4929 = vadd.f32 %v4927, %v3361
        %v4930 = vadd.f32 %v4928, %v3362
        %4931 = vadd.xlane.f32.xlu0 %v4929
        %v4932 = vpop.xlane.xlu0 %4931
        %4933 = vadd.xlane.f32.xlu0 %v4930
        %v4934 = vpop.xlane.xlu0 %4933
        %v4935 = vmul.f32 %v4932, %v463
        %v4936 = vmul.f32 %v4934, %v463
        %v4937 = vsub.f32 %v4929, %v4935
        %v4938 = vsub.f32 %v4930, %v4936
        %v4939 = vmul.f32 %v4937, %v4937
        %v4940 = vmul.f32 %v4938, %v4938
        %4941 = vadd.xlane.f32.xlu0 %v4939
        %v4942 = vpop.xlane.xlu0 %4941
        %4943 = vadd.xlane.f32.xlu0 %v4940
        %v4944 = vpop.xlane.xlu0 %4943
        %v4945 = vmul.f32 %v4942, %v463
        %v4946 = vmul.f32 %v4944, %v463
        %v4947 = vadd.f32 %v4945, 1e-06
        %v4948 = vadd.f32 %v4946, 1e-06
        %v4949 = vrsqrt.pop %v4947
        %v4950 = vrsqrt.pop %v4948
        %v4951 = vmul.f32 %v4937, %v4949
        %v4952 = vmul.f32 %v4938, %v4950
        %v4953 = vlaneseq
        %v4954 = vshrl.u32 %v4953, 7
        %v4955 = vsub.s32 6, %v4954
        %v4956 = vrot.slane %v456, %v4955
        %v4957 = vmul.f32 %v4951, %v4956
        %v4958 = vmul.f32 %v4952, %v4956
        %v4959 = vlaneseq
        %v4960 = vshrl.u32 %v4959, 7
        %v4961 = vsub.s32 7, %v4960
        %v4962 = vrot.slane %v456, %v4961
        %v4963 = vadd.f32 %v4957, %v4962
        %v4964 = vadd.f32 %v4958, %v4962
        %v4965 = vpack.c.bf16 %v4964, %v4963
        %v4966 = vld [vmem:[%s387 + $0x30] sm:$0xff]
        %v4967 = vld [vmem:[%s387 + $0x68] sm:$0xff]
        %v4968 = vld [vmem:[%s387 + $0xa0] sm:$0xff]
        %v4969 = vld [vmem:[%s387 + $0xd8] sm:$0xff]
        %v4970 = vld [vmem:[%s387 + $0x110] sm:$0xff]
        %v4971 = vld [vmem:[%s387 + $0x148] sm:$0xff]
        %v4972 = vld [vmem:[%s387 + $0x180] sm:$0xff]
        %v4973 = vld [vmem:[%s387 + $0x1b8] sm:$0xff]
        %v4974 = vld [vmem:[%s387 + $0x1f0] sm:$0xff]
        %v4975 = vld [vmem:[%s387 + $0x228] sm:$0xff]
        %v4976 = vld [vmem:[%s387 + $0x260] sm:$0xff]
        %v4977 = vld [vmem:[%s387 + $0x298] sm:$0xff]
        %v4978 = vld [vmem:[%s387 + $0x2d0] sm:$0xff]
        %v4979 = vld [vmem:[%s387 + $0x308] sm:$0xff]
        %v4980 = vld [vmem:[%s387 + $0x340] sm:$0xff]
        %v4981 = vld [vmem:[%s387 + $0x378] sm:$0xff]
        %v4982 = vld [vmem:[%s442 + $0xc] sm:$0x3]
        %v4984 = vlaneseq
        %v4985 = vshrl.u32 %v4984, 7
        %v4986 = vsub.s32 0, %v4985
        %v4987 = vrot.slane %v4982, %v4986
        %v4988 = vlaneseq
        %v4989 = vshrl.u32 %v4988, 7
        %v4990 = vsub.s32 1, %v4989
        %v4991 = vrot.slane %v4982, %v4990
        %v5010 = vunpack.c.l.b16 %v4966
        %v5011 = vunpack.c.h.b16 %v4966
        %v5012 = vunpack.c.l.b16 %v4967
        %v5013 = vunpack.c.h.b16 %v4967
        %v5014 = vunpack.c.l.b16 %v4968
        %v5015 = vunpack.c.h.b16 %v4968
        %v5016 = vunpack.c.l.b16 %v4969
        %v5017 = vunpack.c.h.b16 %v4969
        %v5018 = vunpack.c.l.b16 %v4970
        %v5019 = vunpack.c.h.b16 %v4970
        %v5020 = vunpack.c.l.b16 %v4971
        %v5021 = vunpack.c.h.b16 %v4971
        %v5022 = vunpack.c.l.b16 %v4972
        %v5023 = vunpack.c.h.b16 %v4972
        %v5024 = vunpack.c.l.b16 %v4973
        %v5025 = vunpack.c.h.b16 %v4973
        %v5026 = vunpack.c.l.b16 %v4974
        %v5027 = vunpack.c.h.b16 %v4974
        %v5028 = vunpack.c.l.b16 %v4975
        %v5029 = vunpack.c.h.b16 %v4975
        %v5030 = vunpack.c.l.b16 %v4976
        %v5031 = vunpack.c.h.b16 %v4976
        %v5032 = vunpack.c.l.b16 %v4977
        %v5033 = vunpack.c.h.b16 %v4977
        %v5034 = vunpack.c.l.b16 %v4978
        %v5035 = vunpack.c.h.b16 %v4978
        %v5036 = vunpack.c.l.b16 %v4979
        %v5037 = vunpack.c.h.b16 %v4979
        %v5038 = vunpack.c.l.b16 %v4980
        %v5039 = vunpack.c.h.b16 %v4980
        %v5040 = vunpack.c.l.b16 %v4981
        %v5041 = vunpack.c.h.b16 %v4981
        %v5042 = vpack.c.b16 %v5012, %v5010
        %v5043 = vpack.c.b16 %v5013, %v5011
        %v5044 = vpack.c.b16 %v5016, %v5014
        %v5045 = vpack.c.b16 %v5017, %v5015
        %v5046 = vpack.c.b16 %v5020, %v5018
        %v5047 = vpack.c.b16 %v5021, %v5019
        %v5048 = vpack.c.b16 %v5024, %v5022
        %v5049 = vpack.c.b16 %v5025, %v5023
        %v5050 = vpack.c.b16 %v5028, %v5026
        %v5051 = vpack.c.b16 %v5029, %v5027
        %v5052 = vpack.c.b16 %v5032, %v5030
        %v5053 = vpack.c.b16 %v5033, %v5031
        %v5054 = vpack.c.b16 %v5036, %v5034
        %v5055 = vpack.c.b16 %v5037, %v5035
        %v5056 = vpack.c.b16 %v5040, %v5038
        %v5057 = vpack.c.b16 %v5041, %v5039
        %5074 = vmatprep.subr.bf16.mxu0 %v5043
        %5075 = vmatpush1.bf16.msra.mxu0 %v5042
        %5076 = vmatprep.subr.bf16.mxu0 %v5045
        %5077 = vmatpush1.bf16.msra.mxu0 %v5044
        %5078 = vmatprep.subr.bf16.mxu0 %v5047
        %5079 = vmatpush1.bf16.msra.mxu0 %v5046
        %5080 = vmatprep.subr.bf16.mxu0 %v5049
        %5081 = vmatpush1.bf16.msra.mxu0 %v5048
        %5082 = vmatprep.subr.bf16.mxu0 %v5051
        %5083 = vmatpush1.bf16.msra.mxu0 %v5050
        %5084 = vmatprep.subr.bf16.mxu0 %v5053
        %5085 = vmatpush1.bf16.msra.mxu0 %v5052
        %5086 = vmatprep.subr.bf16.mxu0 %v5055
        %5087 = vmatpush1.bf16.msra.mxu0 %v5054
        %5088 = vmatprep.subr.bf16.mxu0 %v5057
        %5089 = vmatpush1.bf16.msra.mxu0 %v5056
        %5090 = vmatprep.subr.bf16.mxu0 0
        %5091 = vmatpush1.bf16.msra.mxu0 0
        %5092 = vmatprep.subr.bf16.mxu0 0
        %5093 = vmatpush1.bf16.msra.mxu0 0
        %5094 = vmatprep.subr.bf16.mxu0 0
        %5095 = vmatpush1.bf16.msra.mxu0 0
        %5096 = vmatprep.subr.bf16.mxu0 0
        %5097 = vmatpush1.bf16.msra.mxu0 0
        %5098 = vmatprep.subr.bf16.mxu0 0
        %5099 = vmatpush1.bf16.msra.mxu0 0
        %5100 = vmatprep.subr.bf16.mxu0 0
        %5101 = vmatpush1.bf16.msra.mxu0 0
        %5102 = vmatprep.subr.bf16.mxu0 0
        %5103 = vmatpush1.bf16.msra.mxu0 0
        %5104 = vmatprep.subr.bf16.mxu0 0
        %5105 = vmatpush1.bf16.msra.mxu0 0
        %5106 = vmatprep.mubr.bf16.mxu0 0
        %5107 = vmatmul.mubr.bf16.gmra.mrb[0].mxu0 %v4965
        %v5108 = vpop.f32.mrb[0].mxu0
        %v5109 = vadd.f32 %v4987, %v5108
        %v5110 = vpop.f32.mrb[0].mxu0
        %v5111 = vadd.f32 %v4991, %v5110
        %v5112 = vpop.f32.mrb[0].mxu0
        %v5113 = vadd.f32 %v4987, %v5112
        %v5114 = vpop.f32.mrb[0].mxu0
        %v5115 = vadd.f32 %v4991, %v5114
        %5116 = vdwg.mxu0
        %v5117 = vmax.f32 %v5109, 0.0
        %v5118 = vmax.f32 %v5111, 0.0
        %v5119 = vmax.f32 %v5113, 0.0
        %v5120 = vmax.f32 %v5115, 0.0
        %v5121 = vpack.c.bf16 %v5119, %v5117
        %v5122 = vpack.c.bf16 %v5120, %v5118
        %v5123 = vld [vmem:[%s438] sm:$0xf]
        %v5124 = vld [vmem:[%s438 + $0x4] sm:$0xf]
        %v5125 = vld [vmem:[%s438 + $0x8] sm:$0xf]
        %v5126 = vld [vmem:[%s438 + $0xc] sm:$0xf]
        %v5127 = vld [vmem:[%s438 + $0x10] sm:$0xf]
        %v5128 = vld [vmem:[%s438 + $0x14] sm:$0xf]
        %v5129 = vld [vmem:[%s438 + $0x18] sm:$0xf]
        %v5130 = vld [vmem:[%s438 + $0x1c] sm:$0xf]
        %v5131 = vld [vmem:[%s438 + $0x20] sm:$0xf]
        %v5132 = vld [vmem:[%s438 + $0x24] sm:$0xf]
        %v5133 = vld [vmem:[%s438 + $0x28] sm:$0xf]
        %v5134 = vld [vmem:[%s438 + $0x2c] sm:$0xf]
        %v5135 = vld [vmem:[%s438 + $0x30] sm:$0xf]
        %v5136 = vld [vmem:[%s438 + $0x34] sm:$0xf]
        %v5137 = vld [vmem:[%s438 + $0x38] sm:$0xf]
        %v5138 = vld [vmem:[%s438 + $0x3c] sm:$0xf]
        %v5139 = vld [vmem:[%s438 + $0x40] sm:$0xf]
        %v5140 = vld [vmem:[%s438 + $0x44] sm:$0xf]
        %v5141 = vld [vmem:[%s438 + $0x48] sm:$0xf]
        %v5142 = vld [vmem:[%s438 + $0x4c] sm:$0xf]
        %v5143 = vld [vmem:[%s438 + $0x50] sm:$0xf]
        %v5144 = vld [vmem:[%s438 + $0x54] sm:$0xf]
        %v5145 = vld [vmem:[%s438 + $0x58] sm:$0xf]
        %v5146 = vld [vmem:[%s438 + $0x5c] sm:$0xf]
        %v5147 = vld [vmem:[%s438 + $0x60] sm:$0xf]
        %v5148 = vld [vmem:[%s438 + $0x64] sm:$0xf]
        %v5149 = vld [vmem:[%s438 + $0x68] sm:$0xf]
        %v5150 = vld [vmem:[%s438 + $0x6c] sm:$0xf]
        %v5151 = vld [vmem:[%s438 + $0x70] sm:$0xf]
        %v5152 = vld [vmem:[%s438 + $0x74] sm:$0xf]
        %v5153 = vld [vmem:[%s438 + $0x78] sm:$0xf]
        %v5154 = vld [vmem:[%s438 + $0x7c] sm:$0xf]
        %v5155 = vld [vmem:[%s442 + $0xe] sm:$0x1]
        %v5157 = vlaneseq
        %v5158 = vshrl.u32 %v5157, 7
        %v5159 = vsub.s32 0, %v5158
        %v5160 = vrot.slane %v5155, %v5159
        %v5194 = vunpack.c.l.b16 %v5123
        %v5195 = vunpack.c.l.b16 %v5124
        %v5196 = vunpack.c.l.b16 %v5125
        %v5197 = vunpack.c.l.b16 %v5126
        %v5198 = vunpack.c.l.b16 %v5127
        %v5199 = vunpack.c.l.b16 %v5128
        %v5200 = vunpack.c.l.b16 %v5129
        %v5201 = vunpack.c.l.b16 %v5130
        %v5202 = vunpack.c.l.b16 %v5131
        %v5203 = vunpack.c.l.b16 %v5132
        %v5204 = vunpack.c.l.b16 %v5133
        %v5205 = vunpack.c.l.b16 %v5134
        %v5206 = vunpack.c.l.b16 %v5135
        %v5207 = vunpack.c.l.b16 %v5136
        %v5208 = vunpack.c.l.b16 %v5137
        %v5209 = vunpack.c.l.b16 %v5138
        %v5210 = vunpack.c.l.b16 %v5139
        %v5211 = vunpack.c.l.b16 %v5140
        %v5212 = vunpack.c.l.b16 %v5141
        %v5213 = vunpack.c.l.b16 %v5142
        %v5214 = vunpack.c.l.b16 %v5143
        %v5215 = vunpack.c.l.b16 %v5144
        %v5216 = vunpack.c.l.b16 %v5145
        %v5217 = vunpack.c.l.b16 %v5146
        %v5218 = vunpack.c.l.b16 %v5147
        %v5219 = vunpack.c.l.b16 %v5148
        %v5220 = vunpack.c.l.b16 %v5149
        %v5221 = vunpack.c.l.b16 %v5150
        %v5222 = vunpack.c.l.b16 %v5151
        %v5223 = vunpack.c.l.b16 %v5152
        %v5224 = vunpack.c.l.b16 %v5153
        %v5225 = vunpack.c.l.b16 %v5154
        %v5226 = vpack.c.b16 %v5195, %v5194
        %v5227 = vpack.c.b16 %v5197, %v5196
        %v5228 = vpack.c.b16 %v5199, %v5198
        %v5229 = vpack.c.b16 %v5201, %v5200
        %v5230 = vpack.c.b16 %v5203, %v5202
        %v5231 = vpack.c.b16 %v5205, %v5204
        %v5232 = vpack.c.b16 %v5207, %v5206
        %v5233 = vpack.c.b16 %v5209, %v5208
        %v5234 = vpack.c.b16 %v5211, %v5210
        %v5235 = vpack.c.b16 %v5213, %v5212
        %v5236 = vpack.c.b16 %v5215, %v5214
        %v5237 = vpack.c.b16 %v5217, %v5216
        %v5238 = vpack.c.b16 %v5219, %v5218
        %v5239 = vpack.c.b16 %v5221, %v5220
        %v5240 = vpack.c.b16 %v5223, %v5222
        %v5241 = vpack.c.b16 %v5225, %v5224
        %5258 = vmatprep.subr.bf16.mxu0 0
        %5259 = vmatpush1.bf16.msra.mxu0 %v5226
        %5260 = vmatprep.subr.bf16.mxu0 0
        %5261 = vmatpush1.bf16.msra.mxu0 %v5227
        %5262 = vmatprep.subr.bf16.mxu0 0
        %5263 = vmatpush1.bf16.msra.mxu0 %v5228
        %5264 = vmatprep.subr.bf16.mxu0 0
        %5265 = vmatpush1.bf16.msra.mxu0 %v5229
        %5266 = vmatprep.subr.bf16.mxu0 0
        %5267 = vmatpush1.bf16.msra.mxu0 %v5230
        %5268 = vmatprep.subr.bf16.mxu0 0
        %5269 = vmatpush1.bf16.msra.mxu0 %v5231
        %5270 = vmatprep.subr.bf16.mxu0 0
        %5271 = vmatpush1.bf16.msra.mxu0 %v5232
        %5272 = vmatprep.subr.bf16.mxu0 0
        %5273 = vmatpush1.bf16.msra.mxu0 %v5233
        %5274 = vmatprep.subr.bf16.mxu0 0
        %5275 = vmatpush1.bf16.msra.mxu0 %v5234
        %5276 = vmatprep.subr.bf16.mxu0 0
        %5277 = vmatpush1.bf16.msra.mxu0 %v5235
        %5278 = vmatprep.subr.bf16.mxu0 0
        %5279 = vmatpush1.bf16.msra.mxu0 %v5236
        %5280 = vmatprep.subr.bf16.mxu0 0
        %5281 = vmatpush1.bf16.msra.mxu0 %v5237
        %5282 = vmatprep.subr.bf16.mxu0 0
        %5283 = vmatpush1.bf16.msra.mxu0 %v5238
        %5284 = vmatprep.subr.bf16.mxu0 0
        %5285 = vmatpush1.bf16.msra.mxu0 %v5239
        %5286 = vmatprep.subr.bf16.mxu0 0
        %5287 = vmatpush1.bf16.msra.mxu0 %v5240
        %5288 = vmatprep.subr.bf16.mxu0 0
        %5289 = vmatpush1.bf16.msra.mxu0 %v5241
        %5290 = vmatprep.mubr.bf16.mxu0 %v5122
        %5291 = vmatmul.mubr.bf16.gmra.mrb[0].mxu0 %v5121
        %v5292 = vpop.f32.mrb[0].mxu0
        %v5293 = vadd.f32 %v5160, %v5292
        %v5294 = vpop.f32.mrb[0].mxu0
        %v5295 = vpop.f32.mrb[0].mxu0
        %v5296 = vadd.f32 %v5160, %v5295
        %v5297 = vpop.f32.mrb[0].mxu0
        %5298 = vdwg.mxu0
        %v5299 = vadd.f32 %v5293, %v4929
        %v5300 = vadd.f32 %v5296, %v4930
        %5301 = vst [vmem:[#allocation5] sm:$0xff] %v5299
        %5302 = vst [vmem:[#allocation5 + $0x8] sm:$0xff] %v5300
        %p5303 = scmp.eq.s32.totalorder %s26, 1
        // Predicated region
        $region73: #{_lambda_.1} parent=63 // pred_check
          %p5304 = pneg %p5303
        $region74: #{_lambda_.1} parent=63 // pred_check_branch
          %5306 = sbr.rel (%p5304) target = $region76
        $region75: #{_lambda_.1} parent=63 // pred_region
          %v5307 = vld [vmem:[%s10] sm:$0x1]
          %v5308 = vld [vmem:[%s10 + $0x1] sm:$0x1]
          %5309 = vadd.xlane.f32.xlu0 %v5299
          %v5310 = vpop.xlane.xlu0 %5309
          %5311 = vadd.xlane.f32.xlu0 %v5300
          %v5312 = vpop.xlane.xlu0 %5311
          %v5313 = vmul.f32 %v5310, %v463
          %v5314 = vmul.f32 %v5312, %v463
          %v5315 = vsub.f32 %v5299, %v5313
          %v5316 = vsub.f32 %v5300, %v5314
          %v5317 = vmul.f32 %v5315, %v5315
          %v5318 = vmul.f32 %v5316, %v5316
          %5319 = vadd.xlane.f32.xlu0 %v5317
          %v5320 = vpop.xlane.xlu0 %5319
          %5321 = vadd.xlane.f32.xlu0 %v5318
          %v5322 = vpop.xlane.xlu0 %5321
          %v5323 = vmul.f32 %v5320, %v463
          %v5324 = vmul.f32 %v5322, %v463
          %v5325 = vadd.f32 %v5323, 1e-06
          %v5326 = vadd.f32 %v5324, 1e-06
          %v5327 = vrsqrt.pop %v5325
          %v5328 = vrsqrt.pop %v5326
          %v5329 = vmul.f32 %v5315, %v5327
          %v5330 = vmul.f32 %v5316, %v5328
          %v5331 = vlaneseq
          %v5332 = vshrl.u32 %v5331, 7
          %v5333 = vsub.s32 0, %v5332
          %v5334 = vrot.slane %v5307, %v5333
          %v5335 = vmul.f32 %v5329, %v5334
          %v5336 = vmul.f32 %v5330, %v5334
          %v5337 = vlaneseq
          %v5338 = vshrl.u32 %v5337, 7
          %v5339 = vsub.s32 0, %v5338
          %v5340 = vrot.slane %v5308, %v5339
          %v5341 = vadd.f32 %v5335, %v5340
          %v5342 = vadd.f32 %v5336, %v5340
          %5343 = vst [vmem:[#allocation5] sm:$0xff] %v5341
          %5344 = vst [vmem:[#allocation5 + $0x8] sm:$0xff] %v5342
        $region76: #{_lambda_.1} parent=63 // pred_fallthru
          _
        // Predicated region
        $region77: #{_lambda_.1} parent=63 // pred_check
          %p5345 = pneg %p290
        $region78: #{_lambda_.1} parent=63 // pred_check_branch
          %5347 = sbr.rel (%p5345) target = $region80
        $region79: #{_lambda_.1} parent=63 // pred_region
          %s5349 = ssub.s32 256, 256
          %5350 = vsyncadd [#allocation4], %s5349
          %s5351 = sshll.u32 [#allocation5], 4
          %s5352 = int_to_ptr.vmem [resolvable:$true] %s5351
          %5357 = dma.vmem_to_hbm [thread:$0]  %s5352, 256, %s11, [#allocation4], 128, 128, 8
        $region80: #{_lambda_.1} parent=63 // pred_fallthru
          _
        // Predicated region
        $region81: #{_lambda_.1} parent=63 // pred_check
          %p5358 = pneg %p290
        $region82: #{_lambda_.1} parent=63 // pred_check_branch
          %5360 = sbr.rel (%p5358) target = $region84
        $region83: #{_lambda_.1} parent=63 // pred_region
          %5361 = dma.done [#allocation4], 256
        $region84: #{_lambda_.1} parent=63 // pred_fallthru
          _
      $region64: #{_lambda_.1} parent=5 // pred_fallthru
        _
      %p5362 = scmp.le.s32.totalorder 2, %s21
      // Predicated region
      $region85: #{_lambda_.1} parent=5 // pred_check
        %p5363 = pneg %p5362
      $region86: #{_lambda_.1} parent=5 // pred_check_branch
        %5365 = sbr.rel (%p5363) target = $region88
      $region87: #{_lambda_.1} parent=5 // pred_region
        %s5366 = ssub.s32 %s21, 2
      $region88: #{_lambda_.1} parent=5 // pred_fallthru
        _
    $region6: #{_lambda_.1} parent=1 // loop_footer
      %s25 = sadd.s32 1, %s21
    $region7: #{_lambda_.1} parent=1 // loop_footer_branch
      %20 = sbr.rel target = $region3
    $region8: #{_lambda_.1} parent=1 // loop_exit
      _
    %5367 = vsyncpa [#allocation3], 1
    %s5368 = scalar_lea.sflag [#allocation3], 1
    %5369 = vsyncpa %s5368, 1
    %5370 = vsyncpa [#allocation4], 1
    %s5371 = scalar_lea.sflag [#allocation4], 1
    %5372 = vsyncpa %s5371, 1

</llo_original>
